<compile_context>
chip_gen: v5e
topology: v5e:2x2
jax: 0.10.0
libtpu: 0.0.40
codegen_flags: <defaults>
</compile_context>

<pallas_src>
import functools

import jax
import jax.numpy as jnp
import numpy as np
from jax import lax
from jax.experimental import pallas as pl
from jax.experimental.pallas import tpu as pltpu

EPS_BN = 1e-5
CB = 16  # output capsules per routing grid step (8 steps, safe VMEM on v5e/v6e/v7x)

# TODO(synk): BatchNorm layers are implemented in eval mode (running statistics,
# default init gamma=1/beta=0/mean=0/var=1), not training-mode batch statistics.


# ----------------------------- Pallas kernels ------------------------------

def _conv_matmul_kernel(w_ref, x_ref, b_ref, scale_ref, shift_ref, o_ref, *, relu):
    # y = BN_affine( relu?( w @ x + b ) ),  output (O, B*H*W): last dim lane-dense.
    acc = jnp.dot(w_ref[...], x_ref[...], preferred_element_type=jnp.float32)
    acc = acc + b_ref[...]
    if relu:
        acc = jnp.maximum(acc, 0.0)
    o_ref[...] = acc * scale_ref[...] + shift_ref[...]


def conv_matmul_fused(w, x, b, scale, shift, *, relu):
    M, K = w.shape
    K2, P = x.shape
    assert K == K2
    kernel = functools.partial(_conv_matmul_kernel, relu=relu)
    return pl.pallas_call(
        kernel,
        out_shape=jax.ShapeDtypeStruct((M, P), jnp.float32),
        grid=(1,),  # whole problem fits VMEM at B=2; tile over P if batch grows
        in_specs=[
            pl.BlockSpec((M, K), lambda i: (0, 0)),
            pl.BlockSpec((K, P), lambda i: (0, 0)),
            pl.BlockSpec((M, 1), lambda i: (0, 0)),
            pl.BlockSpec((M, 1), lambda i: (0, 0)),
            pl.BlockSpec((M, 1), lambda i: (0, 0)),
        ],
        out_specs=pl.BlockSpec((M, P), lambda i: (0, 0)),
    )(w, x, b.reshape(M, 1), scale.reshape(M, 1), shift.reshape(M, 1))


def _primary_caps_kernel(w_ref, x_ref, b_ref, o_ref, *, groups, group_size):
    # Primary capsules for one batch element: conv-as-GEMM + bias with the
    # capsule squash fused, written directly in the (1, K=8, groups*P) routing
    # layout (rows ordered (out_channel c2, capsule i); squash reduces over i).
    P = x_ref.shape[2]
    acc = jnp.dot(w_ref[...], x_ref[0], preferred_element_type=jnp.float32)
    acc = acc + b_ref[...]
    for g in range(groups):
        blk = acc[g * group_size:(g + 1) * group_size, :]        # (8, P)
        sn = jnp.sum(blk * blk, axis=0, keepdims=True)           # (1, P)
        scale = jnp.sqrt(sn) * pl.reciprocal(1.0 + sn, approx=True)   # EUP
        o_ref[0, :, g * P:(g + 1) * P] = blk * scale             # squash


def primary_caps_matmul_squash(w, x, b, *, groups, group_size):
    """w: (32, 648); x: (B, 648, P) per-batch im2col; returns (B, 8, groups*P)."""
    M, K = w.shape
    B, K2, P = x.shape
    assert K == K2 and M == groups * group_size
    kernel = functools.partial(_primary_caps_kernel, groups=groups,
                               group_size=group_size)
    return pl.pallas_call(
        kernel,
        out_shape=jax.ShapeDtypeStruct((B, group_size, groups * P), jnp.float32),
        grid=(B,),
        in_specs=[
            pl.BlockSpec((M, K), lambda bb: (0, 0)),
            pl.BlockSpec((1, K, P), lambda bb: (bb, 0, 0)),
            pl.BlockSpec((M, 1), lambda bb: (0, 0)),
        ],
        out_specs=pl.BlockSpec((1, group_size, groups * P), lambda bb: (bb, 0, 0)),
        compiler_params=pltpu.CompilerParams(dimension_semantics=("arbitrary",)),
    )(w, x, b.reshape(M, 1))


def _routing_kernel(xb_ref, w_ref, o_ref, vacc_ref, *, num_iterations):
    """One grid step: dynamic routing for a block of CB output capsules.

    xb_ref  : (B, K, D, N)   squashed primary caps pre-broadcast over D (f32)
    w_ref   : (CB, K, D, N)  route-weight block (bf16, upcast per k)
    o_ref   : (B, CB*D)      lane-dense output block
    vacc_ref: (CB, B, D)     VMEM scratch collecting per-capsule outputs
    No cross-step state -> the grid axis is safe to run "parallel" (megacore).
    """
    B, K, D, N = xb_ref.shape
    block_c = w_ref.shape[0]

    def body(j, carry):
        # priors[b, d, n] = sum_k x[b, k, n] * w[j, k, d, n]
        # (per-k weight loads keep live vregs bounded inside the scf.for)
        priors = xb_ref[:, 0] * w_ref[j, 0].astype(jnp.float32)
        for k in range(1, K):
            priors = priors + xb_ref[:, k] * w_ref[j, k].astype(jnp.float32)

        # Routing-by-agreement.  torch keeps logits with a trailing D axis, but
        # they stay constant along D, so a per-(b, n) scalar is equivalent.
        logits = jnp.zeros((B, N), jnp.float32)
        v = jnp.zeros((B, D), jnp.float32)
        for it in range(num_iterations):
            m = jnp.max(logits, axis=-1, keepdims=True)
            e = jnp.exp(logits - m)
            probs = e * pl.reciprocal(jnp.sum(e, axis=-1, keepdims=True),
                                      approx=True)                    # (B, N)
            s = jnp.sum(probs[:, None, :] * priors, axis=-1)          # (B, D)
            sn = jnp.sum(s * s, axis=-1, keepdims=True)               # (B, 1)
            v = s * (jnp.sqrt(sn) * pl.reciprocal(1.0 + sn, approx=True))  # squash
            if it != num_iterations - 1:
                logits = logits + jnp.sum(priors * v[:, :, None], axis=1)
        vacc_ref[j] = v
        return carry

    lax.fori_loop(0, block_c, body, 0)

    # Lane-dense epilogue: (CB, B, D) scratch -> (B, CB*D) block so the per-step
    # HBM writeback is one 256-lane-wide slab (all-static tiny stores).
    for b in range(B):
        for j in range(block_c):
            o_ref[b:b + 1, j * D:(j + 1) * D] = vacc_ref[j, b:b + 1, :]


def routing_capsules(u_squashed, w_t, *, num_iterations=3, block_c=CB):
    """u_squashed: (B, K, N) squashed primary caps; w_t: (C, K, D, N) bf16.

    Returns (B, C*D) with capsule-major / dim-minor column ordering.
    """
    B, K, N = u_squashed.shape
    C, K2, D, N2 = w_t.shape
    assert K == K2 and N == N2 and C % block_c == 0
    # Hoist the broadcast of the shared capsule inputs over D out of the kernel:
    # one ~0.8 MB materialization instead of one broadcast per (k, capsule) term.
    xb = jnp.broadcast_to(u_squashed[:, :, None, :], (B, K, D, N))
    kernel = functools.partial(_routing_kernel, num_iterations=num_iterations)
    cost = pl.CostEstimate(
        flops=2 * B * C * K * D * N + 10 * C * B * D * N,
        transcendentals=3 * C * B * N,
        bytes_accessed=w_t.size * 2 + xb.size * 4 + B * C * D * 4,
    )
    return pl.pallas_call(
        kernel,
        out_shape=jax.ShapeDtypeStruct((B, C * D), jnp.float32),
        grid=(C // block_c,),
        in_specs=[
            pl.BlockSpec((B, K, D, N), lambda c: (0, 0, 0, 0)),
            pl.BlockSpec((block_c, K, D, N), lambda c: (c, 0, 0, 0)),
        ],
        out_specs=pl.BlockSpec((B, block_c * D), lambda c: (0, c)),
        scratch_shapes=[pltpu.VMEM((block_c, B, D), jnp.float32)],
        compiler_params=pltpu.CompilerParams(
            dimension_semantics=("parallel",)),   # independent steps -> megacore OK
        cost_estimate=cost,
    )(xb, w_t)


# ------------------------------- glue (JAX) --------------------------------

def im2col_t(x_cbhw, kh, kw, stride):
    """Transposed im2col: (C, B, H, W) -> (C*kh*kw, B*Ho*Wo)."""
    C, B, H, W = x_cbhw.shape
    Ho = (H - kh) // stride + 1
    Wo = (W - kw) // stride + 1
    patches = []
    for i in range(kh):
        for j in range(kw):
            patches.append(
                x_cbhw[:, :, i:i + stride * Ho:stride, j:j + stride * Wo:stride])
    p = jnp.stack(patches, axis=0).reshape(kh, kw, C, B, Ho, Wo)
    cols_t = p.transpose(2, 0, 1, 3, 4, 5).reshape(C * kh * kw, B * Ho * Wo)
    return cols_t, Ho, Wo


def im2col_batched(x_cbhw, kh, kw, stride):
    """Per-batch im2col: (C, B, H, W) -> (B, C*kh*kw, Ho*Wo)."""
    C, B, H, W = x_cbhw.shape
    Ho = (H - kh) // stride + 1
    Wo = (W - kw) // stride + 1
    patches = []
    for i in range(kh):
        for j in range(kw):
            patches.append(
                x_cbhw[:, :, i:i + stride * Ho:stride, j:j + stride * Wo:stride])
    p = jnp.stack(patches, axis=0).reshape(kh, kw, C, B, Ho, Wo)
    cols = p.transpose(3, 2, 0, 1, 4, 5).reshape(B, C * kh * kw, Ho * Wo)
    return cols, Ho, Wo


def init_params(key):
    ks = jax.random.split(key, 8)
    p = {}
    p['conv1_w'] = jax.random.normal(ks[0], (8, 1, 9, 9), jnp.float32) * 0.1
    p['conv1_b'] = jax.random.normal(ks[1], (8,), jnp.float32) * 0.1
    p['prim_w'] = jax.random.normal(ks[2], (8, 4, 8, 9, 9), jnp.float32) * 0.05
    p['prim_b'] = jax.random.normal(ks[3], (8, 4), jnp.float32) * 0.05
    # Route weights are streamed as bf16 by the kernel; keep the f32 master copy
    # bf16-rounded so the reference uses numerically identical weights.
    p['route_w'] = (jax.random.normal(ks[4], (128, 800, 8, 16), jnp.float32)
                    .astype(jnp.bfloat16).astype(jnp.float32))       # torch.randn
    p['dec_w'] = jax.random.normal(ks[5], (2048, 3), jnp.float32) * 0.02
    p['dec_b'] = jax.random.normal(ks[6], (3,), jnp.float32) * 0.02
    # BatchNorm (eval mode, PyTorch default init)
    p['bn0_scale'] = jnp.ones((1,), jnp.float32) / jnp.sqrt(1.0 + EPS_BN)
    p['bn0_shift'] = jnp.zeros((1,), jnp.float32)
    p['bn1_scale'] = jnp.ones((8,), jnp.float32) / jnp.sqrt(1.0 + EPS_BN)
    p['bn1_shift'] = jnp.zeros((8,), jnp.float32)
    return p


def prepare_params(p):
    """One-time layout/dtype prep (runs once, NOT inside the forward path)."""
    kp = {}
    # Fold BatchNorm2d(1) (eval affine) into the conv1 GEMM weights/bias.
    s0 = p['bn0_scale'][0]
    t0 = p['bn0_shift'][0]
    w1 = p['conv1_w'].reshape(8, 81)                            # (O, C*kh*kw)
    kp['conv1_w'] = w1 * s0
    kp['conv1_b'] = p['conv1_b'] + t0 * jnp.sum(w1, axis=1)
    kp['bn1_scale'], kp['bn1_shift'] = p['bn1_scale'], p['bn1_shift']
    # Primary-capsule GEMM rows ordered (out_channel c2, capsule i) so squash
    # groups are contiguous 8-row blocks.
    kp['prim_w'] = jnp.transpose(p['prim_w'], (1, 0, 2, 3, 4)).reshape(32, 8 * 81)
    kp['prim_b'] = jnp.transpose(p['prim_b'], (1, 0)).reshape(32)
    # Route weights pre-transposed to (C, K, D, N), bf16 (halves HBM stream).
    kp['route_w_t'] = jnp.transpose(p['route_w'], (0, 2, 3, 1)).astype(jnp.bfloat16)
    # Decoder rows permuted from the torch (d-major, c-minor) flatten order to the
    # kernel's lane-dense (capsule-major, d-minor) routing output layout.
    C, D = p['route_w'].shape[0], p['route_w'].shape[3]
    kp['dec_w_perm'] = (p['dec_w'].reshape(D, C, -1).transpose(1, 0, 2)
                        .reshape(C * D, -1))
    kp['dec_b'] = p['dec_b']
    return kp


def capsule_net_forward(x, kp):
    B = x.shape[0]
    # BatchNorm2d(1) is folded into conv1; go straight to the conv-as-GEMM.
    x_cbhw = jnp.transpose(x, (1, 0, 2, 3))                      # (C=1, B, H, W)
    cols1, H1, W1 = im2col_t(x_cbhw, 9, 9, 1)                    # (81, B*H1*W1)
    y1 = conv_matmul_fused(kp['conv1_w'], cols1, kp['conv1_b'],
                           kp['bn1_scale'], kp['bn1_shift'], relu=True)  # (8, B*H1*W1)
    feat_cbhw = y1.reshape(8, B, H1, W1)                         # channel-major, free

    # Primary capsules: 8 x Conv2d(8, 4, k=9, s=2) + bias, squash fused, output
    # produced directly in the (B, K=8, N=800) routing layout.
    cols2, H2, W2 = im2col_batched(feat_cbhw, 9, 9, 2)           # (B, 648, 200)
    u = primary_caps_matmul_squash(kp['prim_w'], cols2, kp['prim_b'],
                                   groups=4, group_size=8)       # (B, 8, 800)

    # Routing capsule layer (128 caps, 800 nodes, 8 -> 16): Pallas, CB=16 per step,
    # lane-dense (B, 2048) output feeds the decoder with no transpose.
    flat = routing_capsules(u, kp['route_w_t'], num_iterations=3)

    # Decoder Linear(2048, 3): plain XLA dot (12 KB; a pallas_call costs more).
    return flat @ kp['dec_w_perm'] + kp['dec_b']


# Pure-JAX reference (mirrors the PyTorch forward) for verification.
def reference_forward(x, p):
    B = x.shape[0]
    x = x * p['bn0_scale'].reshape(1, -1, 1, 1) + p['bn0_shift'].reshape(1, -1, 1, 1)
    y = lax.conv_general_dilated(x, p['conv1_w'], (1, 1), 'VALID',
                                 dimension_numbers=('NCHW', 'OIHW', 'NCHW'))
    y = y + p['conv1_b'].reshape(1, -1, 1, 1)
    y = jnp.maximum(y, 0.0)
    y = y * p['bn1_scale'].reshape(1, -1, 1, 1) + p['bn1_shift'].reshape(1, -1, 1, 1)
    caps = []
    for i in range(8):
        ci = lax.conv_general_dilated(y, p['prim_w'][i], (2, 2), 'VALID',
                                      dimension_numbers=('NCHW', 'OIHW', 'NCHW'))
        ci = ci + p['prim_b'][i].reshape(1, -1, 1, 1)
        caps.append(ci.reshape(B, -1, 1))
    u = jnp.concatenate(caps, axis=-1)                                   # (B, 800, 8)
    sn = jnp.sum(u * u, axis=-1, keepdims=True)
    u = (sn / (1.0 + sn)) * u / jnp.sqrt(sn)                             # squash
    priors = jnp.einsum('bnk,cnkd->cbnd', u, p['route_w'])               # (C, B, N, D)
    logits = jnp.zeros_like(priors)
    outputs = None
    for it in range(3):
        probs = jax.nn.softmax(logits, axis=2)
        s = jnp.sum(probs * priors, axis=2, keepdims=True)               # (C, B, 1, D)
        sn = jnp.sum(s * s, axis=-1, keepdims=True)
        outputs = (sn / (1.0 + sn)) * s / jnp.sqrt(sn)
        if it != 2:
            logits = logits + jnp.sum(priors * outputs, axis=-1, keepdims=True)
    v = outputs[:, :, 0, :]                                              # (C, B, D)
    flat = jnp.transpose(v, (1, 2, 0)).reshape(B, -1)
    return flat @ p['dec_w'] + p['dec_b']


if __name__ == "__main__":
    key = jax.random.PRNGKey(0)
    pkey, xkey = jax.random.split(key)
    params = init_params(pkey)
    kparams = prepare_params(params)   # one-time layout/dtype prep, outside the forward

    # (B=2, C=1, H=36, W=56) -> conv1 -> (28, 48) -> primary caps -> (10, 20)
    #   -> 4*10*20 = 800 route nodes, 16*128 = 2048 decoder features.
    x = jax.random.normal(xkey, (2, 1, 36, 56), jnp.float32)

    fwd = jax.jit(capsule_net_forward)
    out = jax.block_until_ready(fwd(x, kparams))

    ref = reference_forward(x, params)
    np.testing.assert_allclose(np.asarray(out), np.asarray(ref), rtol=2e-2, atol=2e-3)

    print("KERNEL_OK")
</pallas_src>

<mosaic_0001>
module attributes {stable_mosaic.version = 11 : i64} {
  func.func @_conv_matmul_kernel(%arg0: i32, %arg1: memref<8x81xf32, #tpu.memory_space<vmem>>, %arg2: memref<81x2688xf32, #tpu.memory_space<vmem>>, %arg3: memref<8x1xf32, #tpu.memory_space<vmem>>, %arg4: memref<8x1xf32, #tpu.memory_space<vmem>>, %arg5: memref<8x1xf32, #tpu.memory_space<vmem>>, %arg6: memref<8x2688xf32, #tpu.memory_space<vmem>>) attributes {dimension_semantics = [#tpu.dimension_semantics<arbitrary>], iteration_bounds = array<i64: 1>, scalar_prefetch = 0 : i64, scratch_operands = 0 : i64, tpu.core_type = #tpu.core_type<tc>, window_params = [{pipeline_mode = #tpu.pipeline_mode<synchronous>, transform_indices = @transform_0, window_bounds = array<i64: 8, 81>}, {pipeline_mode = #tpu.pipeline_mode<synchronous>, transform_indices = @transform_1, window_bounds = array<i64: 81, 2688>}, {pipeline_mode = #tpu.pipeline_mode<synchronous>, transform_indices = @transform_2, window_bounds = array<i64: 8, 1>}, {pipeline_mode = #tpu.pipeline_mode<synchronous>, transform_indices = @transform_3, window_bounds = array<i64: 8, 1>}, {pipeline_mode = #tpu.pipeline_mode<synchronous>, transform_indices = @transform_4, window_bounds = array<i64: 8, 1>}, {pipeline_mode = #tpu.pipeline_mode<synchronous>, transform_indices = @transform_5, window_bounds = array<i64: 8, 2688>}]} {
    %c0 = arith.constant 0 : index
    %c0_0 = arith.constant 0 : index
    %0 = vector.load %arg1[%c0, %c0_0] : memref<8x81xf32, #tpu.memory_space<vmem>>, vector<8x81xf32>
    %c0_1 = arith.constant 0 : index
    %c0_2 = arith.constant 0 : index
    %1 = vector.load %arg2[%c0_1, %c0_2] : memref<81x2688xf32, #tpu.memory_space<vmem>>, vector<81x2688xf32>
    %cst = arith.constant dense<0.000000e+00> : vector<8x2688xf32>
    %2 = tpu.matmul %0, %1, %cst {dimension_numbers = #tpu.dot_dimension_numbers<[1], [0], [0], [1], [0, 0, 1, 1], [], []>} : vector<8x81xf32>, vector<81x2688xf32>, vector<8x2688xf32> -> vector<8x2688xf32>
    %c0_3 = arith.constant 0 : index
    %c0_4 = arith.constant 0 : index
    %3 = vector.load %arg3[%c0_3, %c0_4] : memref<8x1xf32, #tpu.memory_space<vmem>>, vector<8x1xf32>
    %4 = vector.broadcast %3 : vector<8x1xf32> to vector<8x2688xf32>
    %5 = arith.addf %2, %4 : vector<8x2688xf32>
    %cst_5 = arith.constant 0.000000e+00 : f32
    %6 = vector.broadcast %cst_5 : f32 to vector<8x2688xf32>
    %7 = arith.maximumf %5, %6 : vector<8x2688xf32>
    %c0_6 = arith.constant 0 : index
    %c0_7 = arith.constant 0 : index
    %8 = vector.load %arg4[%c0_6, %c0_7] : memref<8x1xf32, #tpu.memory_space<vmem>>, vector<8x1xf32>
    %9 = vector.broadcast %8 : vector<8x1xf32> to vector<8x2688xf32>
    %10 = arith.mulf %7, %9 : vector<8x2688xf32>
    %c0_8 = arith.constant 0 : index
    %c0_9 = arith.constant 0 : index
    %11 = vector.load %arg5[%c0_8, %c0_9] : memref<8x1xf32, #tpu.memory_space<vmem>>, vector<8x1xf32>
    %12 = vector.broadcast %11 : vector<8x1xf32> to vector<8x2688xf32>
    %13 = arith.addf %10, %12 : vector<8x2688xf32>
    %c0_10 = arith.constant 0 : index
    %c0_11 = arith.constant 0 : index
    %14 = vector.load %arg6[%c0_10, %c0_11] : memref<8x2688xf32, #tpu.memory_space<vmem>>, vector<8x2688xf32>
    tpu.vector_store %arg6[%c0_10, %c0_11], %13 {strides = array<i32>} : memref<8x2688xf32, #tpu.memory_space<vmem>>, vector<8x2688xf32>,
    return
  }
  func.func @transform_0(%arg0: i32) -> (i32, i32) {
    %c0_i32 = arith.constant 0 : i32
    %c0_i32_0 = arith.constant 0 : i32
    %c0_i32_1 = arith.constant 0 : i32
    return %c0_i32, %c0_i32_0 : i32, i32
  }
  func.func @transform_1(%arg0: i32) -> (i32, i32) {
    %c0_i32 = arith.constant 0 : i32
    %c0_i32_0 = arith.constant 0 : i32
    %c0_i32_1 = arith.constant 0 : i32
    return %c0_i32, %c0_i32_0 : i32, i32
  }
  func.func @transform_2(%arg0: i32) -> (i32, i32) {
    %c0_i32 = arith.constant 0 : i32
    %c0_i32_0 = arith.constant 0 : i32
    %c0_i32_1 = arith.constant 0 : i32
    return %c0_i32, %c0_i32_0 : i32, i32
  }
  func.func @transform_3(%arg0: i32) -> (i32, i32) {
    %c0_i32 = arith.constant 0 : i32
    %c0_i32_0 = arith.constant 0 : i32
    %c0_i32_1 = arith.constant 0 : i32
    return %c0_i32, %c0_i32_0 : i32, i32
  }
  func.func @transform_4(%arg0: i32) -> (i32, i32) {
    %c0_i32 = arith.constant 0 : i32
    %c0_i32_0 = arith.constant 0 : i32
    %c0_i32_1 = arith.constant 0 : i32
    return %c0_i32, %c0_i32_0 : i32, i32
  }
  func.func @transform_5(%arg0: i32) -> (i32, i32) {
    %c0_i32 = arith.constant 0 : i32
    %c0_i32_0 = arith.constant 0 : i32
    %c0_i32_1 = arith.constant 0 : i32
    return %c0_i32, %c0_i32_0 : i32, i32
  }
}

module attributes {stable_mosaic.version = 11 : i64} {
  func.func @_primary_caps_kernel(%arg0: i32, %arg1: memref<32x648xf32, #tpu.memory_space<vmem>>, %arg2: memref<1x648x200xf32, #tpu.memory_space<vmem>>, %arg3: memref<32x1xf32, #tpu.memory_space<vmem>>, %arg4: memref<1x8x800xf32, #tpu.memory_space<vmem>>) attributes {dimension_semantics = [#tpu.dimension_semantics<arbitrary>], iteration_bounds = array<i64: 2>, scalar_prefetch = 0 : i64, scratch_operands = 0 : i64, tpu.core_type = #tpu.core_type<tc>, window_params = [{pipeline_mode = #tpu.pipeline_mode<synchronous>, transform_indices = @transform_0, window_bounds = array<i64: 32, 648>}, {transform_indices = @transform_1, window_bounds = array<i64: 1, 648, 200>}, {pipeline_mode = #tpu.pipeline_mode<synchronous>, transform_indices = @transform_2, window_bounds = array<i64: 32, 1>}, {transform_indices = @transform_3, window_bounds = array<i64: 1, 8, 800>}]} {
    %c0 = arith.constant 0 : index
    %c0_0 = arith.constant 0 : index
    %0 = vector.load %arg1[%c0, %c0_0] : memref<32x648xf32, #tpu.memory_space<vmem>>, vector<32x648xf32>
    %c0_1 = arith.constant 0 : index
    %c0_2 = arith.constant 0 : index
    %c0_3 = arith.constant 0 : index
    %1 = vector.load %arg2[%c0_1, %c0_2, %c0_3] : memref<1x648x200xf32, #tpu.memory_space<vmem>>, vector<1x648x200xf32>
    %2 = vector.shape_cast %1 : vector<1x648x200xf32> to vector<648x200xf32>
    %cst = arith.constant dense<0.000000e+00> : vector<32x200xf32>
    %3 = tpu.matmul %0, %2, %cst {dimension_numbers = #tpu.dot_dimension_numbers<[1], [0], [0], [1], [0, 0, 1, 1], [], []>} : vector<32x648xf32>, vector<648x200xf32>, vector<32x200xf32> -> vector<32x200xf32>
    %c0_4 = arith.constant 0 : index
    %c0_5 = arith.constant 0 : index
    %4 = vector.load %arg3[%c0_4, %c0_5] : memref<32x1xf32, #tpu.memory_space<vmem>>, vector<32x1xf32>
    %5 = vector.broadcast %4 : vector<32x1xf32> to vector<32x200xf32>
    %6 = arith.addf %3, %5 : vector<32x200xf32>
    %7 = vector.extract_strided_slice %6 {offsets = [0, 0], sizes = [8, 200], strides = [1, 1]} : vector<32x200xf32> to vector<8x200xf32>
    %8 = arith.mulf %7, %7 : vector<8x200xf32>
    %cst_6 = arith.constant dense<0.000000e+00> : vector<200xf32>
    %9 = vector.multi_reduction <add>, %8, %cst_6 [0] : vector<8x200xf32> to vector<200xf32>
    %10 = vector.shape_cast %9 : vector<200xf32> to vector<1x200xf32>
    %11 = math.sqrt %10 : vector<1x200xf32>
    %cst_7 = arith.constant 1.000000e+00 : f32
    %12 = vector.broadcast %cst_7 : f32 to vector<1x200xf32>
    %13 = arith.addf %12, %10 : vector<1x200xf32>
    %14 = tpu.reciprocal %13 {approx = true} : vector<1x200xf32> -> vector<1x200xf32>
    %15 = arith.mulf %11, %14 : vector<1x200xf32>
    %16 = vector.broadcast %15 : vector<1x200xf32> to vector<8x200xf32>
    %17 = arith.mulf %7, %16 : vector<8x200xf32>
    %c0_8 = arith.constant 0 : index
    %c0_9 = arith.constant 0 : index
    %c0_10 = arith.constant 0 : index
    %18 = vector.load %arg4[%c0_8, %c0_9, %c0_10] : memref<1x8x800xf32, #tpu.memory_space<vmem>>, vector<1x8x200xf32>
    %19 = vector.shape_cast %18 : vector<1x8x200xf32> to vector<8x200xf32>
    %20 = vector.shape_cast %17 : vector<8x200xf32> to vector<1x8x200xf32>
    tpu.vector_store %arg4[%c0_8, %c0_9, %c0_10], %20 {strides = array<i32>} : memref<1x8x800xf32, #tpu.memory_space<vmem>>, vector<1x8x200xf32>,
    %21 = vector.extract_strided_slice %6 {offsets = [8, 0], sizes = [8, 200], strides = [1, 1]} : vector<32x200xf32> to vector<8x200xf32>
    %22 = arith.mulf %21, %21 : vector<8x200xf32>
    %cst_11 = arith.constant dense<0.000000e+00> : vector<200xf32>
    %23 = vector.multi_reduction <add>, %22, %cst_11 [0] : vector<8x200xf32> to vector<200xf32>
    %24 = vector.shape_cast %23 : vector<200xf32> to vector<1x200xf32>
    %25 = math.sqrt %24 : vector<1x200xf32>
    %cst_12 = arith.constant 1.000000e+00 : f32
    %26 = vector.broadcast %cst_12 : f32 to vector<1x200xf32>
    %27 = arith.addf %26, %24 : vector<1x200xf32>
    %28 = tpu.reciprocal %27 {approx = true} : vector<1x200xf32> -> vector<1x200xf32>
    %29 = arith.mulf %25, %28 : vector<1x200xf32>
    %30 = vector.broadcast %29 : vector<1x200xf32> to vector<8x200xf32>
    %31 = arith.mulf %21, %30 : vector<8x200xf32>
    %c0_13 = arith.constant 0 : index
    %c0_14 = arith.constant 0 : index
    %c200 = arith.constant 200 : index
    %32 = vector.load %arg4[%c0_13, %c0_14, %c200] : memref<1x8x800xf32, #tpu.memory_space<vmem>>, vector<1x8x200xf32>
    %33 = vector.shape_cast %32 : vector<1x8x200xf32> to vector<8x200xf32>
    %34 = vector.shape_cast %31 : vector<8x200xf32> to vector<1x8x200xf32>
    tpu.vector_store %arg4[%c0_13, %c0_14, %c200], %34 {strides = array<i32>} : memref<1x8x800xf32, #tpu.memory_space<vmem>>, vector<1x8x200xf32>,
    %35 = vector.extract_strided_slice %6 {offsets = [16, 0], sizes = [8, 200], strides = [1, 1]} : vector<32x200xf32> to vector<8x200xf32>
    %36 = arith.mulf %35, %35 : vector<8x200xf32>
    %cst_15 = arith.constant dense<0.000000e+00> : vector<200xf32>
    %37 = vector.multi_reduction <add>, %36, %cst_15 [0] : vector<8x200xf32> to vector<200xf32>
    %38 = vector.shape_cast %37 : vector<200xf32> to vector<1x200xf32>
    %39 = math.sqrt %38 : vector<1x200xf32>
    %cst_16 = arith.constant 1.000000e+00 : f32
    %40 = vector.broadcast %cst_16 : f32 to vector<1x200xf32>
    %41 = arith.addf %40, %38 : vector<1x200xf32>
    %42 = tpu.reciprocal %41 {approx = true} : vector<1x200xf32> -> vector<1x200xf32>
    %43 = arith.mulf %39, %42 : vector<1x200xf32>
    %44 = vector.broadcast %43 : vector<1x200xf32> to vector<8x200xf32>
    %45 = arith.mulf %35, %44 : vector<8x200xf32>
    %c0_17 = arith.constant 0 : index
    %c0_18 = arith.constant 0 : index
    %c400 = arith.constant 400 : index
    %46 = vector.load %arg4[%c0_17, %c0_18, %c400] : memref<1x8x800xf32, #tpu.memory_space<vmem>>, vector<1x8x200xf32>
    %47 = vector.shape_cast %46 : vector<1x8x200xf32> to vector<8x200xf32>
    %48 = vector.shape_cast %45 : vector<8x200xf32> to vector<1x8x200xf32>
    tpu.vector_store %arg4[%c0_17, %c0_18, %c400], %48 {strides = array<i32>} : memref<1x8x800xf32, #tpu.memory_space<vmem>>, vector<1x8x200xf32>,
    %49 = vector.extract_strided_slice %6 {offsets = [24, 0], sizes = [8, 200], strides = [1, 1]} : vector<32x200xf32> to vector<8x200xf32>
    %50 = arith.mulf %49, %49 : vector<8x200xf32>
    %cst_19 = arith.constant dense<0.000000e+00> : vector<200xf32>
    %51 = vector.multi_reduction <add>, %50, %cst_19 [0] : vector<8x200xf32> to vector<200xf32>
    %52 = vector.shape_cast %51 : vector<200xf32> to vector<1x200xf32>
    %53 = math.sqrt %52 : vector<1x200xf32>
    %cst_20 = arith.constant 1.000000e+00 : f32
    %54 = vector.broadcast %cst_20 : f32 to vector<1x200xf32>
    %55 = arith.addf %54, %52 : vector<1x200xf32>
    %56 = tpu.reciprocal %55 {approx = true} : vector<1x200xf32> -> vector<1x200xf32>
    %57 = arith.mulf %53, %56 : vector<1x200xf32>
    %58 = vector.broadcast %57 : vector<1x200xf32> to vector<8x200xf32>
    %59 = arith.mulf %49, %58 : vector<8x200xf32>
    %c0_21 = arith.constant 0 : index
    %c0_22 = arith.constant 0 : index
    %c600 = arith.constant 600 : index
    %60 = vector.load %arg4[%c0_21, %c0_22, %c600] : memref<1x8x800xf32, #tpu.memory_space<vmem>>, vector<1x8x200xf32>
    %61 = vector.shape_cast %60 : vector<1x8x200xf32> to vector<8x200xf32>
    %62 = vector.shape_cast %59 : vector<8x200xf32> to vector<1x8x200xf32>
    tpu.vector_store %arg4[%c0_21, %c0_22, %c600], %62 {strides = array<i32>} : memref<1x8x800xf32, #tpu.memory_space<vmem>>, vector<1x8x200xf32>,
    return
  }
  func.func @transform_0(%arg0: i32) -> (i32, i32) {
    %c0_i32 = arith.constant 0 : i32
    %c0_i32_0 = arith.constant 0 : i32
    %c0_i32_1 = arith.constant 0 : i32
    return %c0_i32, %c0_i32_0 : i32, i32
  }
  func.func @transform_1(%arg0: i32) -> (i32, i32, i32) {
    %c0_i32 = arith.constant 0 : i32
    %c0_i32_0 = arith.constant 0 : i32
    %c0_i32_1 = arith.constant 0 : i32
    return %arg0, %c0_i32, %c0_i32_0 : i32, i32, i32
  }
  func.func @transform_2(%arg0: i32) -> (i32, i32) {
    %c0_i32 = arith.constant 0 : i32
    %c0_i32_0 = arith.constant 0 : i32
    %c0_i32_1 = arith.constant 0 : i32
    return %c0_i32, %c0_i32_0 : i32, i32
  }
  func.func @transform_3(%arg0: i32) -> (i32, i32, i32) {
    %c0_i32 = arith.constant 0 : i32
    %c0_i32_0 = arith.constant 0 : i32
    %c0_i32_1 = arith.constant 0 : i32
    return %arg0, %c0_i32, %c0_i32_0 : i32, i32, i32
  }
}

module attributes {stable_mosaic.version = 11 : i64} {
  func.func @_routing_kernel(%arg0: i32, %arg1: memref<2x8x16x800xf32, #tpu.memory_space<vmem>>, %arg2: memref<16x8x16x800xbf16, #tpu.memory_space<vmem>>, %arg3: memref<2x256xf32, #tpu.memory_space<vmem>>, %arg4: memref<16x2x16xf32, #tpu.memory_space<vmem>>) attributes {dimension_semantics = [#tpu.dimension_semantics<parallel>], iteration_bounds = array<i64: 8>, scalar_prefetch = 0 : i64, scratch_operands = 1 : i64, tpu.core_type = #tpu.core_type<tc>, window_params = [{pipeline_mode = #tpu.pipeline_mode<synchronous>, transform_indices = @transform_0, window_bounds = array<i64: 2, 8, 16, 800>}, {transform_indices = @transform_1, window_bounds = array<i64: 16, 8, 16, 800>}, {transform_indices = @transform_2, window_bounds = array<i64: 2, 256>}]} {
    %c0_i32 = arith.constant 0 : i32
    %c16_i32 = arith.constant 16 : i32
    %0 = arith.addi %c0_i32, %c16_i32 : i32
    %c1_i32 = arith.constant 1 : i32
    scf.for %arg5 = %c0_i32 to %0 step %c1_i32  : i32 {
      %c0_130 = arith.constant 0 : index
      %c0_131 = arith.constant 0 : index
      %c0_132 = arith.constant 0 : index
      %c0_133 = arith.constant 0 : index
      %97 = vector.load %arg1[%c0_130, %c0_131, %c0_132, %c0_133] : memref<2x8x16x800xf32, #tpu.memory_space<vmem>>, vector<2x1x16x800xf32>
      %98 = vector.shape_cast %97 : vector<2x1x16x800xf32> to vector<2x16x800xf32>
      %99 = arith.index_cast %arg5 : i32 to index
      %c0_134 = arith.constant 0 : index
      %c0_135 = arith.constant 0 : index
      %c0_136 = arith.constant 0 : index
      %100 = vector.load %arg2[%99, %c0_134, %c0_135, %c0_136] : memref<16x8x16x800xbf16, #tpu.memory_space<vmem>>, vector<1x1x16x800xbf16>
      %101 = vector.shape_cast %100 : vector<1x1x16x800xbf16> to vector<16x800xbf16>
      %102 = arith.extf %101 : vector<16x800xbf16> to vector<16x800xf32>
      %103 = vector.shape_cast %102 : vector<16x800xf32> to vector<1x16x800xf32>
      %104 = vector.broadcast %103 : vector<1x16x800xf32> to vector<2x16x800xf32>
      %105 = arith.mulf %98, %104 : vector<2x16x800xf32>
      %c0_137 = arith.constant 0 : index
      %c1_138 = arith.constant 1 : index
      %c0_139 = arith.constant 0 : index
      %c0_140 = arith.constant 0 : index
      %106 = vector.load %arg1[%c0_137, %c1_138, %c0_139, %c0_140] : memref<2x8x16x800xf32, #tpu.memory_space<vmem>>, vector<2x1x16x800xf32>
      %107 = vector.shape_cast %106 : vector<2x1x16x800xf32> to vector<2x16x800xf32>
      %108 = arith.index_cast %arg5 : i32 to index
      %c1_141 = arith.constant 1 : index
      %c0_142 = arith.constant 0 : index
      %c0_143 = arith.constant 0 : index
      %109 = vector.load %arg2[%108, %c1_141, %c0_142, %c0_143] : memref<16x8x16x800xbf16, #tpu.memory_space<vmem>>, vector<1x1x16x800xbf16>
      %110 = vector.shape_cast %109 : vector<1x1x16x800xbf16> to vector<16x800xbf16>
      %111 = arith.extf %110 : vector<16x800xbf16> to vector<16x800xf32>
      %112 = vector.shape_cast %111 : vector<16x800xf32> to vector<1x16x800xf32>
      %113 = vector.broadcast %112 : vector<1x16x800xf32> to vector<2x16x800xf32>
      %114 = arith.mulf %107, %113 : vector<2x16x800xf32>
      %115 = arith.addf %105, %114 : vector<2x16x800xf32>
      %c0_144 = arith.constant 0 : index
      %c2_145 = arith.constant 2 : index
      %c0_146 = arith.constant 0 : index
      %c0_147 = arith.constant 0 : index
      %116 = vector.load %arg1[%c0_144, %c2_145, %c0_146, %c0_147] : memref<2x8x16x800xf32, #tpu.memory_space<vmem>>, vector<2x1x16x800xf32>
      %117 = vector.shape_cast %116 : vector<2x1x16x800xf32> to vector<2x16x800xf32>
      %118 = arith.index_cast %arg5 : i32 to index
      %c2_148 = arith.constant 2 : index
      %c0_149 = arith.constant 0 : index
      %c0_150 = arith.constant 0 : index
      %119 = vector.load %arg2[%118, %c2_148, %c0_149, %c0_150] : memref<16x8x16x800xbf16, #tpu.memory_space<vmem>>, vector<1x1x16x800xbf16>
      %120 = vector.shape_cast %119 : vector<1x1x16x800xbf16> to vector<16x800xbf16>
      %121 = arith.extf %120 : vector<16x800xbf16> to vector<16x800xf32>
      %122 = vector.shape_cast %121 : vector<16x800xf32> to vector<1x16x800xf32>
      %123 = vector.broadcast %122 : vector<1x16x800xf32> to vector<2x16x800xf32>
      %124 = arith.mulf %117, %123 : vector<2x16x800xf32>
      %125 = arith.addf %115, %124 : vector<2x16x800xf32>
      %c0_151 = arith.constant 0 : index
      %c3_152 = arith.constant 3 : index
      %c0_153 = arith.constant 0 : index
      %c0_154 = arith.constant 0 : index
      %126 = vector.load %arg1[%c0_151, %c3_152, %c0_153, %c0_154] : memref<2x8x16x800xf32, #tpu.memory_space<vmem>>, vector<2x1x16x800xf32>
      %127 = vector.shape_cast %126 : vector<2x1x16x800xf32> to vector<2x16x800xf32>
      %128 = arith.index_cast %arg5 : i32 to index
      %c3_155 = arith.constant 3 : index
      %c0_156 = arith.constant 0 : index
      %c0_157 = arith.constant 0 : index
      %129 = vector.load %arg2[%128, %c3_155, %c0_156, %c0_157] : memref<16x8x16x800xbf16, #tpu.memory_space<vmem>>, vector<1x1x16x800xbf16>
      %130 = vector.shape_cast %129 : vector<1x1x16x800xbf16> to vector<16x800xbf16>
      %131 = arith.extf %130 : vector<16x800xbf16> to vector<16x800xf32>
      %132 = vector.shape_cast %131 : vector<16x800xf32> to vector<1x16x800xf32>
      %133 = vector.broadcast %132 : vector<1x16x800xf32> to vector<2x16x800xf32>
      %134 = arith.mulf %127, %133 : vector<2x16x800xf32>
      %135 = arith.addf %125, %134 : vector<2x16x800xf32>
      %c0_158 = arith.constant 0 : index
      %c4_159 = arith.constant 4 : index
      %c0_160 = arith.constant 0 : index
      %c0_161 = arith.constant 0 : index
      %136 = vector.load %arg1[%c0_158, %c4_159, %c0_160, %c0_161] : memref<2x8x16x800xf32, #tpu.memory_space<vmem>>, vector<2x1x16x800xf32>
      %137 = vector.shape_cast %136 : vector<2x1x16x800xf32> to vector<2x16x800xf32>
      %138 = arith.index_cast %arg5 : i32 to index
      %c4_162 = arith.constant 4 : index
      %c0_163 = arith.constant 0 : index
      %c0_164 = arith.constant 0 : index
      %139 = vector.load %arg2[%138, %c4_162, %c0_163, %c0_164] : memref<16x8x16x800xbf16, #tpu.memory_space<vmem>>, vector<1x1x16x800xbf16>
      %140 = vector.shape_cast %139 : vector<1x1x16x800xbf16> to vector<16x800xbf16>
      %141 = arith.extf %140 : vector<16x800xbf16> to vector<16x800xf32>
      %142 = vector.shape_cast %141 : vector<16x800xf32> to vector<1x16x800xf32>
      %143 = vector.broadcast %142 : vector<1x16x800xf32> to vector<2x16x800xf32>
      %144 = arith.mulf %137, %143 : vector<2x16x800xf32>
      %145 = arith.addf %135, %144 : vector<2x16x800xf32>
      %c0_165 = arith.constant 0 : index
      %c5_166 = arith.constant 5 : index
      %c0_167 = arith.constant 0 : index
      %c0_168 = arith.constant 0 : index
      %146 = vector.load %arg1[%c0_165, %c5_166, %c0_167, %c0_168] : memref<2x8x16x800xf32, #tpu.memory_space<vmem>>, vector<2x1x16x800xf32>
      %147 = vector.shape_cast %146 : vector<2x1x16x800xf32> to vector<2x16x800xf32>
      %148 = arith.index_cast %arg5 : i32 to index
      %c5_169 = arith.constant 5 : index
      %c0_170 = arith.constant 0 : index
      %c0_171 = arith.constant 0 : index
      %149 = vector.load %arg2[%148, %c5_169, %c0_170, %c0_171] : memref<16x8x16x800xbf16, #tpu.memory_space<vmem>>, vector<1x1x16x800xbf16>
      %150 = vector.shape_cast %149 : vector<1x1x16x800xbf16> to vector<16x800xbf16>
      %151 = arith.extf %150 : vector<16x800xbf16> to vector<16x800xf32>
      %152 = vector.shape_cast %151 : vector<16x800xf32> to vector<1x16x800xf32>
      %153 = vector.broadcast %152 : vector<1x16x800xf32> to vector<2x16x800xf32>
      %154 = arith.mulf %147, %153 : vector<2x16x800xf32>
      %155 = arith.addf %145, %154 : vector<2x16x800xf32>
      %c0_172 = arith.constant 0 : index
      %c6_173 = arith.constant 6 : index
      %c0_174 = arith.constant 0 : index
      %c0_175 = arith.constant 0 : index
      %156 = vector.load %arg1[%c0_172, %c6_173, %c0_174, %c0_175] : memref<2x8x16x800xf32, #tpu.memory_space<vmem>>, vector<2x1x16x800xf32>
      %157 = vector.shape_cast %156 : vector<2x1x16x800xf32> to vector<2x16x800xf32>
      %158 = arith.index_cast %arg5 : i32 to index
      %c6_176 = arith.constant 6 : index
      %c0_177 = arith.constant 0 : index
      %c0_178 = arith.constant 0 : index
      %159 = vector.load %arg2[%158, %c6_176, %c0_177, %c0_178] : memref<16x8x16x800xbf16, #tpu.memory_space<vmem>>, vector<1x1x16x800xbf16>
      %160 = vector.shape_cast %159 : vector<1x1x16x800xbf16> to vector<16x800xbf16>
      %161 = arith.extf %160 : vector<16x800xbf16> to vector<16x800xf32>
      %162 = vector.shape_cast %161 : vector<16x800xf32> to vector<1x16x800xf32>
      %163 = vector.broadcast %162 : vector<1x16x800xf32> to vector<2x16x800xf32>
      %164 = arith.mulf %157, %163 : vector<2x16x800xf32>
      %165 = arith.addf %155, %164 : vector<2x16x800xf32>
      %c0_179 = arith.constant 0 : index
      %c7_180 = arith.constant 7 : index
      %c0_181 = arith.constant 0 : index
      %c0_182 = arith.constant 0 : index
      %166 = vector.load %arg1[%c0_179, %c7_180, %c0_181, %c0_182] : memref<2x8x16x800xf32, #tpu.memory_space<vmem>>, vector<2x1x16x800xf32>
      %167 = vector.shape_cast %166 : vector<2x1x16x800xf32> to vector<2x16x800xf32>
      %168 = arith.index_cast %arg5 : i32 to index
      %c7_183 = arith.constant 7 : index
      %c0_184 = arith.constant 0 : index
      %c0_185 = arith.constant 0 : index
      %169 = vector.load %arg2[%168, %c7_183, %c0_184, %c0_185] : memref<16x8x16x800xbf16, #tpu.memory_space<vmem>>, vector<1x1x16x800xbf16>
      %170 = vector.shape_cast %169 : vector<1x1x16x800xbf16> to vector<16x800xbf16>
      %171 = arith.extf %170 : vector<16x800xbf16> to vector<16x800xf32>
      %172 = vector.shape_cast %171 : vector<16x800xf32> to vector<1x16x800xf32>
      %173 = vector.broadcast %172 : vector<1x16x800xf32> to vector<2x16x800xf32>
      %174 = arith.mulf %167, %173 : vector<2x16x800xf32>
      %175 = arith.addf %165, %174 : vector<2x16x800xf32>
      %cst = arith.constant 0.000000e+00 : f32
      %176 = vector.broadcast %cst : f32 to vector<2x800xf32>
      %cst_186 = arith.constant dense<0xFF800000> : vector<2xf32>
      %177 = vector.multi_reduction <maximumf>, %176, %cst_186 [1] : vector<2x800xf32> to vector<2xf32>
      %178 = vector.shape_cast %177 : vector<2xf32> to vector<2x1xf32>
      %179 = vector.broadcast %178 : vector<2x1xf32> to vector<2x800xf32>
      %180 = arith.subf %176, %179 : vector<2x800xf32>
      %181 = math.exp %180 : vector<2x800xf32>
      %cst_187 = arith.constant dense<0.000000e+00> : vector<2xf32>
      %182 = vector.multi_reduction <add>, %181, %cst_187 [1] : vector<2x800xf32> to vector<2xf32>
      %183 = vector.shape_cast %182 : vector<2xf32> to vector<2x1xf32>
      %184 = tpu.reciprocal %183 {approx = true} : vector<2x1xf32> -> vector<2x1xf32>
      %185 = vector.broadcast %184 : vector<2x1xf32> to vector<2x800xf32>
      %186 = arith.mulf %181, %185 : vector<2x800xf32>
      %187 = vector.shape_cast %186 : vector<2x800xf32> to vector<2x1x800xf32>
      %188 = vector.broadcast %187 : vector<2x1x800xf32> to vector<2x16x800xf32>
      %189 = arith.mulf %188, %175 : vector<2x16x800xf32>
      %cst_188 = arith.constant dense<0.000000e+00> : vector<2x16xf32>
      %190 = vector.multi_reduction <add>, %189, %cst_188 [2] : vector<2x16x800xf32> to vector<2x16xf32>
      %191 = arith.mulf %190, %190 : vector<2x16xf32>
      %cst_189 = arith.constant dense<0.000000e+00> : vector<2xf32>
      %192 = vector.multi_reduction <add>, %191, %cst_189 [1] : vector<2x16xf32> to vector<2xf32>
      %193 = vector.shape_cast %192 : vector<2xf32> to vector<2x1xf32>
      %194 = math.sqrt %193 : vector<2x1xf32>
      %cst_190 = arith.constant 1.000000e+00 : f32
      %195 = vector.broadcast %cst_190 : f32 to vector<2x1xf32>
      %196 = arith.addf %195, %193 : vector<2x1xf32>
      %197 = tpu.reciprocal %196 {approx = true} : vector<2x1xf32> -> vector<2x1xf32>
      %198 = arith.mulf %194, %197 : vector<2x1xf32>
      %199 = vector.broadcast %198 : vector<2x1xf32> to vector<2x16xf32>
      %200 = arith.mulf %190, %199 : vector<2x16xf32>
      %201 = vector.shape_cast %200 : vector<2x16xf32> to vector<2x16x1xf32>
      %202 = vector.broadcast %201 : vector<2x16x1xf32> to vector<2x16x800xf32>
      %203 = arith.mulf %175, %202 : vector<2x16x800xf32>
      %cst_191 = arith.constant dense<0.000000e+00> : vector<2x800xf32>
      %204 = vector.multi_reduction <add>, %203, %cst_191 [1] : vector<2x16x800xf32> to vector<2x800xf32>
      %205 = arith.addf %176, %204 : vector<2x800xf32>
      %cst_192 = arith.constant dense<0xFF800000> : vector<2xf32>
      %206 = vector.multi_reduction <maximumf>, %205, %cst_192 [1] : vector<2x800xf32> to vector<2xf32>
      %207 = vector.shape_cast %206 : vector<2xf32> to vector<2x1xf32>
      %208 = vector.broadcast %207 : vector<2x1xf32> to vector<2x800xf32>
      %209 = arith.subf %205, %208 : vector<2x800xf32>
      %210 = math.exp %209 : vector<2x800xf32>
      %cst_193 = arith.constant dense<0.000000e+00> : vector<2xf32>
      %211 = vector.multi_reduction <add>, %210, %cst_193 [1] : vector<2x800xf32> to vector<2xf32>
      %212 = vector.shape_cast %211 : vector<2xf32> to vector<2x1xf32>
      %213 = tpu.reciprocal %212 {approx = true} : vector<2x1xf32> -> vector<2x1xf32>
      %214 = vector.broadcast %213 : vector<2x1xf32> to vector<2x800xf32>
      %215 = arith.mulf %210, %214 : vector<2x800xf32>
      %216 = vector.shape_cast %215 : vector<2x800xf32> to vector<2x1x800xf32>
      %217 = vector.broadcast %216 : vector<2x1x800xf32> to vector<2x16x800xf32>
      %218 = arith.mulf %217, %175 : vector<2x16x800xf32>
      %cst_194 = arith.constant dense<0.000000e+00> : vector<2x16xf32>
      %219 = vector.multi_reduction <add>, %218, %cst_194 [2] : vector<2x16x800xf32> to vector<2x16xf32>
      %220 = arith.mulf %219, %219 : vector<2x16xf32>
      %cst_195 = arith.constant dense<0.000000e+00> : vector<2xf32>
      %221 = vector.multi_reduction <add>, %220, %cst_195 [1] : vector<2x16xf32> to vector<2xf32>
      %222 = vector.shape_cast %221 : vector<2xf32> to vector<2x1xf32>
      %223 = math.sqrt %222 : vector<2x1xf32>
      %cst_196 = arith.constant 1.000000e+00 : f32
      %224 = vector.broadcast %cst_196 : f32 to vector<2x1xf32>
      %225 = arith.addf %224, %222 : vector<2x1xf32>
      %226 = tpu.reciprocal %225 {approx = true} : vector<2x1xf32> -> vector<2x1xf32>
      %227 = arith.mulf %223, %226 : vector<2x1xf32>
      %228 = vector.broadcast %227 : vector<2x1xf32> to vector<2x16xf32>
      %229 = arith.mulf %219, %228 : vector<2x16xf32>
      %230 = vector.shape_cast %229 : vector<2x16xf32> to vector<2x16x1xf32>
      %231 = vector.broadcast %230 : vector<2x16x1xf32> to vector<2x16x800xf32>
      %232 = arith.mulf %175, %231 : vector<2x16x800xf32>
      %cst_197 = arith.constant dense<0.000000e+00> : vector<2x800xf32>
      %233 = vector.multi_reduction <add>, %232, %cst_197 [1] : vector<2x16x800xf32> to vector<2x800xf32>
      %234 = arith.addf %205, %233 : vector<2x800xf32>
      %cst_198 = arith.constant dense<0xFF800000> : vector<2xf32>
      %235 = vector.multi_reduction <maximumf>, %234, %cst_198 [1] : vector<2x800xf32> to vector<2xf32>
      %236 = vector.shape_cast %235 : vector<2xf32> to vector<2x1xf32>
      %237 = vector.broadcast %236 : vector<2x1xf32> to vector<2x800xf32>
      %238 = arith.subf %234, %237 : vector<2x800xf32>
      %239 = math.exp %238 : vector<2x800xf32>
      %cst_199 = arith.constant dense<0.000000e+00> : vector<2xf32>
      %240 = vector.multi_reduction <add>, %239, %cst_199 [1] : vector<2x800xf32> to vector<2xf32>
      %241 = vector.shape_cast %240 : vector<2xf32> to vector<2x1xf32>
      %242 = tpu.reciprocal %241 {approx = true} : vector<2x1xf32> -> vector<2x1xf32>
      %243 = vector.broadcast %242 : vector<2x1xf32> to vector<2x800xf32>
      %244 = arith.mulf %239, %243 : vector<2x800xf32>
      %245 = vector.shape_cast %244 : vector<2x800xf32> to vector<2x1x800xf32>
      %246 = vector.broadcast %245 : vector<2x1x800xf32> to vector<2x16x800xf32>
      %247 = arith.mulf %246, %175 : vector<2x16x800xf32>
      %cst_200 = arith.constant dense<0.000000e+00> : vector<2x16xf32>
      %248 = vector.multi_reduction <add>, %247, %cst_200 [2] : vector<2x16x800xf32> to vector<2x16xf32>
      %249 = arith.mulf %248, %248 : vector<2x16xf32>
      %cst_201 = arith.constant dense<0.000000e+00> : vector<2xf32>
      %250 = vector.multi_reduction <add>, %249, %cst_201 [1] : vector<2x16xf32> to vector<2xf32>
      %251 = vector.shape_cast %250 : vector<2xf32> to vector<2x1xf32>
      %252 = math.sqrt %251 : vector<2x1xf32>
      %cst_202 = arith.constant 1.000000e+00 : f32
      %253 = vector.broadcast %cst_202 : f32 to vector<2x1xf32>
      %254 = arith.addf %253, %251 : vector<2x1xf32>
      %255 = tpu.reciprocal %254 {approx = true} : vector<2x1xf32> -> vector<2x1xf32>
      %256 = arith.mulf %252, %255 : vector<2x1xf32>
      %257 = vector.broadcast %256 : vector<2x1xf32> to vector<2x16xf32>
      %258 = arith.mulf %248, %257 : vector<2x16xf32>
      %259 = arith.index_cast %arg5 : i32 to index
      %c0_203 = arith.constant 0 : index
      %c0_204 = arith.constant 0 : index
      %260 = vector.load %arg4[%259, %c0_203, %c0_204] : memref<16x2x16xf32, #tpu.memory_space<vmem>>, vector<1x2x16xf32>
      %261 = vector.shape_cast %260 : vector<1x2x16xf32> to vector<2x16xf32>
      %262 = vector.shape_cast %258 : vector<2x16xf32> to vector<1x2x16xf32>
      tpu.vector_store %arg4[%259, %c0_203, %c0_204], %262 {strides = array<i32>} : memref<16x2x16xf32, #tpu.memory_space<vmem>>, vector<1x2x16xf32>,
    }
    %c16_i32_0 = arith.constant 16 : i32
    %c0 = arith.constant 0 : index
    %c0_1 = arith.constant 0 : index
    %c0_2 = arith.constant 0 : index
    %1 = vector.load %arg4[%c0, %c0_1, %c0_2] : memref<16x2x16xf32, #tpu.memory_space<vmem>>, vector<1x1x16xf32>
    %2 = vector.shape_cast %1 : vector<1x1x16xf32> to vector<1x16xf32>
    %c0_3 = arith.constant 0 : index
    %c0_4 = arith.constant 0 : index
    %3 = vector.load %arg3[%c0_3, %c0_4] : memref<2x256xf32, #tpu.memory_space<vmem>>, vector<1x16xf32>
    tpu.vector_store %arg3[%c0_3, %c0_4], %2 {strides = array<i32>} : memref<2x256xf32, #tpu.memory_space<vmem>>, vector<1x16xf32>,
    %c1 = arith.constant 1 : index
    %c0_5 = arith.constant 0 : index
    %c0_6 = arith.constant 0 : index
    %4 = vector.load %arg4[%c1, %c0_5, %c0_6] : memref<16x2x16xf32, #tpu.memory_space<vmem>>, vector<1x1x16xf32>
    %5 = vector.shape_cast %4 : vector<1x1x16xf32> to vector<1x16xf32>
    %c0_7 = arith.constant 0 : index
    %c16 = arith.constant 16 : index
    %6 = vector.load %arg3[%c0_7, %c16] : memref<2x256xf32, #tpu.memory_space<vmem>>, vector<1x16xf32>
    tpu.vector_store %arg3[%c0_7, %c16], %5 {strides = array<i32>} : memref<2x256xf32, #tpu.memory_space<vmem>>, vector<1x16xf32>,
    %c2 = arith.constant 2 : index
    %c0_8 = arith.constant 0 : index
    %c0_9 = arith.constant 0 : index
    %7 = vector.load %arg4[%c2, %c0_8, %c0_9] : memref<16x2x16xf32, #tpu.memory_space<vmem>>, vector<1x1x16xf32>
    %8 = vector.shape_cast %7 : vector<1x1x16xf32> to vector<1x16xf32>
    %c0_10 = arith.constant 0 : index
    %c32 = arith.constant 32 : index
    %9 = vector.load %arg3[%c0_10, %c32] : memref<2x256xf32, #tpu.memory_space<vmem>>, vector<1x16xf32>
    tpu.vector_store %arg3[%c0_10, %c32], %8 {strides = array<i32>} : memref<2x256xf32, #tpu.memory_space<vmem>>, vector<1x16xf32>,
    %c3 = arith.constant 3 : index
    %c0_11 = arith.constant 0 : index
    %c0_12 = arith.constant 0 : index
    %10 = vector.load %arg4[%c3, %c0_11, %c0_12] : memref<16x2x16xf32, #tpu.memory_space<vmem>>, vector<1x1x16xf32>
    %11 = vector.shape_cast %10 : vector<1x1x16xf32> to vector<1x16xf32>
    %c0_13 = arith.constant 0 : index
    %c48 = arith.constant 48 : index
    %12 = vector.load %arg3[%c0_13, %c48] : memref<2x256xf32, #tpu.memory_space<vmem>>, vector<1x16xf32>
    tpu.vector_store %arg3[%c0_13, %c48], %11 {strides = array<i32>} : memref<2x256xf32, #tpu.memory_space<vmem>>, vector<1x16xf32>,
    %c4 = arith.constant 4 : index
    %c0_14 = arith.constant 0 : index
    %c0_15 = arith.constant 0 : index
    %13 = vector.load %arg4[%c4, %c0_14, %c0_15] : memref<16x2x16xf32, #tpu.memory_space<vmem>>, vector<1x1x16xf32>
    %14 = vector.shape_cast %13 : vector<1x1x16xf32> to vector<1x16xf32>
    %c0_16 = arith.constant 0 : index
    %c64 = arith.constant 64 : index
    %15 = vector.load %arg3[%c0_16, %c64] : memref<2x256xf32, #tpu.memory_space<vmem>>, vector<1x16xf32>
    tpu.vector_store %arg3[%c0_16, %c64], %14 {strides = array<i32>} : memref<2x256xf32, #tpu.memory_space<vmem>>, vector<1x16xf32>,
    %c5 = arith.constant 5 : index
    %c0_17 = arith.constant 0 : index
    %c0_18 = arith.constant 0 : index
    %16 = vector.load %arg4[%c5, %c0_17, %c0_18] : memref<16x2x16xf32, #tpu.memory_space<vmem>>, vector<1x1x16xf32>
    %17 = vector.shape_cast %16 : vector<1x1x16xf32> to vector<1x16xf32>
    %c0_19 = arith.constant 0 : index
    %c80 = arith.constant 80 : index
    %18 = vector.load %arg3[%c0_19, %c80] : memref<2x256xf32, #tpu.memory_space<vmem>>, vector<1x16xf32>
    tpu.vector_store %arg3[%c0_19, %c80], %17 {strides = array<i32>} : memref<2x256xf32, #tpu.memory_space<vmem>>, vector<1x16xf32>,
    %c6 = arith.constant 6 : index
    %c0_20 = arith.constant 0 : index
    %c0_21 = arith.constant 0 : index
    %19 = vector.load %arg4[%c6, %c0_20, %c0_21] : memref<16x2x16xf32, #tpu.memory_space<vmem>>, vector<1x1x16xf32>
    %20 = vector.shape_cast %19 : vector<1x1x16xf32> to vector<1x16xf32>
    %c0_22 = arith.constant 0 : index
    %c96 = arith.constant 96 : index
    %21 = vector.load %arg3[%c0_22, %c96] : memref<2x256xf32, #tpu.memory_space<vmem>>, vector<1x16xf32>
    tpu.vector_store %arg3[%c0_22, %c96], %20 {strides = array<i32>} : memref<2x256xf32, #tpu.memory_space<vmem>>, vector<1x16xf32>,
    %c7 = arith.constant 7 : index
    %c0_23 = arith.constant 0 : index
    %c0_24 = arith.constant 0 : index
    %22 = vector.load %arg4[%c7, %c0_23, %c0_24] : memref<16x2x16xf32, #tpu.memory_space<vmem>>, vector<1x1x16xf32>
    %23 = vector.shape_cast %22 : vector<1x1x16xf32> to vector<1x16xf32>
    %c0_25 = arith.constant 0 : index
    %c112 = arith.constant 112 : index
    %24 = vector.load %arg3[%c0_25, %c112] : memref<2x256xf32, #tpu.memory_space<vmem>>, vector<1x16xf32>
    tpu.vector_store %arg3[%c0_25, %c112], %23 {strides = array<i32>} : memref<2x256xf32, #tpu.memory_space<vmem>>, vector<1x16xf32>,
    %c8 = arith.constant 8 : index
    %c0_26 = arith.constant 0 : index
    %c0_27 = arith.constant 0 : index
    %25 = vector.load %arg4[%c8, %c0_26, %c0_27] : memref<16x2x16xf32, #tpu.memory_space<vmem>>, vector<1x1x16xf32>
    %26 = vector.shape_cast %25 : vector<1x1x16xf32> to vector<1x16xf32>
    %c0_28 = arith.constant 0 : index
    %c128 = arith.constant 128 : index
    %27 = vector.load %arg3[%c0_28, %c128] : memref<2x256xf32, #tpu.memory_space<vmem>>, vector<1x16xf32>
    tpu.vector_store %arg3[%c0_28, %c128], %26 {strides = array<i32>} : memref<2x256xf32, #tpu.memory_space<vmem>>, vector<1x16xf32>,
    %c9 = arith.constant 9 : index
    %c0_29 = arith.constant 0 : index
    %c0_30 = arith.constant 0 : index
    %28 = vector.load %arg4[%c9, %c0_29, %c0_30] : memref<16x2x16xf32, #tpu.memory_space<vmem>>, vector<1x1x16xf32>
    %29 = vector.shape_cast %28 : vector<1x1x16xf32> to vector<1x16xf32>
    %c0_31 = arith.constant 0 : index
    %c144 = arith.constant 144 : index
    %30 = vector.load %arg3[%c0_31, %c144] : memref<2x256xf32, #tpu.memory_space<vmem>>, vector<1x16xf32>
    tpu.vector_store %arg3[%c0_31, %c144], %29 {strides = array<i32>} : memref<2x256xf32, #tpu.memory_space<vmem>>, vector<1x16xf32>,
    %c10 = arith.constant 10 : index
    %c0_32 = arith.constant 0 : index
    %c0_33 = arith.constant 0 : index
    %31 = vector.load %arg4[%c10, %c0_32, %c0_33] : memref<16x2x16xf32, #tpu.memory_space<vmem>>, vector<1x1x16xf32>
    %32 = vector.shape_cast %31 : vector<1x1x16xf32> to vector<1x16xf32>
    %c0_34 = arith.constant 0 : index
    %c160 = arith.constant 160 : index
    %33 = vector.load %arg3[%c0_34, %c160] : memref<2x256xf32, #tpu.memory_space<vmem>>, vector<1x16xf32>
    tpu.vector_store %arg3[%c0_34, %c160], %32 {strides = array<i32>} : memref<2x256xf32, #tpu.memory_space<vmem>>, vector<1x16xf32>,
    %c11 = arith.constant 11 : index
    %c0_35 = arith.constant 0 : index
    %c0_36 = arith.constant 0 : index
    %34 = vector.load %arg4[%c11, %c0_35, %c0_36] : memref<16x2x16xf32, #tpu.memory_space<vmem>>, vector<1x1x16xf32>
    %35 = vector.shape_cast %34 : vector<1x1x16xf32> to vector<1x16xf32>
    %c0_37 = arith.constant 0 : index
    %c176 = arith.constant 176 : index
    %36 = vector.load %arg3[%c0_37, %c176] : memref<2x256xf32, #tpu.memory_space<vmem>>, vector<1x16xf32>
    tpu.vector_store %arg3[%c0_37, %c176], %35 {strides = array<i32>} : memref<2x256xf32, #tpu.memory_space<vmem>>, vector<1x16xf32>,
    %c12 = arith.constant 12 : index
    %c0_38 = arith.constant 0 : index
    %c0_39 = arith.constant 0 : index
    %37 = vector.load %arg4[%c12, %c0_38, %c0_39] : memref<16x2x16xf32, #tpu.memory_space<vmem>>, vector<1x1x16xf32>
    %38 = vector.shape_cast %37 : vector<1x1x16xf32> to vector<1x16xf32>
    %c0_40 = arith.constant 0 : index
    %c192 = arith.constant 192 : index
    %39 = vector.load %arg3[%c0_40, %c192] : memref<2x256xf32, #tpu.memory_space<vmem>>, vector<1x16xf32>
    tpu.vector_store %arg3[%c0_40, %c192], %38 {strides = array<i32>} : memref<2x256xf32, #tpu.memory_space<vmem>>, vector<1x16xf32>,
    %c13 = arith.constant 13 : index
    %c0_41 = arith.constant 0 : index
    %c0_42 = arith.constant 0 : index
    %40 = vector.load %arg4[%c13, %c0_41, %c0_42] : memref<16x2x16xf32, #tpu.memory_space<vmem>>, vector<1x1x16xf32>
    %41 = vector.shape_cast %40 : vector<1x1x16xf32> to vector<1x16xf32>
    %c0_43 = arith.constant 0 : index
    %c208 = arith.constant 208 : index
    %42 = vector.load %arg3[%c0_43, %c208] : memref<2x256xf32, #tpu.memory_space<vmem>>, vector<1x16xf32>
    tpu.vector_store %arg3[%c0_43, %c208], %41 {strides = array<i32>} : memref<2x256xf32, #tpu.memory_space<vmem>>, vector<1x16xf32>,
    %c14 = arith.constant 14 : index
    %c0_44 = arith.constant 0 : index
    %c0_45 = arith.constant 0 : index
    %43 = vector.load %arg4[%c14, %c0_44, %c0_45] : memref<16x2x16xf32, #tpu.memory_space<vmem>>, vector<1x1x16xf32>
    %44 = vector.shape_cast %43 : vector<1x1x16xf32> to vector<1x16xf32>
    %c0_46 = arith.constant 0 : index
    %c224 = arith.constant 224 : index
    %45 = vector.load %arg3[%c0_46, %c224] : memref<2x256xf32, #tpu.memory_space<vmem>>, vector<1x16xf32>
    tpu.vector_store %arg3[%c0_46, %c224], %44 {strides = array<i32>} : memref<2x256xf32, #tpu.memory_space<vmem>>, vector<1x16xf32>,
    %c15 = arith.constant 15 : index
    %c0_47 = arith.constant 0 : index
    %c0_48 = arith.constant 0 : index
    %46 = vector.load %arg4[%c15, %c0_47, %c0_48] : memref<16x2x16xf32, #tpu.memory_space<vmem>>, vector<1x1x16xf32>
    %47 = vector.shape_cast %46 : vector<1x1x16xf32> to vector<1x16xf32>
    %c0_49 = arith.constant 0 : index
    %c240 = arith.constant 240 : index
    %48 = vector.load %arg3[%c0_49, %c240] : memref<2x256xf32, #tpu.memory_space<vmem>>, vector<1x16xf32>
    tpu.vector_store %arg3[%c0_49, %c240], %47 {strides = array<i32>} : memref<2x256xf32, #tpu.memory_space<vmem>>, vector<1x16xf32>,
    %c0_50 = arith.constant 0 : index
    %c1_51 = arith.constant 1 : index
    %c0_52 = arith.constant 0 : index
    %49 = vector.load %arg4[%c0_50, %c1_51, %c0_52] : memref<16x2x16xf32, #tpu.memory_space<vmem>>, vector<1x1x16xf32>
    %50 = vector.shape_cast %49 : vector<1x1x16xf32> to vector<1x16xf32>
    %c1_53 = arith.constant 1 : index
    %c0_54 = arith.constant 0 : index
    %51 = vector.load %arg3[%c1_53, %c0_54] : memref<2x256xf32, #tpu.memory_space<vmem>>, vector<1x16xf32>
    tpu.vector_store %arg3[%c1_53, %c0_54], %50 {strides = array<i32>} : memref<2x256xf32, #tpu.memory_space<vmem>>, vector<1x16xf32>,
    %c1_55 = arith.constant 1 : index
    %c1_56 = arith.constant 1 : index
    %c0_57 = arith.constant 0 : index
    %52 = vector.load %arg4[%c1_55, %c1_56, %c0_57] : memref<16x2x16xf32, #tpu.memory_space<vmem>>, vector<1x1x16xf32>
    %53 = vector.shape_cast %52 : vector<1x1x16xf32> to vector<1x16xf32>
    %c1_58 = arith.constant 1 : index
    %c16_59 = arith.constant 16 : index
    %54 = vector.load %arg3[%c1_58, %c16_59] : memref<2x256xf32, #tpu.memory_space<vmem>>, vector<1x16xf32>
    tpu.vector_store %arg3[%c1_58, %c16_59], %53 {strides = array<i32>} : memref<2x256xf32, #tpu.memory_space<vmem>>, vector<1x16xf32>,
    %c2_60 = arith.constant 2 : index
    %c1_61 = arith.constant 1 : index
    %c0_62 = arith.constant 0 : index
    %55 = vector.load %arg4[%c2_60, %c1_61, %c0_62] : memref<16x2x16xf32, #tpu.memory_space<vmem>>, vector<1x1x16xf32>
    %56 = vector.shape_cast %55 : vector<1x1x16xf32> to vector<1x16xf32>
    %c1_63 = arith.constant 1 : index
    %c32_64 = arith.constant 32 : index
    %57 = vector.load %arg3[%c1_63, %c32_64] : memref<2x256xf32, #tpu.memory_space<vmem>>, vector<1x16xf32>
    tpu.vector_store %arg3[%c1_63, %c32_64], %56 {strides = array<i32>} : memref<2x256xf32, #tpu.memory_space<vmem>>, vector<1x16xf32>,
    %c3_65 = arith.constant 3 : index
    %c1_66 = arith.constant 1 : index
    %c0_67 = arith.constant 0 : index
    %58 = vector.load %arg4[%c3_65, %c1_66, %c0_67] : memref<16x2x16xf32, #tpu.memory_space<vmem>>, vector<1x1x16xf32>
    %59 = vector.shape_cast %58 : vector<1x1x16xf32> to vector<1x16xf32>
    %c1_68 = arith.constant 1 : index
    %c48_69 = arith.constant 48 : index
    %60 = vector.load %arg3[%c1_68, %c48_69] : memref<2x256xf32, #tpu.memory_space<vmem>>, vector<1x16xf32>
    tpu.vector_store %arg3[%c1_68, %c48_69], %59 {strides = array<i32>} : memref<2x256xf32, #tpu.memory_space<vmem>>, vector<1x16xf32>,
    %c4_70 = arith.constant 4 : index
    %c1_71 = arith.constant 1 : index
    %c0_72 = arith.constant 0 : index
    %61 = vector.load %arg4[%c4_70, %c1_71, %c0_72] : memref<16x2x16xf32, #tpu.memory_space<vmem>>, vector<1x1x16xf32>
    %62 = vector.shape_cast %61 : vector<1x1x16xf32> to vector<1x16xf32>
    %c1_73 = arith.constant 1 : index
    %c64_74 = arith.constant 64 : index
    %63 = vector.load %arg3[%c1_73, %c64_74] : memref<2x256xf32, #tpu.memory_space<vmem>>, vector<1x16xf32>
    tpu.vector_store %arg3[%c1_73, %c64_74], %62 {strides = array<i32>} : memref<2x256xf32, #tpu.memory_space<vmem>>, vector<1x16xf32>,
    %c5_75 = arith.constant 5 : index
    %c1_76 = arith.constant 1 : index
    %c0_77 = arith.constant 0 : index
    %64 = vector.load %arg4[%c5_75, %c1_76, %c0_77] : memref<16x2x16xf32, #tpu.memory_space<vmem>>, vector<1x1x16xf32>
    %65 = vector.shape_cast %64 : vector<1x1x16xf32> to vector<1x16xf32>
    %c1_78 = arith.constant 1 : index
    %c80_79 = arith.constant 80 : index
    %66 = vector.load %arg3[%c1_78, %c80_79] : memref<2x256xf32, #tpu.memory_space<vmem>>, vector<1x16xf32>
    tpu.vector_store %arg3[%c1_78, %c80_79], %65 {strides = array<i32>} : memref<2x256xf32, #tpu.memory_space<vmem>>, vector<1x16xf32>,
    %c6_80 = arith.constant 6 : index
    %c1_81 = arith.constant 1 : index
    %c0_82 = arith.constant 0 : index
    %67 = vector.load %arg4[%c6_80, %c1_81, %c0_82] : memref<16x2x16xf32, #tpu.memory_space<vmem>>, vector<1x1x16xf32>
    %68 = vector.shape_cast %67 : vector<1x1x16xf32> to vector<1x16xf32>
    %c1_83 = arith.constant 1 : index
    %c96_84 = arith.constant 96 : index
    %69 = vector.load %arg3[%c1_83, %c96_84] : memref<2x256xf32, #tpu.memory_space<vmem>>, vector<1x16xf32>
    tpu.vector_store %arg3[%c1_83, %c96_84], %68 {strides = array<i32>} : memref<2x256xf32, #tpu.memory_space<vmem>>, vector<1x16xf32>,
    %c7_85 = arith.constant 7 : index
    %c1_86 = arith.constant 1 : index
    %c0_87 = arith.constant 0 : index
    %70 = vector.load %arg4[%c7_85, %c1_86, %c0_87] : memref<16x2x16xf32, #tpu.memory_space<vmem>>, vector<1x1x16xf32>
    %71 = vector.shape_cast %70 : vector<1x1x16xf32> to vector<1x16xf32>
    %c1_88 = arith.constant 1 : index
    %c112_89 = arith.constant 112 : index
    %72 = vector.load %arg3[%c1_88, %c112_89] : memref<2x256xf32, #tpu.memory_space<vmem>>, vector<1x16xf32>
    tpu.vector_store %arg3[%c1_88, %c112_89], %71 {strides = array<i32>} : memref<2x256xf32, #tpu.memory_space<vmem>>, vector<1x16xf32>,
    %c8_90 = arith.constant 8 : index
    %c1_91 = arith.constant 1 : index
    %c0_92 = arith.constant 0 : index
    %73 = vector.load %arg4[%c8_90, %c1_91, %c0_92] : memref<16x2x16xf32, #tpu.memory_space<vmem>>, vector<1x1x16xf32>
    %74 = vector.shape_cast %73 : vector<1x1x16xf32> to vector<1x16xf32>
    %c1_93 = arith.constant 1 : index
    %c128_94 = arith.constant 128 : index
    %75 = vector.load %arg3[%c1_93, %c128_94] : memref<2x256xf32, #tpu.memory_space<vmem>>, vector<1x16xf32>
    tpu.vector_store %arg3[%c1_93, %c128_94], %74 {strides = array<i32>} : memref<2x256xf32, #tpu.memory_space<vmem>>, vector<1x16xf32>,
    %c9_95 = arith.constant 9 : index
    %c1_96 = arith.constant 1 : index
    %c0_97 = arith.constant 0 : index
    %76 = vector.load %arg4[%c9_95, %c1_96, %c0_97] : memref<16x2x16xf32, #tpu.memory_space<vmem>>, vector<1x1x16xf32>
    %77 = vector.shape_cast %76 : vector<1x1x16xf32> to vector<1x16xf32>
    %c1_98 = arith.constant 1 : index
    %c144_99 = arith.constant 144 : index
    %78 = vector.load %arg3[%c1_98, %c144_99] : memref<2x256xf32, #tpu.memory_space<vmem>>, vector<1x16xf32>
    tpu.vector_store %arg3[%c1_98, %c144_99], %77 {strides = array<i32>} : memref<2x256xf32, #tpu.memory_space<vmem>>, vector<1x16xf32>,
    %c10_100 = arith.constant 10 : index
    %c1_101 = arith.constant 1 : index
    %c0_102 = arith.constant 0 : index
    %79 = vector.load %arg4[%c10_100, %c1_101, %c0_102] : memref<16x2x16xf32, #tpu.memory_space<vmem>>, vector<1x1x16xf32>
    %80 = vector.shape_cast %79 : vector<1x1x16xf32> to vector<1x16xf32>
    %c1_103 = arith.constant 1 : index
    %c160_104 = arith.constant 160 : index
    %81 = vector.load %arg3[%c1_103, %c160_104] : memref<2x256xf32, #tpu.memory_space<vmem>>, vector<1x16xf32>
    tpu.vector_store %arg3[%c1_103, %c160_104], %80 {strides = array<i32>} : memref<2x256xf32, #tpu.memory_space<vmem>>, vector<1x16xf32>,
    %c11_105 = arith.constant 11 : index
    %c1_106 = arith.constant 1 : index
    %c0_107 = arith.constant 0 : index
    %82 = vector.load %arg4[%c11_105, %c1_106, %c0_107] : memref<16x2x16xf32, #tpu.memory_space<vmem>>, vector<1x1x16xf32>
    %83 = vector.shape_cast %82 : vector<1x1x16xf32> to vector<1x16xf32>
    %c1_108 = arith.constant 1 : index
    %c176_109 = arith.constant 176 : index
    %84 = vector.load %arg3[%c1_108, %c176_109] : memref<2x256xf32, #tpu.memory_space<vmem>>, vector<1x16xf32>
    tpu.vector_store %arg3[%c1_108, %c176_109], %83 {strides = array<i32>} : memref<2x256xf32, #tpu.memory_space<vmem>>, vector<1x16xf32>,
    %c12_110 = arith.constant 12 : index
    %c1_111 = arith.constant 1 : index
    %c0_112 = arith.constant 0 : index
    %85 = vector.load %arg4[%c12_110, %c1_111, %c0_112] : memref<16x2x16xf32, #tpu.memory_space<vmem>>, vector<1x1x16xf32>
    %86 = vector.shape_cast %85 : vector<1x1x16xf32> to vector<1x16xf32>
    %c1_113 = arith.constant 1 : index
    %c192_114 = arith.constant 192 : index
    %87 = vector.load %arg3[%c1_113, %c192_114] : memref<2x256xf32, #tpu.memory_space<vmem>>, vector<1x16xf32>
    tpu.vector_store %arg3[%c1_113, %c192_114], %86 {strides = array<i32>} : memref<2x256xf32, #tpu.memory_space<vmem>>, vector<1x16xf32>,
    %c13_115 = arith.constant 13 : index
    %c1_116 = arith.constant 1 : index
    %c0_117 = arith.constant 0 : index
    %88 = vector.load %arg4[%c13_115, %c1_116, %c0_117] : memref<16x2x16xf32, #tpu.memory_space<vmem>>, vector<1x1x16xf32>
    %89 = vector.shape_cast %88 : vector<1x1x16xf32> to vector<1x16xf32>
    %c1_118 = arith.constant 1 : index
    %c208_119 = arith.constant 208 : index
    %90 = vector.load %arg3[%c1_118, %c208_119] : memref<2x256xf32, #tpu.memory_space<vmem>>, vector<1x16xf32>
    tpu.vector_store %arg3[%c1_118, %c208_119], %89 {strides = array<i32>} : memref<2x256xf32, #tpu.memory_space<vmem>>, vector<1x16xf32>,
    %c14_120 = arith.constant 14 : index
    %c1_121 = arith.constant 1 : index
    %c0_122 = arith.constant 0 : index
    %91 = vector.load %arg4[%c14_120, %c1_121, %c0_122] : memref<16x2x16xf32, #tpu.memory_space<vmem>>, vector<1x1x16xf32>
    %92 = vector.shape_cast %91 : vector<1x1x16xf32> to vector<1x16xf32>
    %c1_123 = arith.constant 1 : index
    %c224_124 = arith.constant 224 : index
    %93 = vector.load %arg3[%c1_123, %c224_124] : memref<2x256xf32, #tpu.memory_space<vmem>>, vector<1x16xf32>
    tpu.vector_store %arg3[%c1_123, %c224_124], %92 {strides = array<i32>} : memref<2x256xf32, #tpu.memory_space<vmem>>, vector<1x16xf32>,
    %c15_125 = arith.constant 15 : index
    %c1_126 = arith.constant 1 : index
    %c0_127 = arith.constant 0 : index
    %94 = vector.load %arg4[%c15_125, %c1_126, %c0_127] : memref<16x2x16xf32, #tpu.memory_space<vmem>>, vector<1x1x16xf32>
    %95 = vector.shape_cast %94 : vector<1x1x16xf32> to vector<1x16xf32>
    %c1_128 = arith.constant 1 : index
    %c240_129 = arith.constant 240 : index
    %96 = vector.load %arg3[%c1_128, %c240_129] : memref<2x256xf32, #tpu.memory_space<vmem>>, vector<1x16xf32>
    tpu.vector_store %arg3[%c1_128, %c240_129], %95 {strides = array<i32>} : memref<2x256xf32, #tpu.memory_space<vmem>>, vector<1x16xf32>,
    return
  }
  func.func @transform_0(%arg0: i32) -> (i32, i32, i32, i32) {
    %c0_i32 = arith.constant 0 : i32
    %c0_i32_0 = arith.constant 0 : i32
    %c0_i32_1 = arith.constant 0 : i32
    %c0_i32_2 = arith.constant 0 : i32
    %c0_i32_3 = arith.constant 0 : i32
    return %c0_i32, %c0_i32_0, %c0_i32_1, %c0_i32_2 : i32, i32, i32, i32
  }
  func.func @transform_1(%arg0: i32) -> (i32, i32, i32, i32) {
    %c0_i32 = arith.constant 0 : i32
    %c0_i32_0 = arith.constant 0 : i32
    %c0_i32_1 = arith.constant 0 : i32
    %c0_i32_2 = arith.constant 0 : i32
    return %arg0, %c0_i32, %c0_i32_0, %c0_i32_1 : i32, i32, i32, i32
  }
  func.func @transform_2(%arg0: i32) -> (i32, i32) {
    %c0_i32 = arith.constant 0 : i32
    %c0_i32_0 = arith.constant 0 : i32
    return %c0_i32, %arg0 : i32, i32
  }
}

</mosaic_0001>

<llo_original>
// kernel: capsule_net_forward.3
$region0: #{capsule_net_forward.3}
  #allocation0 [shape = 'u32[]', space=smem, size = 0x4, offset = 0x4, fixed_abs, tag = 'smem constant byte address 0x4 - core index']
  #allocation1 [shape = 'u32[72,128]{1,0:T(1,128)}', space=vmem, size = 0x9000, scoped, tag = 'internal scratch']
  %s0 = inlined_call_operand.hbm [shape: f32[8,81], index: 0, kind: input, shape index: {}]
  %s1 = inlined_call_operand.vmem [shape: f32[81,2688], index: 1, kind: input, shape index: {}]
  %s2 = inlined_call_operand.vmem [shape: f32[8,1], index: 2, kind: input, shape index: {}]
  %s3 = inlined_call_operand.vmem [shape: f32[8,1], index: 3, kind: input, shape index: {}]
  %s4 = inlined_call_operand.vmem [shape: f32[8,1], index: 4, kind: input, shape index: {}]
  %s5 = inlined_call_operand.vmem [shape: f32[8,2688], index: 5, kind: output, shape index: {}]
  %s6 = sld [smem:[#allocation0]]
  $region34: #{capsule_net_forward.3} parent=0
    _
  %s8 = ssub.s32 1, %s6
  %s9 = scalar_select 0, %s8, %s6
  $region1: #{capsule_net_forward.3} parent=0
    #allocation2 [shape = 'u8[4096]{0}', space=vmem, size = 0x1000, scoped, tag = 'input window, operand 0, single buffered']
    #allocation3 [shape = 's32[1]{0}', space=sflag, size = 0x4, scoped, tag = 'scoped memory for capsule_net_forward.3']
    %10 = vsyncpa [#allocation3], 0
    // Predicated region
    $region2: #{capsule_net_forward.3} parent=1 // pred_check
      _
    $region3: #{capsule_net_forward.3} parent=1 // pred_check_branch
      %12 = sbr.rel (0) target = $region5
    $region4: #{capsule_net_forward.3} parent=1 // pred_region
      %14 = vsyncadd [#allocation3], 0
      %s16 = sshll.u32 %s0, 4
      %s17 = int_to_ptr.hbm [resolvable:$true] %s16
      %s18 = sshll.u32 [#allocation2], 4
      %s19 = int_to_ptr.vmem [resolvable:$true] %s18
      %21 = dma.hbm_to_vmem [thread:$0]  %s17, 128, %s19, [#allocation3]
    $region5: #{capsule_net_forward.3} parent=1 // pred_fallthru
      _
    // Predicated region
    $region6: #{capsule_net_forward.3} parent=1 // pred_check
      _
    $region7: #{capsule_net_forward.3} parent=1 // pred_check_branch
      %23 = sbr.rel (0) target = $region9
    $region8: #{capsule_net_forward.3} parent=1 // pred_region
      _
    $region9: #{capsule_net_forward.3} parent=1 // pred_fallthru
      _
    // Predicated region
    $region10: #{capsule_net_forward.3} parent=1 // pred_check
      _
    $region11: #{capsule_net_forward.3} parent=1 // pred_check_branch
      %25 = sbr.rel (0) target = $region13
    $region12: #{capsule_net_forward.3} parent=1 // pred_region
      _
    $region13: #{capsule_net_forward.3} parent=1 // pred_fallthru
      _
    // Predicated region
    $region14: #{capsule_net_forward.3} parent=1 // pred_check
      _
    $region15: #{capsule_net_forward.3} parent=1 // pred_check_branch
      %27 = sbr.rel (0) target = $region17
    $region16: #{capsule_net_forward.3} parent=1 // pred_region
      _
    $region17: #{capsule_net_forward.3} parent=1 // pred_fallthru
      _
    // Predicated region
    $region18: #{capsule_net_forward.3} parent=1 // pred_check
      _
    $region19: #{capsule_net_forward.3} parent=1 // pred_check_branch
      %29 = sbr.rel (0) target = $region21
    $region20: #{capsule_net_forward.3} parent=1 // pred_region
      _
    $region21: #{capsule_net_forward.3} parent=1 // pred_fallthru
      _
    // Predicated region
    $region22: #{capsule_net_forward.3} parent=1 // pred_check
      _
    $region23: #{capsule_net_forward.3} parent=1 // pred_check_branch
      %31 = sbr.rel (0) target = $region25
    $region24: #{capsule_net_forward.3} parent=1 // pred_region
      %33 = dma.done [#allocation3], 128
    $region25: #{capsule_net_forward.3} parent=1 // pred_fallthru
      _
    %v34 = vld [vmem:[#allocation2] sm:$0xff]
    %v35 = vld [vmem:[%s1] sm:$0xff]
    %v36 = vld [vmem:[%s1 + $0x8] sm:$0xff]
    %v37 = vld [vmem:[%s1 + $0x10] sm:$0xff]
    %v38 = vld [vmem:[%s1 + $0x18] sm:$0xff]
    %v39 = vld [vmem:[%s1 + $0x20] sm:$0xff]
    %v40 = vld [vmem:[%s1 + $0x28] sm:$0xff]
    %v41 = vld [vmem:[%s1 + $0x30] sm:$0xff]
    %v42 = vld [vmem:[%s1 + $0x38] sm:$0xff]
    %v43 = vld [vmem:[%s1 + $0x40] sm:$0xff]
    %v44 = vld [vmem:[%s1 + $0x48] sm:$0xff]
    %v45 = vld [vmem:[%s1 + $0x50] sm:$0xff]
    %v46 = vld [vmem:[%s1 + $0x58] sm:$0xff]
    %v47 = vld [vmem:[%s1 + $0x60] sm:$0xff]
    %v48 = vld [vmem:[%s1 + $0x68] sm:$0xff]
    %v49 = vld [vmem:[%s1 + $0x70] sm:$0xff]
    %v50 = vld [vmem:[%s1 + $0x78] sm:$0xff]
    %v51 = vld [vmem:[%s1 + $0x80] sm:$0xff]
    %v52 = vld [vmem:[%s1 + $0x88] sm:$0xff]
    %v53 = vld [vmem:[%s1 + $0x90] sm:$0xff]
    %v54 = vld [vmem:[%s1 + $0x98] sm:$0xff]
    %v55 = vld [vmem:[%s1 + $0xa0] sm:$0xff]
    %v56 = vld [vmem:[%s1 + $0xa8] sm:$0xff]
    %v57 = vld [vmem:[%s1 + $0xb0] sm:$0xff]
    %v58 = vld [vmem:[%s1 + $0xb8] sm:$0xff]
    %v59 = vld [vmem:[%s1 + $0xc0] sm:$0xff]
    %v60 = vld [vmem:[%s1 + $0xc8] sm:$0xff]
    %v61 = vld [vmem:[%s1 + $0xd0] sm:$0xff]
    %v62 = vld [vmem:[%s1 + $0xd8] sm:$0xff]
    %v63 = vld [vmem:[%s1 + $0xe0] sm:$0xff]
    %v64 = vld [vmem:[%s1 + $0xe8] sm:$0xff]
    %v65 = vld [vmem:[%s1 + $0xf0] sm:$0xff]
    %v66 = vld [vmem:[%s1 + $0xf8] sm:$0xff]
    %v67 = vld [vmem:[%s1 + $0x100] sm:$0xff]
    %v68 = vld [vmem:[%s1 + $0x108] sm:$0xff]
    %v69 = vld [vmem:[%s1 + $0x110] sm:$0xff]
    %v70 = vld [vmem:[%s1 + $0x118] sm:$0xff]
    %v71 = vld [vmem:[%s1 + $0x120] sm:$0xff]
    %v72 = vld [vmem:[%s1 + $0x128] sm:$0xff]
    %v73 = vld [vmem:[%s1 + $0x130] sm:$0xff]
    %v74 = vld [vmem:[%s1 + $0x138] sm:$0xff]
    %v75 = vld [vmem:[%s1 + $0x140] sm:$0xff]
    %v76 = vld [vmem:[%s1 + $0x148] sm:$0xff]
    %v77 = vld [vmem:[%s1 + $0x150] sm:$0xff]
    %v78 = vld [vmem:[%s1 + $0x158] sm:$0xff]
    %v79 = vld [vmem:[%s1 + $0x160] sm:$0xff]
    %v80 = vld [vmem:[%s1 + $0x168] sm:$0xff]
    %v81 = vld [vmem:[%s1 + $0x170] sm:$0xff]
    %v82 = vld [vmem:[%s1 + $0x178] sm:$0xff]
    %v83 = vld [vmem:[%s1 + $0x180] sm:$0xff]
    %v84 = vld [vmem:[%s1 + $0x188] sm:$0xff]
    %v85 = vld [vmem:[%s1 + $0x190] sm:$0xff]
    %v86 = vld [vmem:[%s1 + $0x198] sm:$0xff]
    %v87 = vld [vmem:[%s1 + $0x1a0] sm:$0xff]
    %v88 = vld [vmem:[%s1 + $0x1a8] sm:$0xff]
    %v89 = vld [vmem:[%s1 + $0x1b0] sm:$0xff]
    %v90 = vld [vmem:[%s1 + $0x1b8] sm:$0xff]
    %v91 = vld [vmem:[%s1 + $0x1c0] sm:$0xff]
    %v92 = vld [vmem:[%s1 + $0x1c8] sm:$0xff]
    %v93 = vld [vmem:[%s1 + $0x1d0] sm:$0xff]
    %v94 = vld [vmem:[%s1 + $0x1d8] sm:$0xff]
    %v95 = vld [vmem:[%s1 + $0x1e0] sm:$0xff]
    %v96 = vld [vmem:[%s1 + $0x1e8] sm:$0xff]
    %v97 = vld [vmem:[%s1 + $0x1f0] sm:$0xff]
    %v98 = vld [vmem:[%s1 + $0x1f8] sm:$0xff]
    %v99 = vld [vmem:[%s1 + $0x200] sm:$0xff]
    %v100 = vld [vmem:[%s1 + $0x208] sm:$0xff]
    %v101 = vld [vmem:[%s1 + $0x210] sm:$0xff]
    %v102 = vld [vmem:[%s1 + $0x218] sm:$0xff]
    %v103 = vld [vmem:[%s1 + $0x220] sm:$0xff]
    %v104 = vld [vmem:[%s1 + $0x228] sm:$0xff]
    %v105 = vld [vmem:[%s1 + $0x230] sm:$0xff]
    %v106 = vld [vmem:[%s1 + $0x238] sm:$0xff]
    %v107 = vld [vmem:[%s1 + $0x240] sm:$0xff]
    %v108 = vld [vmem:[%s1 + $0x248] sm:$0xff]
    %v109 = vld [vmem:[%s1 + $0x250] sm:$0xff]
    %v110 = vld [vmem:[%s1 + $0x258] sm:$0xff]
    %v111 = vld [vmem:[%s1 + $0x260] sm:$0xff]
    %v112 = vld [vmem:[%s1 + $0x268] sm:$0xff]
    %v113 = vld [vmem:[%s1 + $0x270] sm:$0xff]
    %v114 = vld [vmem:[%s1 + $0x278] sm:$0xff]
    %v115 = vld [vmem:[%s1 + $0x280] sm:$0xff]
    %v116 = vld [vmem:[%s1 + $0x288] sm:$0xff]
    %v117 = vld [vmem:[%s1 + $0x290] sm:$0xff]
    %v118 = vld [vmem:[%s1 + $0x298] sm:$0xff]
    %v119 = vld [vmem:[%s1 + $0x2a0] sm:$0xff]
    %v120 = vld [vmem:[%s1 + $0x2a8] sm:$0xff]
    %v121 = vld [vmem:[%s1 + $0x2b0] sm:$0xff]
    %v122 = vld [vmem:[%s1 + $0x2b8] sm:$0xff]
    %v123 = vld [vmem:[%s1 + $0x2c0] sm:$0xff]
    %v124 = vld [vmem:[%s1 + $0x2c8] sm:$0xff]
    %v125 = vld [vmem:[%s1 + $0x2d0] sm:$0xff]
    %v126 = vld [vmem:[%s1 + $0x2d8] sm:$0xff]
    %v127 = vld [vmem:[%s1 + $0x2e0] sm:$0xff]
    %v128 = vld [vmem:[%s1 + $0x2e8] sm:$0xff]
    %v129 = vld [vmem:[%s1 + $0x2f0] sm:$0xff]
    %v130 = vld [vmem:[%s1 + $0x2f8] sm:$0xff]
    %v131 = vld [vmem:[%s1 + $0x300] sm:$0xff]
    %v132 = vld [vmem:[%s1 + $0x308] sm:$0xff]
    %v133 = vld [vmem:[%s1 + $0x310] sm:$0xff]
    %v134 = vld [vmem:[%s1 + $0x318] sm:$0xff]
    %v135 = vld [vmem:[%s1 + $0x320] sm:$0xff]
    %v136 = vld [vmem:[%s1 + $0x328] sm:$0xff]
    %v137 = vld [vmem:[%s1 + $0x330] sm:$0xff]
    %v138 = vld [vmem:[%s1 + $0x338] sm:$0xff]
    %v139 = vld [vmem:[%s1 + $0x340] sm:$0xff]
    %v140 = vld [vmem:[%s1 + $0x348] sm:$0xff]
    %v141 = vld [vmem:[%s1 + $0x350] sm:$0xff]
    %v142 = vld [vmem:[%s1 + $0x358] sm:$0xff]
    %v143 = vld [vmem:[%s1 + $0x360] sm:$0xff]
    %v144 = vld [vmem:[%s1 + $0x368] sm:$0xff]
    %v145 = vld [vmem:[%s1 + $0x370] sm:$0xff]
    %v146 = vld [vmem:[%s1 + $0x378] sm:$0xff]
    %v147 = vld [vmem:[%s1 + $0x380] sm:$0xff]
    %v148 = vld [vmem:[%s1 + $0x388] sm:$0xff]
    %v149 = vld [vmem:[%s1 + $0x390] sm:$0xff]
    %v150 = vld [vmem:[%s1 + $0x398] sm:$0xff]
    %v151 = vld [vmem:[%s1 + $0x3a0] sm:$0xff]
    %v152 = vld [vmem:[%s1 + $0x3a8] sm:$0xff]
    %v153 = vld [vmem:[%s1 + $0x3b0] sm:$0xff]
    %v154 = vld [vmem:[%s1 + $0x3b8] sm:$0xff]
    %v155 = vld [vmem:[%s1 + $0x3c0] sm:$0xff]
    %v156 = vld [vmem:[%s1 + $0x3c8] sm:$0xff]
    %v157 = vld [vmem:[%s1 + $0x3d0] sm:$0xff]
    %v158 = vld [vmem:[%s1 + $0x3d8] sm:$0xff]
    %v159 = vld [vmem:[%s1 + $0x3e0] sm:$0xff]
    %v160 = vld [vmem:[%s1 + $0x3e8] sm:$0xff]
    %v161 = vld [vmem:[%s1 + $0x3f0] sm:$0xff]
    %v162 = vld [vmem:[%s1 + $0x3f8] sm:$0xff]
    %v163 = vld [vmem:[%s1 + $0x400] sm:$0xff]
    %v164 = vld [vmem:[%s1 + $0x408] sm:$0xff]
    %v165 = vld [vmem:[%s1 + $0x410] sm:$0xff]
    %v166 = vld [vmem:[%s1 + $0x418] sm:$0xff]
    %v167 = vld [vmem:[%s1 + $0x420] sm:$0xff]
    %v168 = vld [vmem:[%s1 + $0x428] sm:$0xff]
    %v169 = vld [vmem:[%s1 + $0x430] sm:$0xff]
    %v170 = vld [vmem:[%s1 + $0x438] sm:$0xff]
    %v171 = vld [vmem:[%s1 + $0x440] sm:$0xff]
    %v172 = vld [vmem:[%s1 + $0x448] sm:$0xff]
    %v173 = vld [vmem:[%s1 + $0x450] sm:$0xff]
    %v174 = vld [vmem:[%s1 + $0x458] sm:$0xff]
    %v175 = vld [vmem:[%s1 + $0x460] sm:$0xff]
    %v176 = vld [vmem:[%s1 + $0x468] sm:$0xff]
    %v177 = vld [vmem:[%s1 + $0x470] sm:$0xff]
    %v178 = vld [vmem:[%s1 + $0x478] sm:$0xff]
    %v179 = vld [vmem:[%s1 + $0x480] sm:$0xff]
    %v180 = vld [vmem:[%s1 + $0x488] sm:$0xff]
    %v181 = vld [vmem:[%s1 + $0x490] sm:$0xff]
    %v182 = vld [vmem:[%s1 + $0x498] sm:$0xff]
    %v183 = vld [vmem:[%s1 + $0x4a0] sm:$0xff]
    %v184 = vld [vmem:[%s1 + $0x4a8] sm:$0xff]
    %v185 = vld [vmem:[%s1 + $0x4b0] sm:$0xff]
    %v186 = vld [vmem:[%s1 + $0x4b8] sm:$0xff]
    %v187 = vld [vmem:[%s1 + $0x4c0] sm:$0xff]
    %v188 = vld [vmem:[%s1 + $0x4c8] sm:$0xff]
    %v189 = vld [vmem:[%s1 + $0x4d0] sm:$0xff]
    %v190 = vld [vmem:[%s1 + $0x4d8] sm:$0xff]
    %v191 = vld [vmem:[%s1 + $0x4e0] sm:$0xff]
    %v192 = vld [vmem:[%s1 + $0x4e8] sm:$0xff]
    %v193 = vld [vmem:[%s1 + $0x4f0] sm:$0xff]
    %v194 = vld [vmem:[%s1 + $0x4f8] sm:$0xff]
    %v195 = vld [vmem:[%s1 + $0x500] sm:$0xff]
    %v196 = vld [vmem:[%s1 + $0x508] sm:$0xff]
    %v197 = vld [vmem:[%s1 + $0x510] sm:$0xff]
    %v198 = vld [vmem:[%s1 + $0x518] sm:$0xff]
    %v199 = vld [vmem:[%s1 + $0x520] sm:$0xff]
    %v200 = vld [vmem:[%s1 + $0x528] sm:$0xff]
    %v201 = vld [vmem:[%s1 + $0x530] sm:$0xff]
    %v202 = vld [vmem:[%s1 + $0x538] sm:$0xff]
    %v203 = vld [vmem:[%s1 + $0x540] sm:$0xff]
    %v204 = vld [vmem:[%s1 + $0x548] sm:$0xff]
    %v205 = vld [vmem:[%s1 + $0x550] sm:$0xff]
    %v206 = vld [vmem:[%s1 + $0x558] sm:$0xff]
    %v207 = vld [vmem:[%s1 + $0x560] sm:$0xff]
    %v208 = vld [vmem:[%s1 + $0x568] sm:$0xff]
    %v209 = vld [vmem:[%s1 + $0x570] sm:$0xff]
    %v210 = vld [vmem:[%s1 + $0x578] sm:$0xff]
    %v211 = vld [vmem:[%s1 + $0x580] sm:$0xff]
    %v212 = vld [vmem:[%s1 + $0x588] sm:$0xff]
    %v213 = vld [vmem:[%s1 + $0x590] sm:$0xff]
    %v214 = vld [vmem:[%s1 + $0x598] sm:$0xff]
    %v215 = vld [vmem:[%s1 + $0x5a0] sm:$0xff]
    %v216 = vld [vmem:[%s1 + $0x5a8] sm:$0xff]
    %v217 = vld [vmem:[%s1 + $0x5b0] sm:$0xff]
    %v218 = vld [vmem:[%s1 + $0x5b8] sm:$0xff]
    %v219 = vld [vmem:[%s1 + $0x5c0] sm:$0xff]
    %v220 = vld [vmem:[%s1 + $0x5c8] sm:$0xff]
    %v221 = vld [vmem:[%s1 + $0x5d0] sm:$0xff]
    %v222 = vld [vmem:[%s1 + $0x5d8] sm:$0xff]
    %v223 = vld [vmem:[%s1 + $0x5e0] sm:$0xff]
    %v224 = vld [vmem:[%s1 + $0x5e8] sm:$0xff]
    %v225 = vld [vmem:[%s1 + $0x5f0] sm:$0xff]
    %v226 = vld [vmem:[%s1 + $0x5f8] sm:$0xff]
    %v227 = vld [vmem:[%s1 + $0x600] sm:$0xff]
    %v228 = vld [vmem:[%s1 + $0x608] sm:$0xff]
    %v229 = vld [vmem:[%s1 + $0x610] sm:$0xff]
    %v230 = vld [vmem:[%s1 + $0x618] sm:$0xff]
    %v231 = vld [vmem:[%s1 + $0x620] sm:$0xff]
    %v232 = vld [vmem:[%s1 + $0x628] sm:$0xff]
    %v233 = vld [vmem:[%s1 + $0x630] sm:$0xff]
    %v234 = vld [vmem:[%s1 + $0x638] sm:$0xff]
    %v235 = vld [vmem:[%s1 + $0x640] sm:$0xff]
    %v236 = vld [vmem:[%s1 + $0x648] sm:$0xff]
    %v237 = vld [vmem:[%s1 + $0x650] sm:$0xff]
    %v238 = vld [vmem:[%s1 + $0x658] sm:$0xff]
    %v239 = vld [vmem:[%s1 + $0x660] sm:$0xff]
    %v240 = vld [vmem:[%s1 + $0x668] sm:$0xff]
    %v241 = vld [vmem:[%s1 + $0x670] sm:$0xff]
    %v242 = vld [vmem:[%s1 + $0x678] sm:$0xff]
    %v243 = vld [vmem:[%s1 + $0x680] sm:$0xff]
    %v244 = vld [vmem:[%s1 + $0x688] sm:$0xff]
    %v245 = vld [vmem:[%s1 + $0x690] sm:$0x1]
    %v246 = vld [vmem:[%s1 + $0x698] sm:$0x1]
    %v247 = vld [vmem:[%s1 + $0x6a0] sm:$0x1]
    %v248 = vld [vmem:[%s1 + $0x6a8] sm:$0x1]
    %v249 = vld [vmem:[%s1 + $0x6b0] sm:$0x1]
    %v250 = vld [vmem:[%s1 + $0x6b8] sm:$0x1]
    %v251 = vld [vmem:[%s1 + $0x6c0] sm:$0x1]
    %v252 = vld [vmem:[%s1 + $0x6c8] sm:$0x1]
    %v253 = vld [vmem:[%s1 + $0x6d0] sm:$0x1]
    %v254 = vld [vmem:[%s1 + $0x6d8] sm:$0x1]
    %v255 = vld [vmem:[%s1 + $0x6e0] sm:$0x1]
    %v256 = vld [vmem:[%s1 + $0x6e8] sm:$0x1]
    %v257 = vld [vmem:[%s1 + $0x6f0] sm:$0x1]
    %v258 = vld [vmem:[%s1 + $0x6f8] sm:$0x1]
    %v259 = vld [vmem:[%s1 + $0x700] sm:$0x1]
    %v260 = vld [vmem:[%s1 + $0x708] sm:$0x1]
    %v261 = vld [vmem:[%s1 + $0x710] sm:$0x1]
    %v262 = vld [vmem:[%s1 + $0x718] sm:$0x1]
    %v263 = vld [vmem:[%s1 + $0x720] sm:$0x1]
    %v264 = vld [vmem:[%s1 + $0x728] sm:$0x1]
    %v265 = vld [vmem:[%s1 + $0x730] sm:$0x1]
    %v266 = vld [vmem:[%s2] sm:$0xff]
    %268 = vset.pattern.permute.xlu0 0
    %269 = vperm.xlu0 %268, %v266
    %v270 = vpop.permute.xlu0 %269
    %vm272 = vcmask 662528
    %v274 = vsel %vm272, %v34, 0
    %vm276 = vcmask 1040384
    %v278 = vsel %vm276, %v245, 0
    %v281 = vsel %vm276, %v246, 0
    %v284 = vsel %vm276, %v247, 0
    %v287 = vsel %vm276, %v248, 0
    %v290 = vsel %vm276, %v249, 0
    %v293 = vsel %vm276, %v250, 0
    %v296 = vsel %vm276, %v251, 0
    %v299 = vsel %vm276, %v252, 0
    %v302 = vsel %vm276, %v253, 0
    %v305 = vsel %vm276, %v254, 0
    %v308 = vsel %vm276, %v255, 0
    %v311 = vsel %vm276, %v256, 0
    %v314 = vsel %vm276, %v257, 0
    %v317 = vsel %vm276, %v258, 0
    %v320 = vsel %vm276, %v259, 0
    %v323 = vsel %vm276, %v260, 0
    %v326 = vsel %vm276, %v261, 0
    %v329 = vsel %vm276, %v262, 0
    %v332 = vsel %vm276, %v263, 0
    %v335 = vsel %vm276, %v264, 0
    %v338 = vsel %vm276, %v265, 0
    %340 = vmatpush.msra.mxu0 0.0
    %341 = vmatpush.msra.mxu0 0.0
    %342 = vmatpush.msra.mxu0 0.0
    %343 = vmatpush.msra.mxu0 0.0
    %344 = vmatpush.msra.mxu0 0.0
    %345 = vmatpush.msra.mxu0 %v278
    %346 = vmatpush.msra.mxu0 %v224
    %347 = vmatpush.msra.mxu0 %v203
    %348 = vmatpush.msra.mxu0 %v182
    %349 = vmatpush.msra.mxu0 %v161
    %350 = vmatpush.msra.mxu0 %v140
    %351 = vmatpush.msra.mxu0 %v119
    %352 = vmatpush.msra.mxu0 %v98
    %353 = vmatpush.msra.mxu0 %v77
    %354 = vmatpush.msra.mxu0 %v56
    %355 = vmatpush.msra.mxu0 %v35
    %356 = vmatmul.f32.gmra.mxu0 %v274
    %v357 = vpop.f32.mrf.mxu0
    %v358 = vadd.f32 %v270, %v357
    %359 = vdwg.mxu0
    %360 = vmatpush.msra.mxu0 0.0
    %361 = vmatpush.msra.mxu0 0.0
    %362 = vmatpush.msra.mxu0 0.0
    %363 = vmatpush.msra.mxu0 0.0
    %364 = vmatpush.msra.mxu0 0.0
    %365 = vmatpush.msra.mxu0 %v281
    %366 = vmatpush.msra.mxu0 %v225
    %367 = vmatpush.msra.mxu0 %v204
    %368 = vmatpush.msra.mxu0 %v183
    %369 = vmatpush.msra.mxu0 %v162
    %370 = vmatpush.msra.mxu0 %v141
    %371 = vmatpush.msra.mxu0 %v120
    %372 = vmatpush.msra.mxu0 %v99
    %373 = vmatpush.msra.mxu0 %v78
    %374 = vmatpush.msra.mxu0 %v57
    %375 = vmatpush.msra.mxu0 %v36
    %376 = vmatmul.f32.gmra.mxu0 %v274
    %v377 = vpop.f32.mrf.mxu0
    %v378 = vadd.f32 %v270, %v377
    %379 = vdwg.mxu0
    %380 = vmatpush.msra.mxu0 0.0
    %381 = vmatpush.msra.mxu0 0.0
    %382 = vmatpush.msra.mxu0 0.0
    %383 = vmatpush.msra.mxu0 0.0
    %384 = vmatpush.msra.mxu0 0.0
    %385 = vmatpush.msra.mxu0 %v284
    %386 = vmatpush.msra.mxu0 %v226
    %387 = vmatpush.msra.mxu0 %v205
    %388 = vmatpush.msra.mxu0 %v184
    %389 = vmatpush.msra.mxu0 %v163
    %390 = vmatpush.msra.mxu0 %v142
    %391 = vmatpush.msra.mxu0 %v121
    %392 = vmatpush.msra.mxu0 %v100
    %393 = vmatpush.msra.mxu0 %v79
    %394 = vmatpush.msra.mxu0 %v58
    %395 = vmatpush.msra.mxu0 %v37
    %396 = vmatmul.f32.gmra.mxu0 %v274
    %v397 = vpop.f32.mrf.mxu0
    %v398 = vadd.f32 %v270, %v397
    %399 = vdwg.mxu0
    %400 = vmatpush.msra.mxu0 0.0
    %401 = vmatpush.msra.mxu0 0.0
    %402 = vmatpush.msra.mxu0 0.0
    %403 = vmatpush.msra.mxu0 0.0
    %404 = vmatpush.msra.mxu0 0.0
    %405 = vmatpush.msra.mxu0 %v287
    %406 = vmatpush.msra.mxu0 %v227
    %407 = vmatpush.msra.mxu0 %v206
    %408 = vmatpush.msra.mxu0 %v185
    %409 = vmatpush.msra.mxu0 %v164
    %410 = vmatpush.msra.mxu0 %v143
    %411 = vmatpush.msra.mxu0 %v122
    %412 = vmatpush.msra.mxu0 %v101
    %413 = vmatpush.msra.mxu0 %v80
    %414 = vmatpush.msra.mxu0 %v59
    %415 = vmatpush.msra.mxu0 %v38
    %416 = vmatmul.f32.gmra.mxu0 %v274
    %v417 = vpop.f32.mrf.mxu0
    %v418 = vadd.f32 %v270, %v417
    %419 = vdwg.mxu0
    %420 = vmatpush.msra.mxu0 0.0
    %421 = vmatpush.msra.mxu0 0.0
    %422 = vmatpush.msra.mxu0 0.0
    %423 = vmatpush.msra.mxu0 0.0
    %424 = vmatpush.msra.mxu0 0.0
    %425 = vmatpush.msra.mxu0 %v290
    %426 = vmatpush.msra.mxu0 %v228
    %427 = vmatpush.msra.mxu0 %v207
    %428 = vmatpush.msra.mxu0 %v186
    %429 = vmatpush.msra.mxu0 %v165
    %430 = vmatpush.msra.mxu0 %v144
    %431 = vmatpush.msra.mxu0 %v123
    %432 = vmatpush.msra.mxu0 %v102
    %433 = vmatpush.msra.mxu0 %v81
    %434 = vmatpush.msra.mxu0 %v60
    %435 = vmatpush.msra.mxu0 %v39
    %436 = vmatmul.f32.gmra.mxu0 %v274
    %v437 = vpop.f32.mrf.mxu0
    %v438 = vadd.f32 %v270, %v437
    %439 = vdwg.mxu0
    %440 = vmatpush.msra.mxu0 0.0
    %441 = vmatpush.msra.mxu0 0.0
    %442 = vmatpush.msra.mxu0 0.0
    %443 = vmatpush.msra.mxu0 0.0
    %444 = vmatpush.msra.mxu0 0.0
    %445 = vmatpush.msra.mxu0 %v293
    %446 = vmatpush.msra.mxu0 %v229
    %447 = vmatpush.msra.mxu0 %v208
    %448 = vmatpush.msra.mxu0 %v187
    %449 = vmatpush.msra.mxu0 %v166
    %450 = vmatpush.msra.mxu0 %v145
    %451 = vmatpush.msra.mxu0 %v124
    %452 = vmatpush.msra.mxu0 %v103
    %453 = vmatpush.msra.mxu0 %v82
    %454 = vmatpush.msra.mxu0 %v61
    %455 = vmatpush.msra.mxu0 %v40
    %456 = vmatmul.f32.gmra.mxu0 %v274
    %v457 = vpop.f32.mrf.mxu0
    %v458 = vadd.f32 %v270, %v457
    %459 = vdwg.mxu0
    %460 = vmatpush.msra.mxu0 0.0
    %461 = vmatpush.msra.mxu0 0.0
    %462 = vmatpush.msra.mxu0 0.0
    %463 = vmatpush.msra.mxu0 0.0
    %464 = vmatpush.msra.mxu0 0.0
    %465 = vmatpush.msra.mxu0 %v296
    %466 = vmatpush.msra.mxu0 %v230
    %467 = vmatpush.msra.mxu0 %v209
    %468 = vmatpush.msra.mxu0 %v188
    %469 = vmatpush.msra.mxu0 %v167
    %470 = vmatpush.msra.mxu0 %v146
    %471 = vmatpush.msra.mxu0 %v125
    %472 = vmatpush.msra.mxu0 %v104
    %473 = vmatpush.msra.mxu0 %v83
    %474 = vmatpush.msra.mxu0 %v62
    %475 = vmatpush.msra.mxu0 %v41
    %476 = vmatmul.f32.gmra.mxu0 %v274
    %v477 = vpop.f32.mrf.mxu0
    %v478 = vadd.f32 %v270, %v477
    %479 = vdwg.mxu0
    %480 = vmatpush.msra.mxu0 0.0
    %481 = vmatpush.msra.mxu0 0.0
    %482 = vmatpush.msra.mxu0 0.0
    %483 = vmatpush.msra.mxu0 0.0
    %484 = vmatpush.msra.mxu0 0.0
    %485 = vmatpush.msra.mxu0 %v299
    %486 = vmatpush.msra.mxu0 %v231
    %487 = vmatpush.msra.mxu0 %v210
    %488 = vmatpush.msra.mxu0 %v189
    %489 = vmatpush.msra.mxu0 %v168
    %490 = vmatpush.msra.mxu0 %v147
    %491 = vmatpush.msra.mxu0 %v126
    %492 = vmatpush.msra.mxu0 %v105
    %493 = vmatpush.msra.mxu0 %v84
    %494 = vmatpush.msra.mxu0 %v63
    %495 = vmatpush.msra.mxu0 %v42
    %496 = vmatmul.f32.gmra.mxu0 %v274
    %v497 = vpop.f32.mrf.mxu0
    %v498 = vadd.f32 %v270, %v497
    %499 = vdwg.mxu0
    %500 = vmatpush.msra.mxu0 0.0
    %501 = vmatpush.msra.mxu0 0.0
    %502 = vmatpush.msra.mxu0 0.0
    %503 = vmatpush.msra.mxu0 0.0
    %504 = vmatpush.msra.mxu0 0.0
    %505 = vmatpush.msra.mxu0 %v302
    %506 = vmatpush.msra.mxu0 %v232
    %507 = vmatpush.msra.mxu0 %v211
    %508 = vmatpush.msra.mxu0 %v190
    %509 = vmatpush.msra.mxu0 %v169
    %510 = vmatpush.msra.mxu0 %v148
    %511 = vmatpush.msra.mxu0 %v127
    %512 = vmatpush.msra.mxu0 %v106
    %513 = vmatpush.msra.mxu0 %v85
    %514 = vmatpush.msra.mxu0 %v64
    %515 = vmatpush.msra.mxu0 %v43
    %516 = vmatmul.f32.gmra.mxu0 %v274
    %v517 = vpop.f32.mrf.mxu0
    %v518 = vadd.f32 %v270, %v517
    %519 = vdwg.mxu0
    %520 = vmatpush.msra.mxu0 0.0
    %521 = vmatpush.msra.mxu0 0.0
    %522 = vmatpush.msra.mxu0 0.0
    %523 = vmatpush.msra.mxu0 0.0
    %524 = vmatpush.msra.mxu0 0.0
    %525 = vmatpush.msra.mxu0 %v305
    %526 = vmatpush.msra.mxu0 %v233
    %527 = vmatpush.msra.mxu0 %v212
    %528 = vmatpush.msra.mxu0 %v191
    %529 = vmatpush.msra.mxu0 %v170
    %530 = vmatpush.msra.mxu0 %v149
    %531 = vmatpush.msra.mxu0 %v128
    %532 = vmatpush.msra.mxu0 %v107
    %533 = vmatpush.msra.mxu0 %v86
    %534 = vmatpush.msra.mxu0 %v65
    %535 = vmatpush.msra.mxu0 %v44
    %536 = vmatmul.f32.gmra.mxu0 %v274
    %v537 = vpop.f32.mrf.mxu0
    %v538 = vadd.f32 %v270, %v537
    %539 = vdwg.mxu0
    %540 = vmatpush.msra.mxu0 0.0
    %541 = vmatpush.msra.mxu0 0.0
    %542 = vmatpush.msra.mxu0 0.0
    %543 = vmatpush.msra.mxu0 0.0
    %544 = vmatpush.msra.mxu0 0.0
    %545 = vmatpush.msra.mxu0 %v308
    %546 = vmatpush.msra.mxu0 %v234
    %547 = vmatpush.msra.mxu0 %v213
    %548 = vmatpush.msra.mxu0 %v192
    %549 = vmatpush.msra.mxu0 %v171
    %550 = vmatpush.msra.mxu0 %v150
    %551 = vmatpush.msra.mxu0 %v129
    %552 = vmatpush.msra.mxu0 %v108
    %553 = vmatpush.msra.mxu0 %v87
    %554 = vmatpush.msra.mxu0 %v66
    %555 = vmatpush.msra.mxu0 %v45
    %556 = vmatmul.f32.gmra.mxu0 %v274
    %v557 = vpop.f32.mrf.mxu0
    %v558 = vadd.f32 %v270, %v557
    %559 = vdwg.mxu0
    %560 = vmatpush.msra.mxu0 0.0
    %561 = vmatpush.msra.mxu0 0.0
    %562 = vmatpush.msra.mxu0 0.0
    %563 = vmatpush.msra.mxu0 0.0
    %564 = vmatpush.msra.mxu0 0.0
    %565 = vmatpush.msra.mxu0 %v311
    %566 = vmatpush.msra.mxu0 %v235
    %567 = vmatpush.msra.mxu0 %v214
    %568 = vmatpush.msra.mxu0 %v193
    %569 = vmatpush.msra.mxu0 %v172
    %570 = vmatpush.msra.mxu0 %v151
    %571 = vmatpush.msra.mxu0 %v130
    %572 = vmatpush.msra.mxu0 %v109
    %573 = vmatpush.msra.mxu0 %v88
    %574 = vmatpush.msra.mxu0 %v67
    %575 = vmatpush.msra.mxu0 %v46
    %576 = vmatmul.f32.gmra.mxu0 %v274
    %v577 = vpop.f32.mrf.mxu0
    %v578 = vadd.f32 %v270, %v577
    %579 = vdwg.mxu0
    %580 = vmatpush.msra.mxu0 0.0
    %581 = vmatpush.msra.mxu0 0.0
    %582 = vmatpush.msra.mxu0 0.0
    %583 = vmatpush.msra.mxu0 0.0
    %584 = vmatpush.msra.mxu0 0.0
    %585 = vmatpush.msra.mxu0 %v314
    %586 = vmatpush.msra.mxu0 %v236
    %587 = vmatpush.msra.mxu0 %v215
    %588 = vmatpush.msra.mxu0 %v194
    %589 = vmatpush.msra.mxu0 %v173
    %590 = vmatpush.msra.mxu0 %v152
    %591 = vmatpush.msra.mxu0 %v131
    %592 = vmatpush.msra.mxu0 %v110
    %593 = vmatpush.msra.mxu0 %v89
    %594 = vmatpush.msra.mxu0 %v68
    %595 = vmatpush.msra.mxu0 %v47
    %596 = vmatmul.f32.gmra.mxu0 %v274
    %v597 = vpop.f32.mrf.mxu0
    %v598 = vadd.f32 %v270, %v597
    %599 = vdwg.mxu0
    %600 = vmatpush.msra.mxu0 0.0
    %601 = vmatpush.msra.mxu0 0.0
    %602 = vmatpush.msra.mxu0 0.0
    %603 = vmatpush.msra.mxu0 0.0
    %604 = vmatpush.msra.mxu0 0.0
    %605 = vmatpush.msra.mxu0 %v317
    %606 = vmatpush.msra.mxu0 %v237
    %607 = vmatpush.msra.mxu0 %v216
    %608 = vmatpush.msra.mxu0 %v195
    %609 = vmatpush.msra.mxu0 %v174
    %610 = vmatpush.msra.mxu0 %v153
    %611 = vmatpush.msra.mxu0 %v132
    %612 = vmatpush.msra.mxu0 %v111
    %613 = vmatpush.msra.mxu0 %v90
    %614 = vmatpush.msra.mxu0 %v69
    %615 = vmatpush.msra.mxu0 %v48
    %616 = vmatmul.f32.gmra.mxu0 %v274
    %v617 = vpop.f32.mrf.mxu0
    %v618 = vadd.f32 %v270, %v617
    %619 = vdwg.mxu0
    %620 = vmatpush.msra.mxu0 0.0
    %621 = vmatpush.msra.mxu0 0.0
    %622 = vmatpush.msra.mxu0 0.0
    %623 = vmatpush.msra.mxu0 0.0
    %624 = vmatpush.msra.mxu0 0.0
    %625 = vmatpush.msra.mxu0 %v320
    %626 = vmatpush.msra.mxu0 %v238
    %627 = vmatpush.msra.mxu0 %v217
    %628 = vmatpush.msra.mxu0 %v196
    %629 = vmatpush.msra.mxu0 %v175
    %630 = vmatpush.msra.mxu0 %v154
    %631 = vmatpush.msra.mxu0 %v133
    %632 = vmatpush.msra.mxu0 %v112
    %633 = vmatpush.msra.mxu0 %v91
    %634 = vmatpush.msra.mxu0 %v70
    %635 = vmatpush.msra.mxu0 %v49
    %636 = vmatmul.f32.gmra.mxu0 %v274
    %v637 = vpop.f32.mrf.mxu0
    %v638 = vadd.f32 %v270, %v637
    %639 = vdwg.mxu0
    %640 = vmatpush.msra.mxu0 0.0
    %641 = vmatpush.msra.mxu0 0.0
    %642 = vmatpush.msra.mxu0 0.0
    %643 = vmatpush.msra.mxu0 0.0
    %644 = vmatpush.msra.mxu0 0.0
    %645 = vmatpush.msra.mxu0 %v323
    %646 = vmatpush.msra.mxu0 %v239
    %647 = vmatpush.msra.mxu0 %v218
    %648 = vmatpush.msra.mxu0 %v197
    %649 = vmatpush.msra.mxu0 %v176
    %650 = vmatpush.msra.mxu0 %v155
    %651 = vmatpush.msra.mxu0 %v134
    %652 = vmatpush.msra.mxu0 %v113
    %653 = vmatpush.msra.mxu0 %v92
    %654 = vmatpush.msra.mxu0 %v71
    %655 = vmatpush.msra.mxu0 %v50
    %656 = vmatmul.f32.gmra.mxu0 %v274
    %v657 = vpop.f32.mrf.mxu0
    %v658 = vadd.f32 %v270, %v657
    %659 = vdwg.mxu0
    %660 = vmatpush.msra.mxu0 0.0
    %661 = vmatpush.msra.mxu0 0.0
    %662 = vmatpush.msra.mxu0 0.0
    %663 = vmatpush.msra.mxu0 0.0
    %664 = vmatpush.msra.mxu0 0.0
    %665 = vmatpush.msra.mxu0 %v326
    %666 = vmatpush.msra.mxu0 %v240
    %667 = vmatpush.msra.mxu0 %v219
    %668 = vmatpush.msra.mxu0 %v198
    %669 = vmatpush.msra.mxu0 %v177
    %670 = vmatpush.msra.mxu0 %v156
    %671 = vmatpush.msra.mxu0 %v135
    %672 = vmatpush.msra.mxu0 %v114
    %673 = vmatpush.msra.mxu0 %v93
    %674 = vmatpush.msra.mxu0 %v72
    %675 = vmatpush.msra.mxu0 %v51
    %676 = vmatmul.f32.gmra.mxu0 %v274
    %v677 = vpop.f32.mrf.mxu0
    %v678 = vadd.f32 %v270, %v677
    %679 = vdwg.mxu0
    %680 = vmatpush.msra.mxu0 0.0
    %681 = vmatpush.msra.mxu0 0.0
    %682 = vmatpush.msra.mxu0 0.0
    %683 = vmatpush.msra.mxu0 0.0
    %684 = vmatpush.msra.mxu0 0.0
    %685 = vmatpush.msra.mxu0 %v329
    %686 = vmatpush.msra.mxu0 %v241
    %687 = vmatpush.msra.mxu0 %v220
    %688 = vmatpush.msra.mxu0 %v199
    %689 = vmatpush.msra.mxu0 %v178
    %690 = vmatpush.msra.mxu0 %v157
    %691 = vmatpush.msra.mxu0 %v136
    %692 = vmatpush.msra.mxu0 %v115
    %693 = vmatpush.msra.mxu0 %v94
    %694 = vmatpush.msra.mxu0 %v73
    %695 = vmatpush.msra.mxu0 %v52
    %696 = vmatmul.f32.gmra.mxu0 %v274
    %v697 = vpop.f32.mrf.mxu0
    %v698 = vadd.f32 %v270, %v697
    %699 = vdwg.mxu0
    %700 = vmatpush.msra.mxu0 0.0
    %701 = vmatpush.msra.mxu0 0.0
    %702 = vmatpush.msra.mxu0 0.0
    %703 = vmatpush.msra.mxu0 0.0
    %704 = vmatpush.msra.mxu0 0.0
    %705 = vmatpush.msra.mxu0 %v332
    %706 = vmatpush.msra.mxu0 %v242
    %707 = vmatpush.msra.mxu0 %v221
    %708 = vmatpush.msra.mxu0 %v200
    %709 = vmatpush.msra.mxu0 %v179
    %710 = vmatpush.msra.mxu0 %v158
    %711 = vmatpush.msra.mxu0 %v137
    %712 = vmatpush.msra.mxu0 %v116
    %713 = vmatpush.msra.mxu0 %v95
    %714 = vmatpush.msra.mxu0 %v74
    %715 = vmatpush.msra.mxu0 %v53
    %716 = vmatmul.f32.gmra.mxu0 %v274
    %v717 = vpop.f32.mrf.mxu0
    %v718 = vadd.f32 %v270, %v717
    %719 = vdwg.mxu0
    %720 = vmatpush.msra.mxu0 0.0
    %721 = vmatpush.msra.mxu0 0.0
    %722 = vmatpush.msra.mxu0 0.0
    %723 = vmatpush.msra.mxu0 0.0
    %724 = vmatpush.msra.mxu0 0.0
    %725 = vmatpush.msra.mxu0 %v335
    %726 = vmatpush.msra.mxu0 %v243
    %727 = vmatpush.msra.mxu0 %v222
    %728 = vmatpush.msra.mxu0 %v201
    %729 = vmatpush.msra.mxu0 %v180
    %730 = vmatpush.msra.mxu0 %v159
    %731 = vmatpush.msra.mxu0 %v138
    %732 = vmatpush.msra.mxu0 %v117
    %733 = vmatpush.msra.mxu0 %v96
    %734 = vmatpush.msra.mxu0 %v75
    %735 = vmatpush.msra.mxu0 %v54
    %736 = vmatmul.f32.gmra.mxu0 %v274
    %v737 = vpop.f32.mrf.mxu0
    %v738 = vadd.f32 %v270, %v737
    %739 = vdwg.mxu0
    %740 = vmatpush.msra.mxu0 0.0
    %741 = vmatpush.msra.mxu0 0.0
    %742 = vmatpush.msra.mxu0 0.0
    %743 = vmatpush.msra.mxu0 0.0
    %744 = vmatpush.msra.mxu0 0.0
    %745 = vmatpush.msra.mxu0 %v338
    %746 = vmatpush.msra.mxu0 %v244
    %747 = vmatpush.msra.mxu0 %v223
    %748 = vmatpush.msra.mxu0 %v202
    %749 = vmatpush.msra.mxu0 %v181
    %750 = vmatpush.msra.mxu0 %v160
    %751 = vmatpush.msra.mxu0 %v139
    %752 = vmatpush.msra.mxu0 %v118
    %753 = vmatpush.msra.mxu0 %v97
    %754 = vmatpush.msra.mxu0 %v76
    %755 = vmatpush.msra.mxu0 %v55
    %756 = vmatmul.f32.gmra.mxu0 %v274
    %v757 = vpop.f32.mrf.mxu0
    %v758 = vadd.f32 %v270, %v757
    %759 = vdwg.mxu0
    %v760 = vmax.f32 %v358, 0.0
    %v761 = vmax.f32 %v378, 0.0
    %v762 = vmax.f32 %v398, 0.0
    %v763 = vmax.f32 %v418, 0.0
    %v764 = vmax.f32 %v438, 0.0
    %v765 = vmax.f32 %v458, 0.0
    %v766 = vmax.f32 %v478, 0.0
    %v767 = vmax.f32 %v498, 0.0
    %v768 = vmax.f32 %v518, 0.0
    %v769 = vmax.f32 %v538, 0.0
    %v770 = vmax.f32 %v558, 0.0
    %v771 = vmax.f32 %v578, 0.0
    %v772 = vmax.f32 %v598, 0.0
    %v773 = vmax.f32 %v618, 0.0
    %v774 = vmax.f32 %v638, 0.0
    %v775 = vmax.f32 %v658, 0.0
    %v776 = vmax.f32 %v678, 0.0
    %v777 = vmax.f32 %v698, 0.0
    %v778 = vmax.f32 %v718, 0.0
    %v779 = vmax.f32 %v738, 0.0
    %v780 = vmax.f32 %v758, 0.0
    %v781 = vld [vmem:[%s3] sm:$0xff]
    %783 = vset.pattern.permute.xlu0 0
    %784 = vperm.xlu0 %783, %v781
    %v785 = vpop.permute.xlu0 %784
    %v787 = vmul.f32 %v760, %v785
    %v788 = vmul.f32 %v761, %v785
    %v789 = vmul.f32 %v762, %v785
    %v790 = vmul.f32 %v763, %v785
    %v791 = vmul.f32 %v764, %v785
    %v792 = vmul.f32 %v765, %v785
    %v793 = vmul.f32 %v766, %v785
    %v794 = vmul.f32 %v767, %v785
    %v795 = vmul.f32 %v768, %v785
    %v796 = vmul.f32 %v769, %v785
    %v797 = vmul.f32 %v770, %v785
    %v798 = vmul.f32 %v771, %v785
    %v799 = vmul.f32 %v772, %v785
    %v800 = vmul.f32 %v773, %v785
    %v801 = vmul.f32 %v774, %v785
    %v802 = vmul.f32 %v775, %v785
    %v803 = vmul.f32 %v776, %v785
    %v804 = vmul.f32 %v777, %v785
    %v805 = vmul.f32 %v778, %v785
    %v806 = vmul.f32 %v779, %v785
    %v807 = vmul.f32 %v780, %v785
    %v808 = vld [vmem:[%s4] sm:$0xff]
    %810 = vset.pattern.permute.xlu0 0
    %811 = vperm.xlu0 %810, %v808
    %v812 = vpop.permute.xlu0 %811
    %v814 = vadd.f32 %v787, %v812
    %v815 = vadd.f32 %v788, %v812
    %v816 = vadd.f32 %v789, %v812
    %v817 = vadd.f32 %v790, %v812
    %v818 = vadd.f32 %v791, %v812
    %v819 = vadd.f32 %v792, %v812
    %v820 = vadd.f32 %v793, %v812
    %v821 = vadd.f32 %v794, %v812
    %v822 = vadd.f32 %v795, %v812
    %v823 = vadd.f32 %v796, %v812
    %v824 = vadd.f32 %v797, %v812
    %v825 = vadd.f32 %v798, %v812
    %v826 = vadd.f32 %v799, %v812
    %v827 = vadd.f32 %v800, %v812
    %v828 = vadd.f32 %v801, %v812
    %v829 = vadd.f32 %v802, %v812
    %v830 = vadd.f32 %v803, %v812
    %v831 = vadd.f32 %v804, %v812
    %v832 = vadd.f32 %v805, %v812
    %v833 = vadd.f32 %v806, %v812
    %v834 = vadd.f32 %v807, %v812
    %835 = vst [vmem:[%s5] sm:$0xff] %v814
    %836 = vst [vmem:[%s5 + $0x8] sm:$0xff] %v815
    %837 = vst [vmem:[%s5 + $0x10] sm:$0xff] %v816
    %838 = vst [vmem:[%s5 + $0x18] sm:$0xff] %v817
    %839 = vst [vmem:[%s5 + $0x20] sm:$0xff] %v818
    %840 = vst [vmem:[%s5 + $0x28] sm:$0xff] %v819
    %841 = vst [vmem:[%s5 + $0x30] sm:$0xff] %v820
    %842 = vst [vmem:[%s5 + $0x38] sm:$0xff] %v821
    %843 = vst [vmem:[%s5 + $0x40] sm:$0xff] %v822
    %844 = vst [vmem:[%s5 + $0x48] sm:$0xff] %v823
    %845 = vst [vmem:[%s5 + $0x50] sm:$0xff] %v824
    %846 = vst [vmem:[%s5 + $0x58] sm:$0xff] %v825
    %847 = vst [vmem:[%s5 + $0x60] sm:$0xff] %v826
    %848 = vst [vmem:[%s5 + $0x68] sm:$0xff] %v827
    %849 = vst [vmem:[%s5 + $0x70] sm:$0xff] %v828
    %850 = vst [vmem:[%s5 + $0x78] sm:$0xff] %v829
    %851 = vst [vmem:[%s5 + $0x80] sm:$0xff] %v830
    %852 = vst [vmem:[%s5 + $0x88] sm:$0xff] %v831
    %853 = vst [vmem:[%s5 + $0x90] sm:$0xff] %v832
    %854 = vst [vmem:[%s5 + $0x98] sm:$0xff] %v833
    %855 = vst [vmem:[%s5 + $0xa0] sm:$0xff] %v834
    // Predicated region
    $region26: #{capsule_net_forward.3} parent=1 // pred_check
      _
    $region27: #{capsule_net_forward.3} parent=1 // pred_check_branch
      %857 = sbr.rel (0) target = $region29
    $region28: #{capsule_net_forward.3} parent=1 // pred_region
      _
    $region29: #{capsule_net_forward.3} parent=1 // pred_fallthru
      _
    // Predicated region
    $region30: #{capsule_net_forward.3} parent=1 // pred_check
      _
    $region31: #{capsule_net_forward.3} parent=1 // pred_check_branch
      %859 = sbr.rel (0) target = $region33
    $region32: #{capsule_net_forward.3} parent=1 // pred_region
      _
    $region33: #{capsule_net_forward.3} parent=1 // pred_fallthru
      _
    %860 = vsyncpa [#allocation3], 1

// kernel: capsule_net_forward.4
$region0: #{capsule_net_forward.4}
  #allocation0 [shape = 'u32[]', space=smem, size = 0x4, offset = 0x4, fixed_abs, tag = 'smem constant byte address 0x4 - core index']
  #allocation1 [shape = 'u32[72,128]{1,0:T(1,128)}', space=vmem, size = 0x9000, scoped, tag = 'internal scratch']
  %s0 = inlined_call_operand.vmem [shape: f32[32,648], index: 0, kind: input, shape index: {}]
  %s1 = inlined_call_operand.vmem [shape: f32[2,648,200], index: 1, kind: input, shape index: {}]
  %s2 = inlined_call_operand.vmem [shape: f32[32,1], index: 2, kind: input, shape index: {}]
  %s3 = inlined_call_operand.vmem [shape: f32[2,8,800], index: 3, kind: output, shape index: {}]
  %s4 = sld [smem:[#allocation0]]
  $region45: #{capsule_net_forward.4} parent=0
    _
  %s6 = ssub.s32 1, %s4
  %s7 = scalar_select 0, %s6, %s4
  loop: start=0, step=1, limit=4
  $region2: #{capsule_net_forward.4} parent=0 // loop_pre_header
    _
  $region3: #{capsule_net_forward.4} parent=0 // loop_header
    %s9 = sphi 0, %s13
    %p10 = scmp.ge.s32.totalorder %s9, 4
    %s17 = sphi 0, %s17
    %s19 = sphi 0, %s17
    %s20 = sphi 0, %s19
    %s34 = sphi 0, %s20
    %s40 = sphi 0, %s42
    %s43 = sphi 0, %s40
    %s44 = sphi 0, %s43
    %s60 = sphi 0, %s44
    %s64 = sphi 0, %s64
    %s66 = sphi 0, %s64
    %s67 = sphi 0, %s66
    %s81 = sphi 0, %s67
    %s87 = sphi 0, %s89
    %s90 = sphi 0, %s87
    %s91 = sphi 0, %s90
    %s107 = sphi 0, %s91
  $region4: #{capsule_net_forward.4} parent=0 // loop_header_branch
    %12 = sbr.rel (%p10) target = $region8
  $region5: #{capsule_net_forward.4} parent=0 // loop_body
    %s14 = ssub.s32 %s9, 1
    %s15 = ssub.s32 %s9, 2
    %s16 = sadd.s32 %s9, 1
    %s18 = sadd.s32 %s17, 1
    %p21 = scmp.eq.s32.totalorder %s9, 1
    %p22 = scmp.ne.s32.totalorder %s17, %s19
    %p23 = scmp.eq.s32.totalorder %s9, 0
    %p24 = por %p22, %p23
    %p25 = scmp.ne.s32.totalorder %s17, %s19
    %p26 = scmp.eq.s32.totalorder %s14, 1
    %p27 = por %p25, %p26
    %p28 = scmp.ne.s32.totalorder %s19, %s20
    %p29 = scmp.eq.s32.totalorder %s14, 0
    %p30 = por %p28, %p29
    %p31 = scmp.ne.s32.totalorder %s19, %s20
    %p32 = scmp.eq.s32.totalorder %s15, 1
    %p33 = por %p31, %p32
    %p35 = scmp.ne.s32.totalorder %s20, %s34
    %p36 = scmp.eq.s32.totalorder %s15, 0
    %p37 = por %p35, %p36
    %s38 = ssub.s32 %s9, %s16
    %p39 = scmp.eq.s32.totalorder %s38, 0
    %s41 = sadd.s32 %s40, 1
    %s42 = scalar_select %p39, %s40, %s41
    %p45 = pneg %p39
    %p46 = scmp.eq.s32.totalorder %s9, 1
    %p47 = por %p45, %p46
    %p48 = scmp.ne.s32.totalorder %s40, %s43
    %p49 = scmp.eq.s32.totalorder %s9, 0
    %p50 = por %p48, %p49
    %p51 = scmp.ne.s32.totalorder %s40, %s43
    %p52 = scmp.eq.s32.totalorder %s14, 1
    %p53 = por %p51, %p52
    %p54 = scmp.ne.s32.totalorder %s43, %s44
    %p55 = scmp.eq.s32.totalorder %s14, 0
    %p56 = por %p54, %p55
    %p57 = scmp.ne.s32.totalorder %s43, %s44
    %p58 = scmp.eq.s32.totalorder %s15, 1
    %p59 = por %p57, %p58
    %p61 = scmp.ne.s32.totalorder %s44, %s60
    %p62 = scmp.eq.s32.totalorder %s15, 0
    %p63 = por %p61, %p62
    %s65 = sadd.s32 %s64, 1
    %p68 = scmp.eq.s32.totalorder %s9, 1
    %p69 = scmp.ne.s32.totalorder %s64, %s66
    %p70 = scmp.eq.s32.totalorder %s9, 0
    %p71 = por %p69, %p70
    %p72 = scmp.ne.s32.totalorder %s64, %s66
    %p73 = scmp.eq.s32.totalorder %s14, 1
    %p74 = por %p72, %p73
    %p75 = scmp.ne.s32.totalorder %s66, %s67
    %p76 = scmp.eq.s32.totalorder %s14, 0
    %p77 = por %p75, %p76
    %p78 = scmp.ne.s32.totalorder %s66, %s67
    %p79 = scmp.eq.s32.totalorder %s15, 1
    %p80 = por %p78, %p79
    %p82 = scmp.ne.s32.totalorder %s67, %s81
    %p83 = scmp.eq.s32.totalorder %s15, 0
    %p84 = por %p82, %p83
    %s85 = ssub.s32 %s9, %s16
    %p86 = scmp.eq.s32.totalorder %s85, 0
    %s88 = sadd.s32 %s87, 1
    %s89 = scalar_select %p86, %s87, %s88
    %p92 = pneg %p86
    %p93 = scmp.eq.s32.totalorder %s9, 1
    %p94 = por %p92, %p93
    %p95 = scmp.ne.s32.totalorder %s87, %s90
    %p96 = scmp.eq.s32.totalorder %s9, 0
    %p97 = por %p95, %p96
    %p98 = scmp.ne.s32.totalorder %s87, %s90
    %p99 = scmp.eq.s32.totalorder %s14, 1
    %p100 = por %p98, %p99
    %p101 = scmp.ne.s32.totalorder %s90, %s91
    %p102 = scmp.eq.s32.totalorder %s14, 0
    %p103 = por %p101, %p102
    %p104 = scmp.ne.s32.totalorder %s90, %s91
    %p105 = scmp.eq.s32.totalorder %s15, 1
    %p106 = por %p104, %p105
    %p108 = scmp.ne.s32.totalorder %s91, %s107
    %p109 = scmp.eq.s32.totalorder %s15, 0
    %p110 = por %p108, %p109
    %p111 = scmp.le.s32.totalorder 1, %s9
    %p112 = scmp.lt.s32.totalorder %s9, 3
    %p113 = pnand %p111, %p112
    %p114 = pneg %p113
    // Predicated region
    $region9: #{capsule_net_forward.4} parent=5 // pred_check
      _
    $region10: #{capsule_net_forward.4} parent=5 // pred_check_branch
      %116 = sbr.rel (%p113) target = $region12
    $region11: #{capsule_net_forward.4} parent=5 // pred_region
      %s117 = ssub.s32 %s9, 1
      // Predicated region
      $region13: #{capsule_net_forward.4} parent=11 // pred_check
        %p118 = pneg %p30
      $region14: #{capsule_net_forward.4} parent=11 // pred_check_branch
        %120 = sbr.rel (%p118) target = $region16
      $region15: #{capsule_net_forward.4} parent=11 // pred_region
        _
      $region16: #{capsule_net_forward.4} parent=11 // pred_fallthru
        _
      // Predicated region
      $region17: #{capsule_net_forward.4} parent=11 // pred_check
        %p121 = pneg %p77
      $region18: #{capsule_net_forward.4} parent=11 // pred_check_branch
        %123 = sbr.rel (%p121) target = $region20
      $region19: #{capsule_net_forward.4} parent=11 // pred_region
        _
      $region20: #{capsule_net_forward.4} parent=11 // pred_fallthru
        _
    $region12: #{capsule_net_forward.4} parent=5 // pred_fallthru
      _
    %p124 = scmp.lt.s32.totalorder %s9, 2
    // Predicated region
    $region21: #{capsule_net_forward.4} parent=5 // pred_check
      %p125 = pneg %p124
    $region22: #{capsule_net_forward.4} parent=5 // pred_check_branch
      %127 = sbr.rel (%p125) target = $region24
    $region23: #{capsule_net_forward.4} parent=5 // pred_region
      // Predicated region
      $region25: #{capsule_net_forward.4} parent=23 // pred_check
        %p128 = pneg %p50
      $region26: #{capsule_net_forward.4} parent=23 // pred_check_branch
        %130 = sbr.rel (%p128) target = $region28
      $region27: #{capsule_net_forward.4} parent=23 // pred_region
        %p131 = scmp.lt.s32.totalorder %s9, 1
        %s132 = scalar_select %p131, %s9, 1
        %s133 = smul.addr %s132, 162
        %s134 = smul.addr %s133, 8
        %s135 = scalar_lea.vmem %s1, %s134
      $region28: #{capsule_net_forward.4} parent=23 // pred_fallthru
        _
    $region24: #{capsule_net_forward.4} parent=5 // pred_fallthru
      _
    %p136 = scmp.le.s32.totalorder 1, %s9
    %p137 = scmp.lt.s32.totalorder %s9, 3
    %p138 = pnand %p136, %p137
    %p139 = pneg %p138
    // Predicated region
    $region29: #{capsule_net_forward.4} parent=5 // pred_check
      _
    $region30: #{capsule_net_forward.4} parent=5 // pred_check_branch
      %141 = sbr.rel (%p138) target = $region32
    $region31: #{capsule_net_forward.4} parent=5 // pred_region
      %s142 = ssub.s32 %s9, 1
      %p143 = pneg %p30
      %p144 = pneg %p27
      %p145 = scmp.lt.s32.totalorder %s14, 1
      %s146 = scalar_select %p145, %s14, 1
      %s147 = smul.addr %s146, 162
      %s148 = smul.addr %s147, 8
      %s149 = scalar_lea.vmem %s1, %s148
      %p150 = pneg %p56
      %p151 = pneg %p53
      %p152 = pneg %p77
      %p153 = pneg %p74
      %p154 = pneg %p103
      %p155 = pneg %p100
      %p156 = scmp.lt.s32.totalorder %s14, 1
      %s157 = scalar_select %p156, %s14, 1
      %s158 = smul.addr %s157, 7
      %s159 = smul.addr %s158, 8
      %s160 = scalar_lea.vmem %s3, %s159
      %p161 = scmp.lt.s32.totalorder %s14, 1
      %s162 = scalar_select %p161, %s14, 1
      %s163 = smul.addr %s162, 162
      %s164 = smul.addr %s163, 8
      %s165 = scalar_lea.vmem %s1, %s164
      %p166 = scmp.lt.s32.totalorder %s14, 1
      %s167 = scalar_select %p166, %s14, 1
      %s168 = smul.addr %s167, 7
      %s169 = smul.addr %s168, 8
      %s170 = scalar_lea.vmem %s3, %s169
      %v171 = vld [vmem:[%s0] sm:$0xff]
      %v172 = vld [vmem:[%s0 + $0x8] sm:$0xff]
      %v173 = vld [vmem:[%s0 + $0x10] sm:$0xff]
      %v174 = vld [vmem:[%s0 + $0x18] sm:$0xff]
      %v175 = vld [vmem:[%s0 + $0x20] sm:$0xff]
      %v176 = vld [vmem:[%s0 + $0x28] sm:$0xff]
      %v177 = vld [vmem:[%s0 + $0x30] sm:$0xff]
      %v178 = vld [vmem:[%s0 + $0x38] sm:$0xff]
      %v179 = vld [vmem:[%s0 + $0x40] sm:$0xff]
      %v180 = vld [vmem:[%s0 + $0x48] sm:$0xff]
      %v181 = vld [vmem:[%s0 + $0x50] sm:$0xff]
      %v182 = vld [vmem:[%s0 + $0x58] sm:$0xff]
      %v183 = vld [vmem:[%s0 + $0x60] sm:$0xff]
      %v184 = vld [vmem:[%s0 + $0x68] sm:$0xff]
      %v185 = vld [vmem:[%s0 + $0x70] sm:$0xff]
      %v186 = vld [vmem:[%s0 + $0x78] sm:$0xff]
      %v187 = vld [vmem:[%s0 + $0x80] sm:$0xff]
      %v188 = vld [vmem:[%s0 + $0x88] sm:$0xff]
      %v189 = vld [vmem:[%s0 + $0x90] sm:$0xff]
      %v190 = vld [vmem:[%s0 + $0x98] sm:$0xff]
      %v191 = vld [vmem:[%s0 + $0xa0] sm:$0xff]
      %v192 = vld [vmem:[%s0 + $0xa8] sm:$0xff]
      %v193 = vld [vmem:[%s0 + $0xb0] sm:$0xff]
      %v194 = vld [vmem:[%s0 + $0xb8] sm:$0xff]
      %v195 = vld [vmem:[%s165] sm:$0xff]
      %v196 = vld [vmem:[%s165 + $0x8] sm:$0xff]
      %v197 = vld [vmem:[%s165 + $0x10] sm:$0xff]
      %v198 = vld [vmem:[%s165 + $0x18] sm:$0xff]
      %v199 = vld [vmem:[%s165 + $0x20] sm:$0xff]
      %v200 = vld [vmem:[%s165 + $0x28] sm:$0xff]
      %v201 = vld [vmem:[%s165 + $0x30] sm:$0xff]
      %v202 = vld [vmem:[%s165 + $0x38] sm:$0xff]
      %v203 = vld [vmem:[%s165 + $0x40] sm:$0xff]
      %v204 = vld [vmem:[%s165 + $0x48] sm:$0xff]
      %v205 = vld [vmem:[%s165 + $0x50] sm:$0xff]
      %v206 = vld [vmem:[%s165 + $0x58] sm:$0xff]
      %v207 = vld [vmem:[%s165 + $0x60] sm:$0xff]
      %v208 = vld [vmem:[%s165 + $0x68] sm:$0xff]
      %v209 = vld [vmem:[%s165 + $0x70] sm:$0xff]
      %v210 = vld [vmem:[%s165 + $0x78] sm:$0xff]
      %v211 = vld [vmem:[%s165 + $0x80] sm:$0xff]
      %v212 = vld [vmem:[%s165 + $0x88] sm:$0xff]
      %v213 = vld [vmem:[%s165 + $0x90] sm:$0xff]
      %v214 = vld [vmem:[%s165 + $0x98] sm:$0xff]
      %v215 = vld [vmem:[%s165 + $0xa0] sm:$0xff]
      %v216 = vld [vmem:[%s165 + $0xa8] sm:$0xff]
      %v217 = vld [vmem:[%s165 + $0xb0] sm:$0xff]
      %v218 = vld [vmem:[%s165 + $0xb8] sm:$0xff]
      %v219 = vld [vmem:[%s165 + $0xc0] sm:$0xff]
      %v220 = vld [vmem:[%s165 + $0xc8] sm:$0xff]
      %v221 = vld [vmem:[%s165 + $0xd0] sm:$0xff]
      %v222 = vld [vmem:[%s165 + $0xd8] sm:$0xff]
      %v223 = vld [vmem:[%s165 + $0xe0] sm:$0xff]
      %v224 = vld [vmem:[%s165 + $0xe8] sm:$0xff]
      %v225 = vld [vmem:[%s165 + $0xf0] sm:$0xff]
      %v226 = vld [vmem:[%s165 + $0xf8] sm:$0xff]
      %v227 = vld [vmem:[%s165 + $0x100] sm:$0xff]
      %v228 = vld [vmem:[%s165 + $0x108] sm:$0xff]
      %v229 = vld [vmem:[%s165 + $0x110] sm:$0xff]
      %v230 = vld [vmem:[%s165 + $0x118] sm:$0xff]
      %v231 = vld [vmem:[%s165 + $0x120] sm:$0xff]
      %v232 = vld [vmem:[%s165 + $0x128] sm:$0xff]
      %v233 = vld [vmem:[%s165 + $0x130] sm:$0xff]
      %v234 = vld [vmem:[%s165 + $0x138] sm:$0xff]
      %v235 = vld [vmem:[%s165 + $0x140] sm:$0xff]
      %v236 = vld [vmem:[%s165 + $0x148] sm:$0xff]
      %v237 = vld [vmem:[%s165 + $0x150] sm:$0xff]
      %v238 = vld [vmem:[%s165 + $0x158] sm:$0xff]
      %v239 = vld [vmem:[%s165 + $0x160] sm:$0xff]
      %v240 = vld [vmem:[%s165 + $0x168] sm:$0xff]
      %v241 = vld [vmem:[%s165 + $0x170] sm:$0xff]
      %v242 = vld [vmem:[%s165 + $0x178] sm:$0xff]
      %v243 = vld [vmem:[%s165 + $0x180] sm:$0xff]
      %v244 = vld [vmem:[%s165 + $0x188] sm:$0xff]
      %v245 = vld [vmem:[%s165 + $0x190] sm:$0xff]
      %v246 = vld [vmem:[%s165 + $0x198] sm:$0xff]
      %v247 = vld [vmem:[%s165 + $0x1a0] sm:$0xff]
      %v248 = vld [vmem:[%s165 + $0x1a8] sm:$0xff]
      %v249 = vld [vmem:[%s165 + $0x1b0] sm:$0xff]
      %v250 = vld [vmem:[%s165 + $0x1b8] sm:$0xff]
      %v251 = vld [vmem:[%s165 + $0x1c0] sm:$0xff]
      %v252 = vld [vmem:[%s165 + $0x1c8] sm:$0xff]
      %v253 = vld [vmem:[%s165 + $0x1d0] sm:$0xff]
      %v254 = vld [vmem:[%s165 + $0x1d8] sm:$0xff]
      %v255 = vld [vmem:[%s165 + $0x1e0] sm:$0xff]
      %v256 = vld [vmem:[%s165 + $0x1e8] sm:$0xff]
      %v257 = vld [vmem:[%s165 + $0x1f0] sm:$0xff]
      %v258 = vld [vmem:[%s165 + $0x1f8] sm:$0xff]
      %v259 = vld [vmem:[%s165 + $0x200] sm:$0xff]
      %v260 = vld [vmem:[%s165 + $0x208] sm:$0xff]
      %v261 = vld [vmem:[%s165 + $0x210] sm:$0xff]
      %v262 = vld [vmem:[%s165 + $0x218] sm:$0xff]
      %v263 = vld [vmem:[%s165 + $0x220] sm:$0xff]
      %v264 = vld [vmem:[%s165 + $0x228] sm:$0xff]
      %v265 = vld [vmem:[%s165 + $0x230] sm:$0xff]
      %v266 = vld [vmem:[%s165 + $0x238] sm:$0xff]
      %v267 = vld [vmem:[%s165 + $0x240] sm:$0xff]
      %v268 = vld [vmem:[%s165 + $0x248] sm:$0xff]
      %v269 = vld [vmem:[%s165 + $0x250] sm:$0xff]
      %v270 = vld [vmem:[%s165 + $0x258] sm:$0xff]
      %v271 = vld [vmem:[%s165 + $0x260] sm:$0xff]
      %v272 = vld [vmem:[%s165 + $0x268] sm:$0xff]
      %v273 = vld [vmem:[%s165 + $0x270] sm:$0xff]
      %v274 = vld [vmem:[%s165 + $0x278] sm:$0xff]
      %v275 = vld [vmem:[%s165 + $0x280] sm:$0xff]
      %v276 = vld [vmem:[%s165 + $0x288] sm:$0xff]
      %v277 = vld [vmem:[%s165 + $0x290] sm:$0xff]
      %v278 = vld [vmem:[%s165 + $0x298] sm:$0xff]
      %v279 = vld [vmem:[%s165 + $0x2a0] sm:$0xff]
      %v280 = vld [vmem:[%s165 + $0x2a8] sm:$0xff]
      %v281 = vld [vmem:[%s165 + $0x2b0] sm:$0xff]
      %v282 = vld [vmem:[%s165 + $0x2b8] sm:$0xff]
      %v283 = vld [vmem:[%s165 + $0x2c0] sm:$0xff]
      %v284 = vld [vmem:[%s165 + $0x2c8] sm:$0xff]
      %v285 = vld [vmem:[%s165 + $0x2d0] sm:$0xff]
      %v286 = vld [vmem:[%s165 + $0x2d8] sm:$0xff]
      %v287 = vld [vmem:[%s165 + $0x2e0] sm:$0xff]
      %v288 = vld [vmem:[%s165 + $0x2e8] sm:$0xff]
      %v289 = vld [vmem:[%s165 + $0x2f0] sm:$0xff]
      %v290 = vld [vmem:[%s165 + $0x2f8] sm:$0xff]
      %v291 = vld [vmem:[%s165 + $0x300] sm:$0xff]
      %v292 = vld [vmem:[%s165 + $0x308] sm:$0xff]
      %v293 = vld [vmem:[%s165 + $0x310] sm:$0xff]
      %v294 = vld [vmem:[%s165 + $0x318] sm:$0xff]
      %v295 = vld [vmem:[%s165 + $0x320] sm:$0xff]
      %v296 = vld [vmem:[%s165 + $0x328] sm:$0xff]
      %v297 = vld [vmem:[%s165 + $0x330] sm:$0xff]
      %v298 = vld [vmem:[%s165 + $0x338] sm:$0xff]
      %v299 = vld [vmem:[%s165 + $0x340] sm:$0xff]
      %v300 = vld [vmem:[%s165 + $0x348] sm:$0xff]
      %v301 = vld [vmem:[%s165 + $0x350] sm:$0xff]
      %v302 = vld [vmem:[%s165 + $0x358] sm:$0xff]
      %v303 = vld [vmem:[%s165 + $0x360] sm:$0xff]
      %v304 = vld [vmem:[%s165 + $0x368] sm:$0xff]
      %v305 = vld [vmem:[%s165 + $0x370] sm:$0xff]
      %v306 = vld [vmem:[%s165 + $0x378] sm:$0xff]
      %v307 = vld [vmem:[%s165 + $0x380] sm:$0xff]
      %v308 = vld [vmem:[%s165 + $0x388] sm:$0xff]
      %v309 = vld [vmem:[%s165 + $0x390] sm:$0xff]
      %v310 = vld [vmem:[%s165 + $0x398] sm:$0xff]
      %v311 = vld [vmem:[%s165 + $0x3a0] sm:$0xff]
      %v312 = vld [vmem:[%s165 + $0x3a8] sm:$0xff]
      %v313 = vld [vmem:[%s165 + $0x3b0] sm:$0xff]
      %v314 = vld [vmem:[%s165 + $0x3b8] sm:$0xff]
      %v315 = vld [vmem:[%s165 + $0x3c0] sm:$0xff]
      %v316 = vld [vmem:[%s165 + $0x3c8] sm:$0xff]
      %v317 = vld [vmem:[%s165 + $0x3d0] sm:$0xff]
      %v318 = vld [vmem:[%s165 + $0x3d8] sm:$0xff]
      %v319 = vld [vmem:[%s165 + $0x3e0] sm:$0xff]
      %v320 = vld [vmem:[%s165 + $0x3e8] sm:$0xff]
      %v321 = vld [vmem:[%s165 + $0x3f0] sm:$0xff]
      %v322 = vld [vmem:[%s165 + $0x3f8] sm:$0xff]
      %v323 = vld [vmem:[%s165 + $0x400] sm:$0xff]
      %v324 = vld [vmem:[%s165 + $0x408] sm:$0xff]
      %v325 = vld [vmem:[%s165 + $0x410] sm:$0xff]
      %v326 = vld [vmem:[%s165 + $0x418] sm:$0xff]
      %v327 = vld [vmem:[%s165 + $0x420] sm:$0xff]
      %v328 = vld [vmem:[%s165 + $0x428] sm:$0xff]
      %v329 = vld [vmem:[%s165 + $0x430] sm:$0xff]
      %v330 = vld [vmem:[%s165 + $0x438] sm:$0xff]
      %v331 = vld [vmem:[%s165 + $0x440] sm:$0xff]
      %v332 = vld [vmem:[%s165 + $0x448] sm:$0xff]
      %v333 = vld [vmem:[%s165 + $0x450] sm:$0xff]
      %v334 = vld [vmem:[%s165 + $0x458] sm:$0xff]
      %v335 = vld [vmem:[%s165 + $0x460] sm:$0xff]
      %v336 = vld [vmem:[%s165 + $0x468] sm:$0xff]
      %v337 = vld [vmem:[%s165 + $0x470] sm:$0xff]
      %v338 = vld [vmem:[%s165 + $0x478] sm:$0xff]
      %v339 = vld [vmem:[%s165 + $0x480] sm:$0xff]
      %v340 = vld [vmem:[%s165 + $0x488] sm:$0xff]
      %v341 = vld [vmem:[%s165 + $0x490] sm:$0xff]
      %v342 = vld [vmem:[%s165 + $0x498] sm:$0xff]
      %v343 = vld [vmem:[%s165 + $0x4a0] sm:$0xff]
      %v344 = vld [vmem:[%s165 + $0x4a8] sm:$0xff]
      %v345 = vld [vmem:[%s165 + $0x4b0] sm:$0xff]
      %v346 = vld [vmem:[%s165 + $0x4b8] sm:$0xff]
      %v347 = vld [vmem:[%s165 + $0x4c0] sm:$0xff]
      %v348 = vld [vmem:[%s165 + $0x4c8] sm:$0xff]
      %v349 = vld [vmem:[%s165 + $0x4d0] sm:$0xff]
      %v350 = vld [vmem:[%s165 + $0x4d8] sm:$0xff]
      %v351 = vld [vmem:[%s165 + $0x4e0] sm:$0xff]
      %v352 = vld [vmem:[%s165 + $0x4e8] sm:$0xff]
      %v353 = vld [vmem:[%s165 + $0x4f0] sm:$0xff]
      %v354 = vld [vmem:[%s165 + $0x4f8] sm:$0xff]
      %v355 = vld [vmem:[%s165 + $0x500] sm:$0xff]
      %v356 = vld [vmem:[%s165 + $0x508] sm:$0xff]
      %v357 = vld [vmem:[%s2] sm:$0xff]
      %v358 = vld [vmem:[%s2 + $0x8] sm:$0xff]
      %v359 = vld [vmem:[%s2 + $0x10] sm:$0xff]
      %v360 = vld [vmem:[%s2 + $0x18] sm:$0xff]
      %362 = vset.pattern.permute.xlu0 0
      %363 = vperm.xlu0 %362, %v357
      %v364 = vpop.permute.xlu0 %363
      %367 = vset.pattern.permute.xlu0 0
      %368 = vperm.xlu0 %367, %v358
      %v369 = vpop.permute.xlu0 %368
      %372 = vset.pattern.permute.xlu0 0
      %373 = vperm.xlu0 %372, %v359
      %v374 = vpop.permute.xlu0 %373
      %377 = vset.pattern.permute.xlu0 0
      %378 = vperm.xlu0 %377, %v360
      %v379 = vpop.permute.xlu0 %378
      %vm381 = vcmask 64512
      %v383 = vsel %vm381, %v176, 0
      %v386 = vsel %vm381, %v182, 0
      %v389 = vsel %vm381, %v188, 0
      %v392 = vsel %vm381, %v194, 0
      %394 = vmatpush.msra.mxu0 %v225
      %395 = vmatpush.msra.mxu0 %v223
      %396 = vmatpush.msra.mxu0 %v221
      %397 = vmatpush.msra.mxu0 %v219
      %398 = vmatpush.msra.mxu0 %v217
      %399 = vmatpush.msra.mxu0 %v215
      %400 = vmatpush.msra.mxu0 %v213
      %401 = vmatpush.msra.mxu0 %v211
      %402 = vmatpush.msra.mxu0 %v209
      %403 = vmatpush.msra.mxu0 %v207
      %404 = vmatpush.msra.mxu0 %v205
      %405 = vmatpush.msra.mxu0 %v203
      %406 = vmatpush.msra.mxu0 %v201
      %407 = vmatpush.msra.mxu0 %v199
      %408 = vmatpush.msra.mxu0 %v197
      %409 = vmatpush.msra.mxu0 %v195
      %410 = vmatmul.f32.gmra.mxu0 %v171
      %v411 = vpop.f32.mrf.mxu0
      %v412 = vadd.f32 %v364, %v411
      %413 = vmatmul.f32.gmra.mxu0 %v177
      %v414 = vpop.f32.mrf.mxu0
      %v415 = vadd.f32 %v369, %v414
      %416 = vmatmul.f32.gmra.mxu0 %v183
      %v417 = vpop.f32.mrf.mxu0
      %v418 = vadd.f32 %v374, %v417
      %419 = vmatmul.f32.gmra.mxu0 %v189
      %v420 = vpop.f32.mrf.mxu0
      %v421 = vadd.f32 %v379, %v420
      %422 = vdwg.mxu0
      %423 = vmatpush.msra.mxu0 %v257
      %424 = vmatpush.msra.mxu0 %v255
      %425 = vmatpush.msra.mxu0 %v253
      %426 = vmatpush.msra.mxu0 %v251
      %427 = vmatpush.msra.mxu0 %v249
      %428 = vmatpush.msra.mxu0 %v247
      %429 = vmatpush.msra.mxu0 %v245
      %430 = vmatpush.msra.mxu0 %v243
      %431 = vmatpush.msra.mxu0 %v241
      %432 = vmatpush.msra.mxu0 %v239
      %433 = vmatpush.msra.mxu0 %v237
      %434 = vmatpush.msra.mxu0 %v235
      %435 = vmatpush.msra.mxu0 %v233
      %436 = vmatpush.msra.mxu0 %v231
      %437 = vmatpush.msra.mxu0 %v229
      %438 = vmatpush.msra.mxu0 %v227
      %439 = vmatmul.f32.gmra.mxu0 %v172
      %v440 = vpop.f32.mrf.mxu0
      %v441 = vadd.f32 %v412, %v440
      %442 = vmatmul.f32.gmra.mxu0 %v178
      %v443 = vpop.f32.mrf.mxu0
      %v444 = vadd.f32 %v415, %v443
      %445 = vmatmul.f32.gmra.mxu0 %v184
      %v446 = vpop.f32.mrf.mxu0
      %v447 = vadd.f32 %v418, %v446
      %448 = vmatmul.f32.gmra.mxu0 %v190
      %v449 = vpop.f32.mrf.mxu0
      %v450 = vadd.f32 %v421, %v449
      %451 = vdwg.mxu0
      %452 = vmatpush.msra.mxu0 %v289
      %453 = vmatpush.msra.mxu0 %v287
      %454 = vmatpush.msra.mxu0 %v285
      %455 = vmatpush.msra.mxu0 %v283
      %456 = vmatpush.msra.mxu0 %v281
      %457 = vmatpush.msra.mxu0 %v279
      %458 = vmatpush.msra.mxu0 %v277
      %459 = vmatpush.msra.mxu0 %v275
      %460 = vmatpush.msra.mxu0 %v273
      %461 = vmatpush.msra.mxu0 %v271
      %462 = vmatpush.msra.mxu0 %v269
      %463 = vmatpush.msra.mxu0 %v267
      %464 = vmatpush.msra.mxu0 %v265
      %465 = vmatpush.msra.mxu0 %v263
      %466 = vmatpush.msra.mxu0 %v261
      %467 = vmatpush.msra.mxu0 %v259
      %468 = vmatmul.f32.gmra.mxu0 %v173
      %v469 = vpop.f32.mrf.mxu0
      %v470 = vadd.f32 %v441, %v469
      %471 = vmatmul.f32.gmra.mxu0 %v179
      %v472 = vpop.f32.mrf.mxu0
      %v473 = vadd.f32 %v444, %v472
      %474 = vmatmul.f32.gmra.mxu0 %v185
      %v475 = vpop.f32.mrf.mxu0
      %v476 = vadd.f32 %v447, %v475
      %477 = vmatmul.f32.gmra.mxu0 %v191
      %v478 = vpop.f32.mrf.mxu0
      %v479 = vadd.f32 %v450, %v478
      %480 = vdwg.mxu0
      %481 = vmatpush.msra.mxu0 %v321
      %482 = vmatpush.msra.mxu0 %v319
      %483 = vmatpush.msra.mxu0 %v317
      %484 = vmatpush.msra.mxu0 %v315
      %485 = vmatpush.msra.mxu0 %v313
      %486 = vmatpush.msra.mxu0 %v311
      %487 = vmatpush.msra.mxu0 %v309
      %488 = vmatpush.msra.mxu0 %v307
      %489 = vmatpush.msra.mxu0 %v305
      %490 = vmatpush.msra.mxu0 %v303
      %491 = vmatpush.msra.mxu0 %v301
      %492 = vmatpush.msra.mxu0 %v299
      %493 = vmatpush.msra.mxu0 %v297
      %494 = vmatpush.msra.mxu0 %v295
      %495 = vmatpush.msra.mxu0 %v293
      %496 = vmatpush.msra.mxu0 %v291
      %497 = vmatmul.f32.gmra.mxu0 %v174
      %v498 = vpop.f32.mrf.mxu0
      %v499 = vadd.f32 %v470, %v498
      %500 = vmatmul.f32.gmra.mxu0 %v180
      %v501 = vpop.f32.mrf.mxu0
      %v502 = vadd.f32 %v473, %v501
      %503 = vmatmul.f32.gmra.mxu0 %v186
      %v504 = vpop.f32.mrf.mxu0
      %v505 = vadd.f32 %v476, %v504
      %506 = vmatmul.f32.gmra.mxu0 %v192
      %v507 = vpop.f32.mrf.mxu0
      %v508 = vadd.f32 %v479, %v507
      %509 = vdwg.mxu0
      %510 = vmatpush.msra.mxu0 %v353
      %511 = vmatpush.msra.mxu0 %v351
      %512 = vmatpush.msra.mxu0 %v349
      %513 = vmatpush.msra.mxu0 %v347
      %514 = vmatpush.msra.mxu0 %v345
      %515 = vmatpush.msra.mxu0 %v343
      %516 = vmatpush.msra.mxu0 %v341
      %517 = vmatpush.msra.mxu0 %v339
      %518 = vmatpush.msra.mxu0 %v337
      %519 = vmatpush.msra.mxu0 %v335
      %520 = vmatpush.msra.mxu0 %v333
      %521 = vmatpush.msra.mxu0 %v331
      %522 = vmatpush.msra.mxu0 %v329
      %523 = vmatpush.msra.mxu0 %v327
      %524 = vmatpush.msra.mxu0 %v325
      %525 = vmatpush.msra.mxu0 %v323
      %526 = vmatmul.f32.gmra.mxu0 %v175
      %v527 = vpop.f32.mrf.mxu0
      %v528 = vadd.f32 %v499, %v527
      %529 = vmatmul.f32.gmra.mxu0 %v181
      %v530 = vpop.f32.mrf.mxu0
      %v531 = vadd.f32 %v502, %v530
      %532 = vmatmul.f32.gmra.mxu0 %v187
      %v533 = vpop.f32.mrf.mxu0
      %v534 = vadd.f32 %v505, %v533
      %535 = vmatmul.f32.gmra.mxu0 %v193
      %v536 = vpop.f32.mrf.mxu0
      %v537 = vadd.f32 %v508, %v536
      %538 = vdwg.mxu0
      %539 = vmatpush.msra.mxu0 0.0
      %540 = vmatpush.msra.mxu0 0.0
      %541 = vmatpush.msra.mxu0 0.0
      %542 = vmatpush.msra.mxu0 0.0
      %543 = vmatpush.msra.mxu0 0.0
      %544 = vmatpush.msra.mxu0 0.0
      %545 = vmatpush.msra.mxu0 0.0
      %546 = vmatpush.msra.mxu0 0.0
      %547 = vmatpush.msra.mxu0 0.0
      %548 = vmatpush.msra.mxu0 0.0
      %549 = vmatpush.msra.mxu0 0.0
      %550 = vmatpush.msra.mxu0 0.0
      %551 = vmatpush.msra.mxu0 0.0
      %552 = vmatpush.msra.mxu0 0.0
      %553 = vmatpush.msra.mxu0 0.0
      %554 = vmatpush.msra.mxu0 %v355
      %555 = vmatmul.f32.gmra.mxu0 %v383
      %v556 = vpop.f32.mrf.mxu0
      %v557 = vadd.f32 %v528, %v556
      %558 = vmatmul.f32.gmra.mxu0 %v386
      %v559 = vpop.f32.mrf.mxu0
      %v560 = vadd.f32 %v531, %v559
      %561 = vmatmul.f32.gmra.mxu0 %v389
      %v562 = vpop.f32.mrf.mxu0
      %v563 = vadd.f32 %v534, %v562
      %564 = vmatmul.f32.gmra.mxu0 %v392
      %v565 = vpop.f32.mrf.mxu0
      %v566 = vadd.f32 %v537, %v565
      %567 = vdwg.mxu0
      %568 = vmatpush.msra.mxu0 %v226
      %569 = vmatpush.msra.mxu0 %v224
      %570 = vmatpush.msra.mxu0 %v222
      %571 = vmatpush.msra.mxu0 %v220
      %572 = vmatpush.msra.mxu0 %v218
      %573 = vmatpush.msra.mxu0 %v216
      %574 = vmatpush.msra.mxu0 %v214
      %575 = vmatpush.msra.mxu0 %v212
      %576 = vmatpush.msra.mxu0 %v210
      %577 = vmatpush.msra.mxu0 %v208
      %578 = vmatpush.msra.mxu0 %v206
      %579 = vmatpush.msra.mxu0 %v204
      %580 = vmatpush.msra.mxu0 %v202
      %581 = vmatpush.msra.mxu0 %v200
      %582 = vmatpush.msra.mxu0 %v198
      %583 = vmatpush.msra.mxu0 %v196
      %584 = vmatmul.f32.gmra.mxu0 %v171
      %v585 = vpop.f32.mrf.mxu0
      %v586 = vadd.f32 %v364, %v585
      %587 = vmatmul.f32.gmra.mxu0 %v177
      %v588 = vpop.f32.mrf.mxu0
      %v589 = vadd.f32 %v369, %v588
      %590 = vmatmul.f32.gmra.mxu0 %v183
      %v591 = vpop.f32.mrf.mxu0
      %v592 = vadd.f32 %v374, %v591
      %593 = vmatmul.f32.gmra.mxu0 %v189
      %v594 = vpop.f32.mrf.mxu0
      %v595 = vadd.f32 %v379, %v594
      %596 = vdwg.mxu0
      %597 = vmatpush.msra.mxu0 %v258
      %598 = vmatpush.msra.mxu0 %v256
      %599 = vmatpush.msra.mxu0 %v254
      %600 = vmatpush.msra.mxu0 %v252
      %601 = vmatpush.msra.mxu0 %v250
      %602 = vmatpush.msra.mxu0 %v248
      %603 = vmatpush.msra.mxu0 %v246
      %604 = vmatpush.msra.mxu0 %v244
      %605 = vmatpush.msra.mxu0 %v242
      %606 = vmatpush.msra.mxu0 %v240
      %607 = vmatpush.msra.mxu0 %v238
      %608 = vmatpush.msra.mxu0 %v236
      %609 = vmatpush.msra.mxu0 %v234
      %610 = vmatpush.msra.mxu0 %v232
      %611 = vmatpush.msra.mxu0 %v230
      %612 = vmatpush.msra.mxu0 %v228
      %613 = vmatmul.f32.gmra.mxu0 %v172
      %v614 = vpop.f32.mrf.mxu0
      %v615 = vadd.f32 %v586, %v614
      %616 = vmatmul.f32.gmra.mxu0 %v178
      %v617 = vpop.f32.mrf.mxu0
      %v618 = vadd.f32 %v589, %v617
      %619 = vmatmul.f32.gmra.mxu0 %v184
      %v620 = vpop.f32.mrf.mxu0
      %v621 = vadd.f32 %v592, %v620
      %622 = vmatmul.f32.gmra.mxu0 %v190
      %v623 = vpop.f32.mrf.mxu0
      %v624 = vadd.f32 %v595, %v623
      %625 = vdwg.mxu0
      %626 = vmatpush.msra.mxu0 %v290
      %627 = vmatpush.msra.mxu0 %v288
      %628 = vmatpush.msra.mxu0 %v286
      %629 = vmatpush.msra.mxu0 %v284
      %630 = vmatpush.msra.mxu0 %v282
      %631 = vmatpush.msra.mxu0 %v280
      %632 = vmatpush.msra.mxu0 %v278
      %633 = vmatpush.msra.mxu0 %v276
      %634 = vmatpush.msra.mxu0 %v274
      %635 = vmatpush.msra.mxu0 %v272
      %636 = vmatpush.msra.mxu0 %v270
      %637 = vmatpush.msra.mxu0 %v268
      %638 = vmatpush.msra.mxu0 %v266
      %639 = vmatpush.msra.mxu0 %v264
      %640 = vmatpush.msra.mxu0 %v262
      %641 = vmatpush.msra.mxu0 %v260
      %642 = vmatmul.f32.gmra.mxu0 %v173
      %v643 = vpop.f32.mrf.mxu0
      %v644 = vadd.f32 %v615, %v643
      %645 = vmatmul.f32.gmra.mxu0 %v179
      %v646 = vpop.f32.mrf.mxu0
      %v647 = vadd.f32 %v618, %v646
      %648 = vmatmul.f32.gmra.mxu0 %v185
      %v649 = vpop.f32.mrf.mxu0
      %v650 = vadd.f32 %v621, %v649
      %651 = vmatmul.f32.gmra.mxu0 %v191
      %v652 = vpop.f32.mrf.mxu0
      %v653 = vadd.f32 %v624, %v652
      %654 = vdwg.mxu0
      %655 = vmatpush.msra.mxu0 %v322
      %656 = vmatpush.msra.mxu0 %v320
      %657 = vmatpush.msra.mxu0 %v318
      %658 = vmatpush.msra.mxu0 %v316
      %659 = vmatpush.msra.mxu0 %v314
      %660 = vmatpush.msra.mxu0 %v312
      %661 = vmatpush.msra.mxu0 %v310
      %662 = vmatpush.msra.mxu0 %v308
      %663 = vmatpush.msra.mxu0 %v306
      %664 = vmatpush.msra.mxu0 %v304
      %665 = vmatpush.msra.mxu0 %v302
      %666 = vmatpush.msra.mxu0 %v300
      %667 = vmatpush.msra.mxu0 %v298
      %668 = vmatpush.msra.mxu0 %v296
      %669 = vmatpush.msra.mxu0 %v294
      %670 = vmatpush.msra.mxu0 %v292
      %671 = vmatmul.f32.gmra.mxu0 %v174
      %v672 = vpop.f32.mrf.mxu0
      %v673 = vadd.f32 %v644, %v672
      %674 = vmatmul.f32.gmra.mxu0 %v180
      %v675 = vpop.f32.mrf.mxu0
      %v676 = vadd.f32 %v647, %v675
      %677 = vmatmul.f32.gmra.mxu0 %v186
      %v678 = vpop.f32.mrf.mxu0
      %v679 = vadd.f32 %v650, %v678
      %680 = vmatmul.f32.gmra.mxu0 %v192
      %v681 = vpop.f32.mrf.mxu0
      %v682 = vadd.f32 %v653, %v681
      %683 = vdwg.mxu0
      %684 = vmatpush.msra.mxu0 %v354
      %685 = vmatpush.msra.mxu0 %v352
      %686 = vmatpush.msra.mxu0 %v350
      %687 = vmatpush.msra.mxu0 %v348
      %688 = vmatpush.msra.mxu0 %v346
      %689 = vmatpush.msra.mxu0 %v344
      %690 = vmatpush.msra.mxu0 %v342
      %691 = vmatpush.msra.mxu0 %v340
      %692 = vmatpush.msra.mxu0 %v338
      %693 = vmatpush.msra.mxu0 %v336
      %694 = vmatpush.msra.mxu0 %v334
      %695 = vmatpush.msra.mxu0 %v332
      %696 = vmatpush.msra.mxu0 %v330
      %697 = vmatpush.msra.mxu0 %v328
      %698 = vmatpush.msra.mxu0 %v326
      %699 = vmatpush.msra.mxu0 %v324
      %700 = vmatmul.f32.gmra.mxu0 %v175
      %v701 = vpop.f32.mrf.mxu0
      %v702 = vadd.f32 %v673, %v701
      %703 = vmatmul.f32.gmra.mxu0 %v181
      %v704 = vpop.f32.mrf.mxu0
      %v705 = vadd.f32 %v676, %v704
      %706 = vmatmul.f32.gmra.mxu0 %v187
      %v707 = vpop.f32.mrf.mxu0
      %v708 = vadd.f32 %v679, %v707
      %709 = vmatmul.f32.gmra.mxu0 %v193
      %v710 = vpop.f32.mrf.mxu0
      %v711 = vadd.f32 %v682, %v710
      %712 = vdwg.mxu0
      %713 = vmatpush.msra.mxu0 0.0
      %714 = vmatpush.msra.mxu0 0.0
      %715 = vmatpush.msra.mxu0 0.0
      %716 = vmatpush.msra.mxu0 0.0
      %717 = vmatpush.msra.mxu0 0.0
      %718 = vmatpush.msra.mxu0 0.0
      %719 = vmatpush.msra.mxu0 0.0
      %720 = vmatpush.msra.mxu0 0.0
      %721 = vmatpush.msra.mxu0 0.0
      %722 = vmatpush.msra.mxu0 0.0
      %723 = vmatpush.msra.mxu0 0.0
      %724 = vmatpush.msra.mxu0 0.0
      %725 = vmatpush.msra.mxu0 0.0
      %726 = vmatpush.msra.mxu0 0.0
      %727 = vmatpush.msra.mxu0 0.0
      %728 = vmatpush.msra.mxu0 %v356
      %729 = vmatmul.f32.gmra.mxu0 %v383
      %v730 = vpop.f32.mrf.mxu0
      %v731 = vadd.f32 %v702, %v730
      %732 = vmatmul.f32.gmra.mxu0 %v386
      %v733 = vpop.f32.mrf.mxu0
      %v734 = vadd.f32 %v705, %v733
      %735 = vmatmul.f32.gmra.mxu0 %v389
      %v736 = vpop.f32.mrf.mxu0
      %v737 = vadd.f32 %v708, %v736
      %738 = vmatmul.f32.gmra.mxu0 %v392
      %v739 = vpop.f32.mrf.mxu0
      %v740 = vadd.f32 %v711, %v739
      %741 = vdwg.mxu0
      %v742 = vmul.f32 %v557, %v557
      %v743 = vmul.f32 %v731, %v731
      %v744 = vrot.slane %v742, 4
      %v745 = vadd.f32 %v742, %v744
      %v746 = vrot.slane %v745, 2
      %v747 = vadd.f32 %v745, %v746
      %v748 = vrot.slane %v747, 1
      %v749 = vadd.f32 %v747, %v748
      %vm750 = vcmask 588800
      %v751 = vsel %vm750, %v743, 0.0
      %v752 = vrot.slane %v751, 4
      %v753 = vadd.f32 %v751, %v752
      %v754 = vrot.slane %v753, 2
      %v755 = vadd.f32 %v753, %v754
      %v756 = vrot.slane %v755, 1
      %v757 = vadd.f32 %v755, %v756
      %v758 = vrsqrt.pop %v749
      %v759 = vmul.f32 %v758, %v749
      %v760 = vmul.f32 %v759, %v758
      %v761 = vmul.f32 0.5, %v760
      %v762 = vsub.f32 1.5, %v761
      %v763 = vmul.f32 %v758, %v762
      %v764 = vmul.f32 %v749, %v763
      %vm765 = vcmp.eq.f32.partialorder %v749, inf
      %v766 = vsel %vm765, %v749, %v764
      %vm767 = vcmp.eq.f32.partialorder %v749, 0.0
      %v768 = vand.u32 %v749, 2147483648
      %v769 = vsel %vm767, %v768, %v766
      %v770 = vrsqrt.pop %v757
      %v771 = vmul.f32 %v770, %v757
      %v772 = vmul.f32 %v771, %v770
      %v773 = vmul.f32 0.5, %v772
      %v774 = vsub.f32 1.5, %v773
      %v775 = vmul.f32 %v770, %v774
      %v776 = vmul.f32 %v757, %v775
      %vm777 = vcmp.eq.f32.partialorder %v757, inf
      %v778 = vsel %vm777, %v757, %v776
      %vm779 = vcmp.eq.f32.partialorder %v757, 0.0
      %v780 = vand.u32 %v757, 2147483648
      %v781 = vsel %vm779, %v780, %v778
      %v782 = vadd.f32 %v749, 1.0
      %v783 = vadd.f32 %v757, 1.0
      %v784 = vrcp.pop %v782
      %v785 = vrcp.pop %v783
      %v786 = vmul.f32 %v769, %v784
      %v787 = vmul.f32 %v781, %v785
      %v788 = vmul.f32 %v557, %v786
      %v789 = vmul.f32 %v731, %v787
      %790 = vst [vmem:[%s170] sm:$0xff] %v788
      %791 = vst.msk [vmem:[%s170 + $0x8] sm:$0xff] %vm750, %v789
      %v792 = vmul.f32 %v560, %v560
      %v793 = vmul.f32 %v734, %v734
      %v794 = vrot.slane %v792, 4
      %v795 = vadd.f32 %v792, %v794
      %v796 = vrot.slane %v795, 2
      %v797 = vadd.f32 %v795, %v796
      %v798 = vrot.slane %v797, 1
      %v799 = vadd.f32 %v797, %v798
      %v800 = vsel %vm750, %v793, 0.0
      %v801 = vrot.slane %v800, 4
      %v802 = vadd.f32 %v800, %v801
      %v803 = vrot.slane %v802, 2
      %v804 = vadd.f32 %v802, %v803
      %v805 = vrot.slane %v804, 1
      %v806 = vadd.f32 %v804, %v805
      %v807 = vrsqrt.pop %v799
      %v808 = vmul.f32 %v807, %v799
      %v809 = vmul.f32 %v808, %v807
      %v810 = vmul.f32 0.5, %v809
      %v811 = vsub.f32 1.5, %v810
      %v812 = vmul.f32 %v807, %v811
      %v813 = vmul.f32 %v799, %v812
      %vm814 = vcmp.eq.f32.partialorder %v799, inf
      %v815 = vsel %vm814, %v799, %v813
      %vm816 = vcmp.eq.f32.partialorder %v799, 0.0
      %v817 = vand.u32 %v799, 2147483648
      %v818 = vsel %vm816, %v817, %v815
      %v819 = vrsqrt.pop %v806
      %v820 = vmul.f32 %v819, %v806
      %v821 = vmul.f32 %v820, %v819
      %v822 = vmul.f32 0.5, %v821
      %v823 = vsub.f32 1.5, %v822
      %v824 = vmul.f32 %v819, %v823
      %v825 = vmul.f32 %v806, %v824
      %vm826 = vcmp.eq.f32.partialorder %v806, inf
      %v827 = vsel %vm826, %v806, %v825
      %vm828 = vcmp.eq.f32.partialorder %v806, 0.0
      %v829 = vand.u32 %v806, 2147483648
      %v830 = vsel %vm828, %v829, %v827
      %v831 = vadd.f32 %v799, 1.0
      %v832 = vadd.f32 %v806, 1.0
      %v833 = vrcp.pop %v831
      %v834 = vrcp.pop %v832
      %v835 = vmul.f32 %v818, %v833
      %v836 = vmul.f32 %v830, %v834
      %v837 = vmul.f32 %v560, %v835
      %v838 = vmul.f32 %v734, %v836
      %841 = vrot.lane.b32.xlu0 %v837, 72
      %v842 = vpop.permute.xlu0 %841
      %843 = vrot.lane.b32.xlu0 %v838, 72
      %v844 = vpop.permute.xlu0 %843
      %v845 = vsel %vm750, %v842, %v844
      %vm849 = vcmask 1048128
      %850 = vst.msk [vmem:[%s170 + $0x8] sm:$0xff] %vm849, %v842
      %851 = vst [vmem:[%s170 + $0x10] sm:$0xff] %v845
      %vm852 = vcmask 130048
      %853 = vst.msk [vmem:[%s170 + $0x18] sm:$0xff] %vm852, %v844
      %v854 = vmul.f32 %v563, %v563
      %v855 = vmul.f32 %v737, %v737
      %v856 = vrot.slane %v854, 4
      %v857 = vadd.f32 %v854, %v856
      %v858 = vrot.slane %v857, 2
      %v859 = vadd.f32 %v857, %v858
      %v860 = vrot.slane %v859, 1
      %v861 = vadd.f32 %v859, %v860
      %v862 = vsel %vm750, %v855, 0.0
      %v863 = vrot.slane %v862, 4
      %v864 = vadd.f32 %v862, %v863
      %v865 = vrot.slane %v864, 2
      %v866 = vadd.f32 %v864, %v865
      %v867 = vrot.slane %v866, 1
      %v868 = vadd.f32 %v866, %v867
      %v869 = vrsqrt.pop %v861
      %v870 = vmul.f32 %v869, %v861
      %v871 = vmul.f32 %v870, %v869
      %v872 = vmul.f32 0.5, %v871
      %v873 = vsub.f32 1.5, %v872
      %v874 = vmul.f32 %v869, %v873
      %v875 = vmul.f32 %v861, %v874
      %vm876 = vcmp.eq.f32.partialorder %v861, inf
      %v877 = vsel %vm876, %v861, %v875
      %vm878 = vcmp.eq.f32.partialorder %v861, 0.0
      %v879 = vand.u32 %v861, 2147483648
      %v880 = vsel %vm878, %v879, %v877
      %v881 = vrsqrt.pop %v868
      %v882 = vmul.f32 %v881, %v868
      %v883 = vmul.f32 %v882, %v881
      %v884 = vmul.f32 0.5, %v883
      %v885 = vsub.f32 1.5, %v884
      %v886 = vmul.f32 %v881, %v885
      %v887 = vmul.f32 %v868, %v886
      %vm888 = vcmp.eq.f32.partialorder %v868, inf
      %v889 = vsel %vm888, %v868, %v887
      %vm890 = vcmp.eq.f32.partialorder %v868, 0.0
      %v891 = vand.u32 %v868, 2147483648
      %v892 = vsel %vm890, %v891, %v889
      %v893 = vadd.f32 %v861, 1.0
      %v894 = vadd.f32 %v868, 1.0
      %v895 = vrcp.pop %v893
      %v896 = vrcp.pop %v894
      %v897 = vmul.f32 %v880, %v895
      %v898 = vmul.f32 %v892, %v896
      %v899 = vmul.f32 %v563, %v897
      %v900 = vmul.f32 %v737, %v898
      %903 = vrot.lane.b32.xlu0 %v899, 16
      %v904 = vpop.permute.xlu0 %903
      %905 = vrot.lane.b32.xlu0 %v900, 16
      %v906 = vpop.permute.xlu0 %905
      %v907 = vsel %vm852, %v904, %v906
      %vm910 = vcmask 1047680
      %911 = vst.msk [vmem:[%s170 + $0x18] sm:$0xff] %vm910, %v904
      %vm912 = vcmask 719872
      %913 = vst.msk [vmem:[%s170 + $0x20] sm:$0xff] %vm912, %v907
      %v914 = vmul.f32 %v566, %v566
      %v915 = vmul.f32 %v740, %v740
      %v916 = vrot.slane %v914, 4
      %v917 = vadd.f32 %v914, %v916
      %v918 = vrot.slane %v917, 2
      %v919 = vadd.f32 %v917, %v918
      %v920 = vrot.slane %v919, 1
      %v921 = vadd.f32 %v919, %v920
      %v922 = vsel %vm750, %v915, 0.0
      %v923 = vrot.slane %v922, 4
      %v924 = vadd.f32 %v922, %v923
      %v925 = vrot.slane %v924, 2
      %v926 = vadd.f32 %v924, %v925
      %v927 = vrot.slane %v926, 1
      %v928 = vadd.f32 %v926, %v927
      %v929 = vrsqrt.pop %v921
      %v930 = vmul.f32 %v929, %v921
      %v931 = vmul.f32 %v930, %v929
      %v932 = vmul.f32 0.5, %v931
      %v933 = vsub.f32 1.5, %v932
      %v934 = vmul.f32 %v929, %v933
      %v935 = vmul.f32 %v921, %v934
      %vm936 = vcmp.eq.f32.partialorder %v921, inf
      %v937 = vsel %vm936, %v921, %v935
      %vm938 = vcmp.eq.f32.partialorder %v921, 0.0
      %v939 = vand.u32 %v921, 2147483648
      %v940 = vsel %vm938, %v939, %v937
      %v941 = vrsqrt.pop %v928
      %v942 = vmul.f32 %v941, %v928
      %v943 = vmul.f32 %v942, %v941
      %v944 = vmul.f32 0.5, %v943
      %v945 = vsub.f32 1.5, %v944
      %v946 = vmul.f32 %v941, %v945
      %v947 = vmul.f32 %v928, %v946
      %vm948 = vcmp.eq.f32.partialorder %v928, inf
      %v949 = vsel %vm948, %v928, %v947
      %vm950 = vcmp.eq.f32.partialorder %v928, 0.0
      %v951 = vand.u32 %v928, 2147483648
      %v952 = vsel %vm950, %v951, %v949
      %v953 = vadd.f32 %v921, 1.0
      %v954 = vadd.f32 %v928, 1.0
      %v955 = vrcp.pop %v953
      %v956 = vrcp.pop %v954
      %v957 = vmul.f32 %v940, %v955
      %v958 = vmul.f32 %v952, %v956
      %v959 = vmul.f32 %v566, %v957
      %v960 = vmul.f32 %v740, %v958
      %963 = vrot.lane.b32.xlu0 %v959, 88
      %v964 = vpop.permute.xlu0 %963
      %965 = vrot.lane.b32.xlu0 %v960, 88
      %v966 = vpop.permute.xlu0 %965
      %v967 = vsel %vm912, %v964, %v966
      %vm971 = vcmask 1048256
      %972 = vst.msk [vmem:[%s170 + $0x20] sm:$0xff] %vm971, %v964
      %973 = vst [vmem:[%s170 + $0x28] sm:$0xff] %v967
      %vm974 = vcmask 261120
      %975 = vst.msk [vmem:[%s170 + $0x30] sm:$0xff] %vm974, %v966
      %p976 = scmp.lt.s32.totalorder %s14, 1
      %s977 = scalar_select %p976, %s14, 1
      %s978 = smul.addr %s977, 7
      %s979 = smul.addr %s978, 8
      %s980 = scalar_lea.vmem %s3, %s979
      // Predicated region
      $region33: #{capsule_net_forward.4} parent=31 // pred_check
        %p981 = pneg %p100
      $region34: #{capsule_net_forward.4} parent=31 // pred_check_branch
        %983 = sbr.rel (%p981) target = $region36
      $region35: #{capsule_net_forward.4} parent=31 // pred_region
        _
      $region36: #{capsule_net_forward.4} parent=31 // pred_fallthru
        _
    $region32: #{capsule_net_forward.4} parent=5 // pred_fallthru
      _
    %p984 = scmp.le.s32.totalorder 2, %s9
    // Predicated region
    $region37: #{capsule_net_forward.4} parent=5 // pred_check
      %p985 = pneg %p984
    $region38: #{capsule_net_forward.4} parent=5 // pred_check_branch
      %987 = sbr.rel (%p985) target = $region40
    $region39: #{capsule_net_forward.4} parent=5 // pred_region
      %s988 = ssub.s32 %s9, 2
      // Predicated region
      $region41: #{capsule_net_forward.4} parent=39 // pred_check
        %p989 = pneg %p106
      $region42: #{capsule_net_forward.4} parent=39 // pred_check_branch
        %991 = sbr.rel (%p989) target = $region44
      $region43: #{capsule_net_forward.4} parent=39 // pred_region
        %p992 = scmp.lt.s32.totalorder %s15, 1
        %s993 = scalar_select %p992, %s15, 1
        %s994 = smul.addr %s993, 7
        %s995 = smul.addr %s994, 8
        %s996 = scalar_lea.vmem %s3, %s995
      $region44: #{capsule_net_forward.4} parent=39 // pred_fallthru
        _
    $region40: #{capsule_net_forward.4} parent=5 // pred_fallthru
      _
  $region6: #{capsule_net_forward.4} parent=0 // loop_footer
    %s13 = sadd.s32 1, %s9
  $region7: #{capsule_net_forward.4} parent=0 // loop_footer_branch
    %8 = sbr.rel target = $region3
  $region8: #{capsule_net_forward.4} parent=0 // loop_exit
    _

// kernel: capsule_net_forward.5
$region0: #{capsule_net_forward.5}
  #allocation0 [shape = 'u32[]', space=smem, size = 0x4, offset = 0x4, fixed_abs, tag = 'smem constant byte address 0x4 - core index']
  #allocation1 [shape = 'u32[72,128]{1,0:T(1,128)}', space=vmem, size = 0x9000, scoped, tag = 'internal scratch']
  #allocation2 [shape = 'f32[16,2,16]{2,1,0:T(2,128)}', space=vmem, size = 0x4000, scoped, tag = 'scratch operand']
  %s0 = inlined_call_operand.vmem [shape: f32[2,8,16,800], index: 0, kind: input, shape index: {}]
  %s1 = inlined_call_operand.vmem [shape: bf16[128,8,16,800], index: 1, kind: input, shape index: {}]
  %s2 = inlined_call_operand.vmem [shape: f32[2,2048], index: 2, kind: output, shape index: {}]
  %s3 = sld [smem:[#allocation0]]
  $region48: #{capsule_net_forward.5} parent=0
    _
  %s5 = ssub.s32 1, %s3
  %s6 = scalar_select 0, %s5, %s3
  loop: start=0, step=1, limit=10
  $region2: #{capsule_net_forward.5} parent=0 // loop_pre_header
    _
  $region3: #{capsule_net_forward.5} parent=0 // loop_header
    %s8 = sphi 0, %s12
    %p9 = scmp.ge.s32.totalorder %s8, 10
    %s16 = sphi 0, %s16
    %s18 = sphi 0, %s16
    %s19 = sphi 0, %s18
    %s33 = sphi 0, %s19
    %s39 = sphi 0, %s41
    %s42 = sphi 0, %s39
    %s43 = sphi 0, %s42
    %s59 = sphi 0, %s43
    %s65 = sphi 0, %s67
    %s68 = sphi 0, %s65
    %s69 = sphi 0, %s68
    %s85 = sphi 0, %s69
  $region4: #{capsule_net_forward.5} parent=0 // loop_header_branch
    %11 = sbr.rel (%p9) target = $region8
  $region5: #{capsule_net_forward.5} parent=0 // loop_body
    %s13 = ssub.s32 %s8, 1
    %s14 = ssub.s32 %s8, 2
    %s15 = sadd.s32 %s8, 1
    %s17 = sadd.s32 %s16, 1
    %p20 = scmp.eq.s32.totalorder %s8, 7
    %p21 = scmp.ne.s32.totalorder %s16, %s18
    %p22 = scmp.eq.s32.totalorder %s8, 0
    %p23 = por %p21, %p22
    %p24 = scmp.ne.s32.totalorder %s16, %s18
    %p25 = scmp.eq.s32.totalorder %s13, 7
    %p26 = por %p24, %p25
    %p27 = scmp.ne.s32.totalorder %s18, %s19
    %p28 = scmp.eq.s32.totalorder %s13, 0
    %p29 = por %p27, %p28
    %p30 = scmp.ne.s32.totalorder %s18, %s19
    %p31 = scmp.eq.s32.totalorder %s14, 7
    %p32 = por %p30, %p31
    %p34 = scmp.ne.s32.totalorder %s19, %s33
    %p35 = scmp.eq.s32.totalorder %s14, 0
    %p36 = por %p34, %p35
    %s37 = ssub.s32 %s8, %s15
    %p38 = scmp.eq.s32.totalorder %s37, 0
    %s40 = sadd.s32 %s39, 1
    %s41 = scalar_select %p38, %s39, %s40
    %p44 = pneg %p38
    %p45 = scmp.eq.s32.totalorder %s8, 7
    %p46 = por %p44, %p45
    %p47 = scmp.ne.s32.totalorder %s39, %s42
    %p48 = scmp.eq.s32.totalorder %s8, 0
    %p49 = por %p47, %p48
    %p50 = scmp.ne.s32.totalorder %s39, %s42
    %p51 = scmp.eq.s32.totalorder %s13, 7
    %p52 = por %p50, %p51
    %p53 = scmp.ne.s32.totalorder %s42, %s43
    %p54 = scmp.eq.s32.totalorder %s13, 0
    %p55 = por %p53, %p54
    %p56 = scmp.ne.s32.totalorder %s42, %s43
    %p57 = scmp.eq.s32.totalorder %s14, 7
    %p58 = por %p56, %p57
    %p60 = scmp.ne.s32.totalorder %s43, %s59
    %p61 = scmp.eq.s32.totalorder %s14, 0
    %p62 = por %p60, %p61
    %s63 = ssub.s32 %s8, %s15
    %p64 = scmp.eq.s32.totalorder %s63, 0
    %s66 = sadd.s32 %s65, 1
    %s67 = scalar_select %p64, %s65, %s66
    %p70 = pneg %p64
    %p71 = scmp.eq.s32.totalorder %s8, 7
    %p72 = por %p70, %p71
    %p73 = scmp.ne.s32.totalorder %s65, %s68
    %p74 = scmp.eq.s32.totalorder %s8, 0
    %p75 = por %p73, %p74
    %p76 = scmp.ne.s32.totalorder %s65, %s68
    %p77 = scmp.eq.s32.totalorder %s13, 7
    %p78 = por %p76, %p77
    %p79 = scmp.ne.s32.totalorder %s68, %s69
    %p80 = scmp.eq.s32.totalorder %s13, 0
    %p81 = por %p79, %p80
    %p82 = scmp.ne.s32.totalorder %s68, %s69
    %p83 = scmp.eq.s32.totalorder %s14, 7
    %p84 = por %p82, %p83
    %p86 = scmp.ne.s32.totalorder %s69, %s85
    %p87 = scmp.eq.s32.totalorder %s14, 0
    %p88 = por %p86, %p87
    %p89 = scmp.le.s32.totalorder 1, %s8
    %p90 = scmp.lt.s32.totalorder %s8, 9
    %p91 = pnand %p89, %p90
    %p92 = pneg %p91
    // Predicated region
    $region9: #{capsule_net_forward.5} parent=5 // pred_check
      _
    $region10: #{capsule_net_forward.5} parent=5 // pred_check_branch
      %94 = sbr.rel (%p91) target = $region12
    $region11: #{capsule_net_forward.5} parent=5 // pred_region
      %s95 = ssub.s32 %s8, 1
      // Predicated region
      $region13: #{capsule_net_forward.5} parent=11 // pred_check
        %p96 = pneg %p29
      $region14: #{capsule_net_forward.5} parent=11 // pred_check_branch
        %98 = sbr.rel (%p96) target = $region16
      $region15: #{capsule_net_forward.5} parent=11 // pred_region
        _
      $region16: #{capsule_net_forward.5} parent=11 // pred_fallthru
        _
    $region12: #{capsule_net_forward.5} parent=5 // pred_fallthru
      _
    %p99 = scmp.lt.s32.totalorder %s8, 8
    // Predicated region
    $region17: #{capsule_net_forward.5} parent=5 // pred_check
      %p100 = pneg %p99
    $region18: #{capsule_net_forward.5} parent=5 // pred_check_branch
      %102 = sbr.rel (%p100) target = $region20
    $region19: #{capsule_net_forward.5} parent=5 // pred_region
      // Predicated region
      $region21: #{capsule_net_forward.5} parent=19 // pred_check
        %p103 = pneg %p49
      $region22: #{capsule_net_forward.5} parent=19 // pred_check_branch
        %105 = sbr.rel (%p103) target = $region24
      $region23: #{capsule_net_forward.5} parent=19 // pred_region
        %s106 = smul.u32 16, %s8
        %p107 = scmp.lt.s32.totalorder %s106, 127
        %s108 = scalar_select %p107, %s106, 127
        %s109 = smul.addr %s108, 112
        %s110 = smul.addr %s109, 4
        %s111 = scalar_lea.vmem %s1, %s110
        %s112 = smul.u32 16, %s8
      $region24: #{capsule_net_forward.5} parent=19 // pred_fallthru
        _
    $region20: #{capsule_net_forward.5} parent=5 // pred_fallthru
      _
    %p113 = scmp.le.s32.totalorder 1, %s8
    %p114 = scmp.lt.s32.totalorder %s8, 9
    %p115 = pnand %p113, %p114
    %p116 = pneg %p115
    // Predicated region
    $region25: #{capsule_net_forward.5} parent=5 // pred_check
      _
    $region26: #{capsule_net_forward.5} parent=5 // pred_check_branch
      %118 = sbr.rel (%p115) target = $region28
    $region27: #{capsule_net_forward.5} parent=5 // pred_region
      %s119 = ssub.s32 %s8, 1
      %p120 = pneg %p29
      %p121 = pneg %p26
      %s122 = smul.u32 16, %s13
      %p123 = scmp.lt.s32.totalorder %s122, 127
      %s124 = scalar_select %p123, %s122, 127
      %s125 = smul.addr %s124, 112
      %s126 = smul.addr %s125, 4
      %s127 = scalar_lea.vmem %s1, %s126
      %p128 = pneg %p55
      %p129 = pneg %p52
      %p130 = pneg %p81
      %p131 = pneg %p78
      %s132 = smul.u32 2, %s13
      %p133 = scmp.lt.s32.totalorder %s132, 15
      %s134 = scalar_select %p133, %s132, 15
      %s135 = smul.addr %s134, 2
      %s136 = scalar_lea.vmem %s2, %s135
      %s137 = smul.u32 16, %s13
      %p138 = scmp.lt.s32.totalorder %s137, 127
      %s139 = scalar_select %p138, %s137, 127
      %s140 = smul.addr %s139, 112
      %s141 = smul.addr %s140, 4
      %s142 = scalar_lea.vmem %s1, %s141
      %s143 = smul.u32 16, %s13
      %s144 = smul.u32 2, %s13
      %p145 = scmp.lt.s32.totalorder %s144, 15
      %s146 = scalar_select %p145, %s144, 15
      %s147 = smul.addr %s146, 2
      %s148 = scalar_lea.vmem %s2, %s147
      %s149 = smul.u32 2, %s13
      loop: start=0, step=1, limit=16
      $region29: #{capsule_net_forward.5} parent=27 // loop_pre_header
        _
      $region30: #{capsule_net_forward.5} parent=27 // loop_header
        %s151 = sphi 0, %s155
        %p152 = scmp.ge.s32.totalorder %s151, 16
      $region31: #{capsule_net_forward.5} parent=27 // loop_header_branch
        %154 = sbr.rel (%p152) target = $region35
      $region32: #{capsule_net_forward.5} parent=27 // loop_body
        %v156 = vld [vmem:[%s0] sm:$0xff]
        %v157 = vld [vmem:[%s0 + $0x8] sm:$0xff]
        %v158 = vld [vmem:[%s0 + $0x10] sm:$0xff]
        %v159 = vld [vmem:[%s0 + $0x18] sm:$0xff]
        %v160 = vld [vmem:[%s0 + $0x20] sm:$0xff]
        %v161 = vld [vmem:[%s0 + $0x28] sm:$0xff]
        %v162 = vld [vmem:[%s0 + $0x30] sm:$0xff]
        %v163 = vld [vmem:[%s0 + $0x38] sm:$0xff]
        %v164 = vld [vmem:[%s0 + $0x40] sm:$0xff]
        %v165 = vld [vmem:[%s0 + $0x48] sm:$0xff]
        %v166 = vld [vmem:[%s0 + $0x50] sm:$0xff]
        %v167 = vld [vmem:[%s0 + $0x58] sm:$0xff]
        %v168 = vld [vmem:[%s0 + $0x60] sm:$0xff]
        %v169 = vld [vmem:[%s0 + $0x68] sm:$0xff]
        %v170 = vld [vmem:[%s0 + $0x380] sm:$0xff]
        %v171 = vld [vmem:[%s0 + $0x388] sm:$0xff]
        %v172 = vld [vmem:[%s0 + $0x390] sm:$0xff]
        %v173 = vld [vmem:[%s0 + $0x398] sm:$0xff]
        %v174 = vld [vmem:[%s0 + $0x3a0] sm:$0xff]
        %v175 = vld [vmem:[%s0 + $0x3a8] sm:$0xff]
        %v176 = vld [vmem:[%s0 + $0x3b0] sm:$0xff]
        %v177 = vld [vmem:[%s0 + $0x3b8] sm:$0xff]
        %v178 = vld [vmem:[%s0 + $0x3c0] sm:$0xff]
        %v179 = vld [vmem:[%s0 + $0x3c8] sm:$0xff]
        %v180 = vld [vmem:[%s0 + $0x3d0] sm:$0xff]
        %v181 = vld [vmem:[%s0 + $0x3d8] sm:$0xff]
        %v182 = vld [vmem:[%s0 + $0x3e0] sm:$0xff]
        %v183 = vld [vmem:[%s0 + $0x3e8] sm:$0xff]
        %s184 = smul.u32 %s151, 112
        %s185 = smul.addr %s184, 4
        %s186 = scalar_lea.vmem %s142, %s185
        %v187 = vld [vmem:[%s186] sm:$0xff]
        %v188 = vld [vmem:[%s186 + $0x8] sm:$0xff]
        %v189 = vld [vmem:[%s186 + $0x10] sm:$0xff]
        %v190 = vld [vmem:[%s186 + $0x18] sm:$0xf]
        %v191 = vld [vmem:[%s186 + $0x1c] sm:$0xff]
        %v192 = vld [vmem:[%s186 + $0x24] sm:$0xff]
        %v193 = vld [vmem:[%s186 + $0x2c] sm:$0xff]
        %v194 = vld [vmem:[%s186 + $0x34] sm:$0xf]
        %v195 = vunpack.c.l.bf16 %v187
        %v196 = vunpack.c.h.bf16 %v187
        %v197 = vunpack.c.l.bf16 %v188
        %v198 = vunpack.c.h.bf16 %v188
        %v199 = vunpack.c.l.bf16 %v189
        %v200 = vunpack.c.h.bf16 %v189
        %v201 = vunpack.c.l.bf16 %v190
        %v202 = vunpack.c.l.bf16 %v191
        %v203 = vunpack.c.h.bf16 %v191
        %v204 = vunpack.c.l.bf16 %v192
        %v205 = vunpack.c.h.bf16 %v192
        %v206 = vunpack.c.l.bf16 %v193
        %v207 = vunpack.c.h.bf16 %v193
        %v208 = vunpack.c.l.bf16 %v194
        %v209 = vmul.f32 %v156, %v195
        %v210 = vmul.f32 %v157, %v196
        %v211 = vmul.f32 %v158, %v197
        %v212 = vmul.f32 %v159, %v198
        %v213 = vmul.f32 %v160, %v199
        %v214 = vmul.f32 %v161, %v200
        %v215 = vmul.f32 %v162, %v201
        %v216 = vmul.f32 %v163, %v202
        %v217 = vmul.f32 %v164, %v203
        %v218 = vmul.f32 %v165, %v204
        %v219 = vmul.f32 %v166, %v205
        %v220 = vmul.f32 %v167, %v206
        %v221 = vmul.f32 %v168, %v207
        %v222 = vmul.f32 %v169, %v208
        %v223 = vmul.f32 %v170, %v195
        %v224 = vmul.f32 %v171, %v196
        %v225 = vmul.f32 %v172, %v197
        %v226 = vmul.f32 %v173, %v198
        %v227 = vmul.f32 %v174, %v199
        %v228 = vmul.f32 %v175, %v200
        %v229 = vmul.f32 %v176, %v201
        %v230 = vmul.f32 %v177, %v202
        %v231 = vmul.f32 %v178, %v203
        %v232 = vmul.f32 %v179, %v204
        %v233 = vmul.f32 %v180, %v205
        %v234 = vmul.f32 %v181, %v206
        %v235 = vmul.f32 %v182, %v207
        %v236 = vmul.f32 %v183, %v208
        %s237 = scalar_lea.vmem %s0, 112
        %v238 = vld [vmem:[%s237] sm:$0xff]
        %v239 = vld [vmem:[%s237 + $0x8] sm:$0xff]
        %v240 = vld [vmem:[%s237 + $0x10] sm:$0xff]
        %v241 = vld [vmem:[%s237 + $0x18] sm:$0xff]
        %v242 = vld [vmem:[%s237 + $0x20] sm:$0xff]
        %v243 = vld [vmem:[%s237 + $0x28] sm:$0xff]
        %v244 = vld [vmem:[%s237 + $0x30] sm:$0xff]
        %v245 = vld [vmem:[%s237 + $0x38] sm:$0xff]
        %v246 = vld [vmem:[%s237 + $0x40] sm:$0xff]
        %v247 = vld [vmem:[%s237 + $0x48] sm:$0xff]
        %v248 = vld [vmem:[%s237 + $0x50] sm:$0xff]
        %v249 = vld [vmem:[%s237 + $0x58] sm:$0xff]
        %v250 = vld [vmem:[%s237 + $0x60] sm:$0xff]
        %v251 = vld [vmem:[%s237 + $0x68] sm:$0xff]
        %v252 = vld [vmem:[%s237 + $0x380] sm:$0xff]
        %v253 = vld [vmem:[%s237 + $0x388] sm:$0xff]
        %v254 = vld [vmem:[%s237 + $0x390] sm:$0xff]
        %v255 = vld [vmem:[%s237 + $0x398] sm:$0xff]
        %v256 = vld [vmem:[%s237 + $0x3a0] sm:$0xff]
        %v257 = vld [vmem:[%s237 + $0x3a8] sm:$0xff]
        %v258 = vld [vmem:[%s237 + $0x3b0] sm:$0xff]
        %v259 = vld [vmem:[%s237 + $0x3b8] sm:$0xff]
        %v260 = vld [vmem:[%s237 + $0x3c0] sm:$0xff]
        %v261 = vld [vmem:[%s237 + $0x3c8] sm:$0xff]
        %v262 = vld [vmem:[%s237 + $0x3d0] sm:$0xff]
        %v263 = vld [vmem:[%s237 + $0x3d8] sm:$0xff]
        %v264 = vld [vmem:[%s237 + $0x3e0] sm:$0xff]
        %v265 = vld [vmem:[%s237 + $0x3e8] sm:$0xff]
        %s266 = sadd.s32 14, %s184
        %s267 = smul.addr %s266, 4
        %s268 = scalar_lea.vmem %s142, %s267
        %v269 = vld [vmem:[%s268] sm:$0xff]
        %v270 = vld [vmem:[%s268 + $0x8] sm:$0xff]
        %v271 = vld [vmem:[%s268 + $0x10] sm:$0xff]
        %v272 = vld [vmem:[%s268 + $0x18] sm:$0xf]
        %v273 = vld [vmem:[%s268 + $0x1c] sm:$0xff]
        %v274 = vld [vmem:[%s268 + $0x24] sm:$0xff]
        %v275 = vld [vmem:[%s268 + $0x2c] sm:$0xff]
        %v276 = vld [vmem:[%s268 + $0x34] sm:$0xf]
        %v277 = vunpack.c.l.bf16 %v269
        %v278 = vunpack.c.h.bf16 %v269
        %v279 = vunpack.c.l.bf16 %v270
        %v280 = vunpack.c.h.bf16 %v270
        %v281 = vunpack.c.l.bf16 %v271
        %v282 = vunpack.c.h.bf16 %v271
        %v283 = vunpack.c.l.bf16 %v272
        %v284 = vunpack.c.l.bf16 %v273
        %v285 = vunpack.c.h.bf16 %v273
        %v286 = vunpack.c.l.bf16 %v274
        %v287 = vunpack.c.h.bf16 %v274
        %v288 = vunpack.c.l.bf16 %v275
        %v289 = vunpack.c.h.bf16 %v275
        %v290 = vunpack.c.l.bf16 %v276
        %v291 = vmul.f32 %v238, %v277
        %v292 = vmul.f32 %v239, %v278
        %v293 = vmul.f32 %v240, %v279
        %v294 = vmul.f32 %v241, %v280
        %v295 = vmul.f32 %v242, %v281
        %v296 = vmul.f32 %v243, %v282
        %v297 = vmul.f32 %v244, %v283
        %v298 = vmul.f32 %v245, %v284
        %v299 = vmul.f32 %v246, %v285
        %v300 = vmul.f32 %v247, %v286
        %v301 = vmul.f32 %v248, %v287
        %v302 = vmul.f32 %v249, %v288
        %v303 = vmul.f32 %v250, %v289
        %v304 = vmul.f32 %v251, %v290
        %v305 = vmul.f32 %v252, %v277
        %v306 = vmul.f32 %v253, %v278
        %v307 = vmul.f32 %v254, %v279
        %v308 = vmul.f32 %v255, %v280
        %v309 = vmul.f32 %v256, %v281
        %v310 = vmul.f32 %v257, %v282
        %v311 = vmul.f32 %v258, %v283
        %v312 = vmul.f32 %v259, %v284
        %v313 = vmul.f32 %v260, %v285
        %v314 = vmul.f32 %v261, %v286
        %v315 = vmul.f32 %v262, %v287
        %v316 = vmul.f32 %v263, %v288
        %v317 = vmul.f32 %v264, %v289
        %v318 = vmul.f32 %v265, %v290
        %v319 = vadd.f32 %v209, %v291
        %v320 = vadd.f32 %v210, %v292
        %v321 = vadd.f32 %v211, %v293
        %v322 = vadd.f32 %v212, %v294
        %v323 = vadd.f32 %v213, %v295
        %v324 = vadd.f32 %v214, %v296
        %v325 = vadd.f32 %v215, %v297
        %v326 = vadd.f32 %v216, %v298
        %v327 = vadd.f32 %v217, %v299
        %v328 = vadd.f32 %v218, %v300
        %v329 = vadd.f32 %v219, %v301
        %v330 = vadd.f32 %v220, %v302
        %v331 = vadd.f32 %v221, %v303
        %v332 = vadd.f32 %v222, %v304
        %v333 = vadd.f32 %v223, %v305
        %v334 = vadd.f32 %v224, %v306
        %v335 = vadd.f32 %v225, %v307
        %v336 = vadd.f32 %v226, %v308
        %v337 = vadd.f32 %v227, %v309
        %v338 = vadd.f32 %v228, %v310
        %v339 = vadd.f32 %v229, %v311
        %v340 = vadd.f32 %v230, %v312
        %v341 = vadd.f32 %v231, %v313
        %v342 = vadd.f32 %v232, %v314
        %v343 = vadd.f32 %v233, %v315
        %v344 = vadd.f32 %v234, %v316
        %v345 = vadd.f32 %v235, %v317
        %v346 = vadd.f32 %v236, %v318
        %s347 = scalar_lea.vmem %s0, 224
        %v348 = vld [vmem:[%s347] sm:$0xff]
        %v349 = vld [vmem:[%s347 + $0x8] sm:$0xff]
        %v350 = vld [vmem:[%s347 + $0x10] sm:$0xff]
        %v351 = vld [vmem:[%s347 + $0x18] sm:$0xff]
        %v352 = vld [vmem:[%s347 + $0x20] sm:$0xff]
        %v353 = vld [vmem:[%s347 + $0x28] sm:$0xff]
        %v354 = vld [vmem:[%s347 + $0x30] sm:$0xff]
        %v355 = vld [vmem:[%s347 + $0x38] sm:$0xff]
        %v356 = vld [vmem:[%s347 + $0x40] sm:$0xff]
        %v357 = vld [vmem:[%s347 + $0x48] sm:$0xff]
        %v358 = vld [vmem:[%s347 + $0x50] sm:$0xff]
        %v359 = vld [vmem:[%s347 + $0x58] sm:$0xff]
        %v360 = vld [vmem:[%s347 + $0x60] sm:$0xff]
        %v361 = vld [vmem:[%s347 + $0x68] sm:$0xff]
        %v362 = vld [vmem:[%s347 + $0x380] sm:$0xff]
        %v363 = vld [vmem:[%s347 + $0x388] sm:$0xff]
        %v364 = vld [vmem:[%s347 + $0x390] sm:$0xff]
        %v365 = vld [vmem:[%s347 + $0x398] sm:$0xff]
        %v366 = vld [vmem:[%s347 + $0x3a0] sm:$0xff]
        %v367 = vld [vmem:[%s347 + $0x3a8] sm:$0xff]
        %v368 = vld [vmem:[%s347 + $0x3b0] sm:$0xff]
        %v369 = vld [vmem:[%s347 + $0x3b8] sm:$0xff]
        %v370 = vld [vmem:[%s347 + $0x3c0] sm:$0xff]
        %v371 = vld [vmem:[%s347 + $0x3c8] sm:$0xff]
        %v372 = vld [vmem:[%s347 + $0x3d0] sm:$0xff]
        %v373 = vld [vmem:[%s347 + $0x3d8] sm:$0xff]
        %v374 = vld [vmem:[%s347 + $0x3e0] sm:$0xff]
        %v375 = vld [vmem:[%s347 + $0x3e8] sm:$0xff]
        %s376 = sadd.s32 28, %s184
        %s377 = smul.addr %s376, 4
        %s378 = scalar_lea.vmem %s142, %s377
        %v379 = vld [vmem:[%s378] sm:$0xff]
        %v380 = vld [vmem:[%s378 + $0x8] sm:$0xff]
        %v381 = vld [vmem:[%s378 + $0x10] sm:$0xff]
        %v382 = vld [vmem:[%s378 + $0x18] sm:$0xf]
        %v383 = vld [vmem:[%s378 + $0x1c] sm:$0xff]
        %v384 = vld [vmem:[%s378 + $0x24] sm:$0xff]
        %v385 = vld [vmem:[%s378 + $0x2c] sm:$0xff]
        %v386 = vld [vmem:[%s378 + $0x34] sm:$0xf]
        %v387 = vunpack.c.l.bf16 %v379
        %v388 = vunpack.c.h.bf16 %v379
        %v389 = vunpack.c.l.bf16 %v380
        %v390 = vunpack.c.h.bf16 %v380
        %v391 = vunpack.c.l.bf16 %v381
        %v392 = vunpack.c.h.bf16 %v381
        %v393 = vunpack.c.l.bf16 %v382
        %v394 = vunpack.c.l.bf16 %v383
        %v395 = vunpack.c.h.bf16 %v383
        %v396 = vunpack.c.l.bf16 %v384
        %v397 = vunpack.c.h.bf16 %v384
        %v398 = vunpack.c.l.bf16 %v385
        %v399 = vunpack.c.h.bf16 %v385
        %v400 = vunpack.c.l.bf16 %v386
        %v401 = vmul.f32 %v348, %v387
        %v402 = vmul.f32 %v349, %v388
        %v403 = vmul.f32 %v350, %v389
        %v404 = vmul.f32 %v351, %v390
        %v405 = vmul.f32 %v352, %v391
        %v406 = vmul.f32 %v353, %v392
        %v407 = vmul.f32 %v354, %v393
        %v408 = vmul.f32 %v355, %v394
        %v409 = vmul.f32 %v356, %v395
        %v410 = vmul.f32 %v357, %v396
        %v411 = vmul.f32 %v358, %v397
        %v412 = vmul.f32 %v359, %v398
        %v413 = vmul.f32 %v360, %v399
        %v414 = vmul.f32 %v361, %v400
        %v415 = vmul.f32 %v362, %v387
        %v416 = vmul.f32 %v363, %v388
        %v417 = vmul.f32 %v364, %v389
        %v418 = vmul.f32 %v365, %v390
        %v419 = vmul.f32 %v366, %v391
        %v420 = vmul.f32 %v367, %v392
        %v421 = vmul.f32 %v368, %v393
        %v422 = vmul.f32 %v369, %v394
        %v423 = vmul.f32 %v370, %v395
        %v424 = vmul.f32 %v371, %v396
        %v425 = vmul.f32 %v372, %v397
        %v426 = vmul.f32 %v373, %v398
        %v427 = vmul.f32 %v374, %v399
        %v428 = vmul.f32 %v375, %v400
        %v429 = vadd.f32 %v319, %v401
        %v430 = vadd.f32 %v320, %v402
        %v431 = vadd.f32 %v321, %v403
        %v432 = vadd.f32 %v322, %v404
        %v433 = vadd.f32 %v323, %v405
        %v434 = vadd.f32 %v324, %v406
        %v435 = vadd.f32 %v325, %v407
        %v436 = vadd.f32 %v326, %v408
        %v437 = vadd.f32 %v327, %v409
        %v438 = vadd.f32 %v328, %v410
        %v439 = vadd.f32 %v329, %v411
        %v440 = vadd.f32 %v330, %v412
        %v441 = vadd.f32 %v331, %v413
        %v442 = vadd.f32 %v332, %v414
        %v443 = vadd.f32 %v333, %v415
        %v444 = vadd.f32 %v334, %v416
        %v445 = vadd.f32 %v335, %v417
        %v446 = vadd.f32 %v336, %v418
        %v447 = vadd.f32 %v337, %v419
        %v448 = vadd.f32 %v338, %v420
        %v449 = vadd.f32 %v339, %v421
        %v450 = vadd.f32 %v340, %v422
        %v451 = vadd.f32 %v341, %v423
        %v452 = vadd.f32 %v342, %v424
        %v453 = vadd.f32 %v343, %v425
        %v454 = vadd.f32 %v344, %v426
        %v455 = vadd.f32 %v345, %v427
        %v456 = vadd.f32 %v346, %v428
        %s457 = scalar_lea.vmem %s0, 336
        %v458 = vld [vmem:[%s457] sm:$0xff]
        %v459 = vld [vmem:[%s457 + $0x8] sm:$0xff]
        %v460 = vld [vmem:[%s457 + $0x10] sm:$0xff]
        %v461 = vld [vmem:[%s457 + $0x18] sm:$0xff]
        %v462 = vld [vmem:[%s457 + $0x20] sm:$0xff]
        %v463 = vld [vmem:[%s457 + $0x28] sm:$0xff]
        %v464 = vld [vmem:[%s457 + $0x30] sm:$0xff]
        %v465 = vld [vmem:[%s457 + $0x38] sm:$0xff]
        %v466 = vld [vmem:[%s457 + $0x40] sm:$0xff]
        %v467 = vld [vmem:[%s457 + $0x48] sm:$0xff]
        %v468 = vld [vmem:[%s457 + $0x50] sm:$0xff]
        %v469 = vld [vmem:[%s457 + $0x58] sm:$0xff]
        %v470 = vld [vmem:[%s457 + $0x60] sm:$0xff]
        %v471 = vld [vmem:[%s457 + $0x68] sm:$0xff]
        %v472 = vld [vmem:[%s457 + $0x380] sm:$0xff]
        %v473 = vld [vmem:[%s457 + $0x388] sm:$0xff]
        %v474 = vld [vmem:[%s457 + $0x390] sm:$0xff]
        %v475 = vld [vmem:[%s457 + $0x398] sm:$0xff]
        %v476 = vld [vmem:[%s457 + $0x3a0] sm:$0xff]
        %v477 = vld [vmem:[%s457 + $0x3a8] sm:$0xff]
        %v478 = vld [vmem:[%s457 + $0x3b0] sm:$0xff]
        %v479 = vld [vmem:[%s457 + $0x3b8] sm:$0xff]
        %v480 = vld [vmem:[%s457 + $0x3c0] sm:$0xff]
        %v481 = vld [vmem:[%s457 + $0x3c8] sm:$0xff]
        %v482 = vld [vmem:[%s457 + $0x3d0] sm:$0xff]
        %v483 = vld [vmem:[%s457 + $0x3d8] sm:$0xff]
        %v484 = vld [vmem:[%s457 + $0x3e0] sm:$0xff]
        %v485 = vld [vmem:[%s457 + $0x3e8] sm:$0xff]
        %s486 = sadd.s32 42, %s184
        %s487 = smul.addr %s486, 4
        %s488 = scalar_lea.vmem %s142, %s487
        %v489 = vld [vmem:[%s488] sm:$0xff]
        %v490 = vld [vmem:[%s488 + $0x8] sm:$0xff]
        %v491 = vld [vmem:[%s488 + $0x10] sm:$0xff]
        %v492 = vld [vmem:[%s488 + $0x18] sm:$0xf]
        %v493 = vld [vmem:[%s488 + $0x1c] sm:$0xff]
        %v494 = vld [vmem:[%s488 + $0x24] sm:$0xff]
        %v495 = vld [vmem:[%s488 + $0x2c] sm:$0xff]
        %v496 = vld [vmem:[%s488 + $0x34] sm:$0xf]
        %v497 = vunpack.c.l.bf16 %v489
        %v498 = vunpack.c.h.bf16 %v489
        %v499 = vunpack.c.l.bf16 %v490
        %v500 = vunpack.c.h.bf16 %v490
        %v501 = vunpack.c.l.bf16 %v491
        %v502 = vunpack.c.h.bf16 %v491
        %v503 = vunpack.c.l.bf16 %v492
        %v504 = vunpack.c.l.bf16 %v493
        %v505 = vunpack.c.h.bf16 %v493
        %v506 = vunpack.c.l.bf16 %v494
        %v507 = vunpack.c.h.bf16 %v494
        %v508 = vunpack.c.l.bf16 %v495
        %v509 = vunpack.c.h.bf16 %v495
        %v510 = vunpack.c.l.bf16 %v496
        %v511 = vmul.f32 %v458, %v497
        %v512 = vmul.f32 %v459, %v498
        %v513 = vmul.f32 %v460, %v499
        %v514 = vmul.f32 %v461, %v500
        %v515 = vmul.f32 %v462, %v501
        %v516 = vmul.f32 %v463, %v502
        %v517 = vmul.f32 %v464, %v503
        %v518 = vmul.f32 %v465, %v504
        %v519 = vmul.f32 %v466, %v505
        %v520 = vmul.f32 %v467, %v506
        %v521 = vmul.f32 %v468, %v507
        %v522 = vmul.f32 %v469, %v508
        %v523 = vmul.f32 %v470, %v509
        %v524 = vmul.f32 %v471, %v510
        %v525 = vmul.f32 %v472, %v497
        %v526 = vmul.f32 %v473, %v498
        %v527 = vmul.f32 %v474, %v499
        %v528 = vmul.f32 %v475, %v500
        %v529 = vmul.f32 %v476, %v501
        %v530 = vmul.f32 %v477, %v502
        %v531 = vmul.f32 %v478, %v503
        %v532 = vmul.f32 %v479, %v504
        %v533 = vmul.f32 %v480, %v505
        %v534 = vmul.f32 %v481, %v506
        %v535 = vmul.f32 %v482, %v507
        %v536 = vmul.f32 %v483, %v508
        %v537 = vmul.f32 %v484, %v509
        %v538 = vmul.f32 %v485, %v510
        %v539 = vadd.f32 %v429, %v511
        %v540 = vadd.f32 %v430, %v512
        %v541 = vadd.f32 %v431, %v513
        %v542 = vadd.f32 %v432, %v514
        %v543 = vadd.f32 %v433, %v515
        %v544 = vadd.f32 %v434, %v516
        %v545 = vadd.f32 %v435, %v517
        %v546 = vadd.f32 %v436, %v518
        %v547 = vadd.f32 %v437, %v519
        %v548 = vadd.f32 %v438, %v520
        %v549 = vadd.f32 %v439, %v521
        %v550 = vadd.f32 %v440, %v522
        %v551 = vadd.f32 %v441, %v523
        %v552 = vadd.f32 %v442, %v524
        %v553 = vadd.f32 %v443, %v525
        %v554 = vadd.f32 %v444, %v526
        %v555 = vadd.f32 %v445, %v527
        %v556 = vadd.f32 %v446, %v528
        %v557 = vadd.f32 %v447, %v529
        %v558 = vadd.f32 %v448, %v530
        %v559 = vadd.f32 %v449, %v531
        %v560 = vadd.f32 %v450, %v532
        %v561 = vadd.f32 %v451, %v533
        %v562 = vadd.f32 %v452, %v534
        %v563 = vadd.f32 %v453, %v535
        %v564 = vadd.f32 %v454, %v536
        %v565 = vadd.f32 %v455, %v537
        %v566 = vadd.f32 %v456, %v538
        %s567 = scalar_lea.vmem %s0, 448
        %v568 = vld [vmem:[%s567] sm:$0xff]
        %v569 = vld [vmem:[%s567 + $0x8] sm:$0xff]
        %v570 = vld [vmem:[%s567 + $0x10] sm:$0xff]
        %v571 = vld [vmem:[%s567 + $0x18] sm:$0xff]
        %v572 = vld [vmem:[%s567 + $0x20] sm:$0xff]
        %v573 = vld [vmem:[%s567 + $0x28] sm:$0xff]
        %v574 = vld [vmem:[%s567 + $0x30] sm:$0xff]
        %v575 = vld [vmem:[%s567 + $0x38] sm:$0xff]
        %v576 = vld [vmem:[%s567 + $0x40] sm:$0xff]
        %v577 = vld [vmem:[%s567 + $0x48] sm:$0xff]
        %v578 = vld [vmem:[%s567 + $0x50] sm:$0xff]
        %v579 = vld [vmem:[%s567 + $0x58] sm:$0xff]
        %v580 = vld [vmem:[%s567 + $0x60] sm:$0xff]
        %v581 = vld [vmem:[%s567 + $0x68] sm:$0xff]
        %v582 = vld [vmem:[%s567 + $0x380] sm:$0xff]
        %v583 = vld [vmem:[%s567 + $0x388] sm:$0xff]
        %v584 = vld [vmem:[%s567 + $0x390] sm:$0xff]
        %v585 = vld [vmem:[%s567 + $0x398] sm:$0xff]
        %v586 = vld [vmem:[%s567 + $0x3a0] sm:$0xff]
        %v587 = vld [vmem:[%s567 + $0x3a8] sm:$0xff]
        %v588 = vld [vmem:[%s567 + $0x3b0] sm:$0xff]
        %v589 = vld [vmem:[%s567 + $0x3b8] sm:$0xff]
        %v590 = vld [vmem:[%s567 + $0x3c0] sm:$0xff]
        %v591 = vld [vmem:[%s567 + $0x3c8] sm:$0xff]
        %v592 = vld [vmem:[%s567 + $0x3d0] sm:$0xff]
        %v593 = vld [vmem:[%s567 + $0x3d8] sm:$0xff]
        %v594 = vld [vmem:[%s567 + $0x3e0] sm:$0xff]
        %v595 = vld [vmem:[%s567 + $0x3e8] sm:$0xff]
        %s596 = sadd.s32 56, %s184
        %s597 = smul.addr %s596, 4
        %s598 = scalar_lea.vmem %s142, %s597
        %v599 = vld [vmem:[%s598] sm:$0xff]
        %v600 = vld [vmem:[%s598 + $0x8] sm:$0xff]
        %v601 = vld [vmem:[%s598 + $0x10] sm:$0xff]
        %v602 = vld [vmem:[%s598 + $0x18] sm:$0xf]
        %v603 = vld [vmem:[%s598 + $0x1c] sm:$0xff]
        %v604 = vld [vmem:[%s598 + $0x24] sm:$0xff]
        %v605 = vld [vmem:[%s598 + $0x2c] sm:$0xff]
        %v606 = vld [vmem:[%s598 + $0x34] sm:$0xf]
        %v607 = vunpack.c.l.bf16 %v599
        %v608 = vunpack.c.h.bf16 %v599
        %v609 = vunpack.c.l.bf16 %v600
        %v610 = vunpack.c.h.bf16 %v600
        %v611 = vunpack.c.l.bf16 %v601
        %v612 = vunpack.c.h.bf16 %v601
        %v613 = vunpack.c.l.bf16 %v602
        %v614 = vunpack.c.l.bf16 %v603
        %v615 = vunpack.c.h.bf16 %v603
        %v616 = vunpack.c.l.bf16 %v604
        %v617 = vunpack.c.h.bf16 %v604
        %v618 = vunpack.c.l.bf16 %v605
        %v619 = vunpack.c.h.bf16 %v605
        %v620 = vunpack.c.l.bf16 %v606
        %v621 = vmul.f32 %v568, %v607
        %v622 = vmul.f32 %v569, %v608
        %v623 = vmul.f32 %v570, %v609
        %v624 = vmul.f32 %v571, %v610
        %v625 = vmul.f32 %v572, %v611
        %v626 = vmul.f32 %v573, %v612
        %v627 = vmul.f32 %v574, %v613
        %v628 = vmul.f32 %v575, %v614
        %v629 = vmul.f32 %v576, %v615
        %v630 = vmul.f32 %v577, %v616
        %v631 = vmul.f32 %v578, %v617
        %v632 = vmul.f32 %v579, %v618
        %v633 = vmul.f32 %v580, %v619
        %v634 = vmul.f32 %v581, %v620
        %v635 = vmul.f32 %v582, %v607
        %v636 = vmul.f32 %v583, %v608
        %v637 = vmul.f32 %v584, %v609
        %v638 = vmul.f32 %v585, %v610
        %v639 = vmul.f32 %v586, %v611
        %v640 = vmul.f32 %v587, %v612
        %v641 = vmul.f32 %v588, %v613
        %v642 = vmul.f32 %v589, %v614
        %v643 = vmul.f32 %v590, %v615
        %v644 = vmul.f32 %v591, %v616
        %v645 = vmul.f32 %v592, %v617
        %v646 = vmul.f32 %v593, %v618
        %v647 = vmul.f32 %v594, %v619
        %v648 = vmul.f32 %v595, %v620
        %v649 = vadd.f32 %v539, %v621
        %v650 = vadd.f32 %v540, %v622
        %v651 = vadd.f32 %v541, %v623
        %v652 = vadd.f32 %v542, %v624
        %v653 = vadd.f32 %v543, %v625
        %v654 = vadd.f32 %v544, %v626
        %v655 = vadd.f32 %v545, %v627
        %v656 = vadd.f32 %v546, %v628
        %v657 = vadd.f32 %v547, %v629
        %v658 = vadd.f32 %v548, %v630
        %v659 = vadd.f32 %v549, %v631
        %v660 = vadd.f32 %v550, %v632
        %v661 = vadd.f32 %v551, %v633
        %v662 = vadd.f32 %v552, %v634
        %v663 = vadd.f32 %v553, %v635
        %v664 = vadd.f32 %v554, %v636
        %v665 = vadd.f32 %v555, %v637
        %v666 = vadd.f32 %v556, %v638
        %v667 = vadd.f32 %v557, %v639
        %v668 = vadd.f32 %v558, %v640
        %v669 = vadd.f32 %v559, %v641
        %v670 = vadd.f32 %v560, %v642
        %v671 = vadd.f32 %v561, %v643
        %v672 = vadd.f32 %v562, %v644
        %v673 = vadd.f32 %v563, %v645
        %v674 = vadd.f32 %v564, %v646
        %v675 = vadd.f32 %v565, %v647
        %v676 = vadd.f32 %v566, %v648
        %s677 = scalar_lea.vmem %s0, 560
        %v678 = vld [vmem:[%s677] sm:$0xff]
        %v679 = vld [vmem:[%s677 + $0x8] sm:$0xff]
        %v680 = vld [vmem:[%s677 + $0x10] sm:$0xff]
        %v681 = vld [vmem:[%s677 + $0x18] sm:$0xff]
        %v682 = vld [vmem:[%s677 + $0x20] sm:$0xff]
        %v683 = vld [vmem:[%s677 + $0x28] sm:$0xff]
        %v684 = vld [vmem:[%s677 + $0x30] sm:$0xff]
        %v685 = vld [vmem:[%s677 + $0x38] sm:$0xff]
        %v686 = vld [vmem:[%s677 + $0x40] sm:$0xff]
        %v687 = vld [vmem:[%s677 + $0x48] sm:$0xff]
        %v688 = vld [vmem:[%s677 + $0x50] sm:$0xff]
        %v689 = vld [vmem:[%s677 + $0x58] sm:$0xff]
        %v690 = vld [vmem:[%s677 + $0x60] sm:$0xff]
        %v691 = vld [vmem:[%s677 + $0x68] sm:$0xff]
        %v692 = vld [vmem:[%s677 + $0x380] sm:$0xff]
        %v693 = vld [vmem:[%s677 + $0x388] sm:$0xff]
        %v694 = vld [vmem:[%s677 + $0x390] sm:$0xff]
        %v695 = vld [vmem:[%s677 + $0x398] sm:$0xff]
        %v696 = vld [vmem:[%s677 + $0x3a0] sm:$0xff]
        %v697 = vld [vmem:[%s677 + $0x3a8] sm:$0xff]
        %v698 = vld [vmem:[%s677 + $0x3b0] sm:$0xff]
        %v699 = vld [vmem:[%s677 + $0x3b8] sm:$0xff]
        %v700 = vld [vmem:[%s677 + $0x3c0] sm:$0xff]
        %v701 = vld [vmem:[%s677 + $0x3c8] sm:$0xff]
        %v702 = vld [vmem:[%s677 + $0x3d0] sm:$0xff]
        %v703 = vld [vmem:[%s677 + $0x3d8] sm:$0xff]
        %v704 = vld [vmem:[%s677 + $0x3e0] sm:$0xff]
        %v705 = vld [vmem:[%s677 + $0x3e8] sm:$0xff]
        %s706 = sadd.s32 70, %s184
        %s707 = smul.addr %s706, 4
        %s708 = scalar_lea.vmem %s142, %s707
        %v709 = vld [vmem:[%s708] sm:$0xff]
        %v710 = vld [vmem:[%s708 + $0x8] sm:$0xff]
        %v711 = vld [vmem:[%s708 + $0x10] sm:$0xff]
        %v712 = vld [vmem:[%s708 + $0x18] sm:$0xf]
        %v713 = vld [vmem:[%s708 + $0x1c] sm:$0xff]
        %v714 = vld [vmem:[%s708 + $0x24] sm:$0xff]
        %v715 = vld [vmem:[%s708 + $0x2c] sm:$0xff]
        %v716 = vld [vmem:[%s708 + $0x34] sm:$0xf]
        %v717 = vunpack.c.l.bf16 %v709
        %v718 = vunpack.c.h.bf16 %v709
        %v719 = vunpack.c.l.bf16 %v710
        %v720 = vunpack.c.h.bf16 %v710
        %v721 = vunpack.c.l.bf16 %v711
        %v722 = vunpack.c.h.bf16 %v711
        %v723 = vunpack.c.l.bf16 %v712
        %v724 = vunpack.c.l.bf16 %v713
        %v725 = vunpack.c.h.bf16 %v713
        %v726 = vunpack.c.l.bf16 %v714
        %v727 = vunpack.c.h.bf16 %v714
        %v728 = vunpack.c.l.bf16 %v715
        %v729 = vunpack.c.h.bf16 %v715
        %v730 = vunpack.c.l.bf16 %v716
        %v731 = vmul.f32 %v678, %v717
        %v732 = vmul.f32 %v679, %v718
        %v733 = vmul.f32 %v680, %v719
        %v734 = vmul.f32 %v681, %v720
        %v735 = vmul.f32 %v682, %v721
        %v736 = vmul.f32 %v683, %v722
        %v737 = vmul.f32 %v684, %v723
        %v738 = vmul.f32 %v685, %v724
        %v739 = vmul.f32 %v686, %v725
        %v740 = vmul.f32 %v687, %v726
        %v741 = vmul.f32 %v688, %v727
        %v742 = vmul.f32 %v689, %v728
        %v743 = vmul.f32 %v690, %v729
        %v744 = vmul.f32 %v691, %v730
        %v745 = vmul.f32 %v692, %v717
        %v746 = vmul.f32 %v693, %v718
        %v747 = vmul.f32 %v694, %v719
        %v748 = vmul.f32 %v695, %v720
        %v749 = vmul.f32 %v696, %v721
        %v750 = vmul.f32 %v697, %v722
        %v751 = vmul.f32 %v698, %v723
        %v752 = vmul.f32 %v699, %v724
        %v753 = vmul.f32 %v700, %v725
        %v754 = vmul.f32 %v701, %v726
        %v755 = vmul.f32 %v702, %v727
        %v756 = vmul.f32 %v703, %v728
        %v757 = vmul.f32 %v704, %v729
        %v758 = vmul.f32 %v705, %v730
        %v759 = vadd.f32 %v649, %v731
        %v760 = vadd.f32 %v650, %v732
        %v761 = vadd.f32 %v651, %v733
        %v762 = vadd.f32 %v652, %v734
        %v763 = vadd.f32 %v653, %v735
        %v764 = vadd.f32 %v654, %v736
        %v765 = vadd.f32 %v655, %v737
        %v766 = vadd.f32 %v656, %v738
        %v767 = vadd.f32 %v657, %v739
        %v768 = vadd.f32 %v658, %v740
        %v769 = vadd.f32 %v659, %v741
        %v770 = vadd.f32 %v660, %v742
        %v771 = vadd.f32 %v661, %v743
        %v772 = vadd.f32 %v662, %v744
        %v773 = vadd.f32 %v663, %v745
        %v774 = vadd.f32 %v664, %v746
        %v775 = vadd.f32 %v665, %v747
        %v776 = vadd.f32 %v666, %v748
        %v777 = vadd.f32 %v667, %v749
        %v778 = vadd.f32 %v668, %v750
        %v779 = vadd.f32 %v669, %v751
        %v780 = vadd.f32 %v670, %v752
        %v781 = vadd.f32 %v671, %v753
        %v782 = vadd.f32 %v672, %v754
        %v783 = vadd.f32 %v673, %v755
        %v784 = vadd.f32 %v674, %v756
        %v785 = vadd.f32 %v675, %v757
        %v786 = vadd.f32 %v676, %v758
        %s787 = scalar_lea.vmem %s0, 672
        %v788 = vld [vmem:[%s787] sm:$0xff]
        %v789 = vld [vmem:[%s787 + $0x8] sm:$0xff]
        %v790 = vld [vmem:[%s787 + $0x10] sm:$0xff]
        %v791 = vld [vmem:[%s787 + $0x18] sm:$0xff]
        %v792 = vld [vmem:[%s787 + $0x20] sm:$0xff]
        %v793 = vld [vmem:[%s787 + $0x28] sm:$0xff]
        %v794 = vld [vmem:[%s787 + $0x30] sm:$0xff]
        %v795 = vld [vmem:[%s787 + $0x38] sm:$0xff]
        %v796 = vld [vmem:[%s787 + $0x40] sm:$0xff]
        %v797 = vld [vmem:[%s787 + $0x48] sm:$0xff]
        %v798 = vld [vmem:[%s787 + $0x50] sm:$0xff]
        %v799 = vld [vmem:[%s787 + $0x58] sm:$0xff]
        %v800 = vld [vmem:[%s787 + $0x60] sm:$0xff]
        %v801 = vld [vmem:[%s787 + $0x68] sm:$0xff]
        %v802 = vld [vmem:[%s787 + $0x380] sm:$0xff]
        %v803 = vld [vmem:[%s787 + $0x388] sm:$0xff]
        %v804 = vld [vmem:[%s787 + $0x390] sm:$0xff]
        %v805 = vld [vmem:[%s787 + $0x398] sm:$0xff]
        %v806 = vld [vmem:[%s787 + $0x3a0] sm:$0xff]
        %v807 = vld [vmem:[%s787 + $0x3a8] sm:$0xff]
        %v808 = vld [vmem:[%s787 + $0x3b0] sm:$0xff]
        %v809 = vld [vmem:[%s787 + $0x3b8] sm:$0xff]
        %v810 = vld [vmem:[%s787 + $0x3c0] sm:$0xff]
        %v811 = vld [vmem:[%s787 + $0x3c8] sm:$0xff]
        %v812 = vld [vmem:[%s787 + $0x3d0] sm:$0xff]
        %v813 = vld [vmem:[%s787 + $0x3d8] sm:$0xff]
        %v814 = vld [vmem:[%s787 + $0x3e0] sm:$0xff]
        %v815 = vld [vmem:[%s787 + $0x3e8] sm:$0xff]
        %s816 = sadd.s32 84, %s184
        %s817 = smul.addr %s816, 4
        %s818 = scalar_lea.vmem %s142, %s817
        %v819 = vld [vmem:[%s818] sm:$0xff]
        %v820 = vld [vmem:[%s818 + $0x8] sm:$0xff]
        %v821 = vld [vmem:[%s818 + $0x10] sm:$0xff]
        %v822 = vld [vmem:[%s818 + $0x18] sm:$0xf]
        %v823 = vld [vmem:[%s818 + $0x1c] sm:$0xff]
        %v824 = vld [vmem:[%s818 + $0x24] sm:$0xff]
        %v825 = vld [vmem:[%s818 + $0x2c] sm:$0xff]
        %v826 = vld [vmem:[%s818 + $0x34] sm:$0xf]
        %v827 = vunpack.c.l.bf16 %v819
        %v828 = vunpack.c.h.bf16 %v819
        %v829 = vunpack.c.l.bf16 %v820
        %v830 = vunpack.c.h.bf16 %v820
        %v831 = vunpack.c.l.bf16 %v821
        %v832 = vunpack.c.h.bf16 %v821
        %v833 = vunpack.c.l.bf16 %v822
        %v834 = vunpack.c.l.bf16 %v823
        %v835 = vunpack.c.h.bf16 %v823
        %v836 = vunpack.c.l.bf16 %v824
        %v837 = vunpack.c.h.bf16 %v824
        %v838 = vunpack.c.l.bf16 %v825
        %v839 = vunpack.c.h.bf16 %v825
        %v840 = vunpack.c.l.bf16 %v826
        %v841 = vmul.f32 %v788, %v827
        %v842 = vmul.f32 %v789, %v828
        %v843 = vmul.f32 %v790, %v829
        %v844 = vmul.f32 %v791, %v830
        %v845 = vmul.f32 %v792, %v831
        %v846 = vmul.f32 %v793, %v832
        %v847 = vmul.f32 %v794, %v833
        %v848 = vmul.f32 %v795, %v834
        %v849 = vmul.f32 %v796, %v835
        %v850 = vmul.f32 %v797, %v836
        %v851 = vmul.f32 %v798, %v837
        %v852 = vmul.f32 %v799, %v838
        %v853 = vmul.f32 %v800, %v839
        %v854 = vmul.f32 %v801, %v840
        %v855 = vmul.f32 %v802, %v827
        %v856 = vmul.f32 %v803, %v828
        %v857 = vmul.f32 %v804, %v829
        %v858 = vmul.f32 %v805, %v830
        %v859 = vmul.f32 %v806, %v831
        %v860 = vmul.f32 %v807, %v832
        %v861 = vmul.f32 %v808, %v833
        %v862 = vmul.f32 %v809, %v834
        %v863 = vmul.f32 %v810, %v835
        %v864 = vmul.f32 %v811, %v836
        %v865 = vmul.f32 %v812, %v837
        %v866 = vmul.f32 %v813, %v838
        %v867 = vmul.f32 %v814, %v839
        %v868 = vmul.f32 %v815, %v840
        %v869 = vadd.f32 %v759, %v841
        %v870 = vadd.f32 %v760, %v842
        %v871 = vadd.f32 %v761, %v843
        %v872 = vadd.f32 %v762, %v844
        %v873 = vadd.f32 %v763, %v845
        %v874 = vadd.f32 %v764, %v846
        %v875 = vadd.f32 %v765, %v847
        %v876 = vadd.f32 %v766, %v848
        %v877 = vadd.f32 %v767, %v849
        %v878 = vadd.f32 %v768, %v850
        %v879 = vadd.f32 %v769, %v851
        %v880 = vadd.f32 %v770, %v852
        %v881 = vadd.f32 %v771, %v853
        %v882 = vadd.f32 %v772, %v854
        %v883 = vadd.f32 %v773, %v855
        %v884 = vadd.f32 %v774, %v856
        %v885 = vadd.f32 %v775, %v857
        %v886 = vadd.f32 %v776, %v858
        %v887 = vadd.f32 %v777, %v859
        %v888 = vadd.f32 %v778, %v860
        %v889 = vadd.f32 %v779, %v861
        %v890 = vadd.f32 %v780, %v862
        %v891 = vadd.f32 %v781, %v863
        %v892 = vadd.f32 %v782, %v864
        %v893 = vadd.f32 %v783, %v865
        %v894 = vadd.f32 %v784, %v866
        %v895 = vadd.f32 %v785, %v867
        %v896 = vadd.f32 %v786, %v868
        %s897 = scalar_lea.vmem %s0, 784
        %v898 = vld [vmem:[%s897] sm:$0xff]
        %v899 = vld [vmem:[%s897 + $0x8] sm:$0xff]
        %v900 = vld [vmem:[%s897 + $0x10] sm:$0xff]
        %v901 = vld [vmem:[%s897 + $0x18] sm:$0xff]
        %v902 = vld [vmem:[%s897 + $0x20] sm:$0xff]
        %v903 = vld [vmem:[%s897 + $0x28] sm:$0xff]
        %v904 = vld [vmem:[%s897 + $0x30] sm:$0xff]
        %v905 = vld [vmem:[%s897 + $0x38] sm:$0xff]
        %v906 = vld [vmem:[%s897 + $0x40] sm:$0xff]
        %v907 = vld [vmem:[%s897 + $0x48] sm:$0xff]
        %v908 = vld [vmem:[%s897 + $0x50] sm:$0xff]
        %v909 = vld [vmem:[%s897 + $0x58] sm:$0xff]
        %v910 = vld [vmem:[%s897 + $0x60] sm:$0xff]
        %v911 = vld [vmem:[%s897 + $0x68] sm:$0xff]
        %v912 = vld [vmem:[%s897 + $0x380] sm:$0xff]
        %v913 = vld [vmem:[%s897 + $0x388] sm:$0xff]
        %v914 = vld [vmem:[%s897 + $0x390] sm:$0xff]
        %v915 = vld [vmem:[%s897 + $0x398] sm:$0xff]
        %v916 = vld [vmem:[%s897 + $0x3a0] sm:$0xff]
        %v917 = vld [vmem:[%s897 + $0x3a8] sm:$0xff]
        %v918 = vld [vmem:[%s897 + $0x3b0] sm:$0xff]
        %v919 = vld [vmem:[%s897 + $0x3b8] sm:$0xff]
        %v920 = vld [vmem:[%s897 + $0x3c0] sm:$0xff]
        %v921 = vld [vmem:[%s897 + $0x3c8] sm:$0xff]
        %v922 = vld [vmem:[%s897 + $0x3d0] sm:$0xff]
        %v923 = vld [vmem:[%s897 + $0x3d8] sm:$0xff]
        %v924 = vld [vmem:[%s897 + $0x3e0] sm:$0xff]
        %v925 = vld [vmem:[%s897 + $0x3e8] sm:$0xff]
        %s926 = sadd.s32 98, %s184
        %s927 = smul.addr %s926, 4
        %s928 = scalar_lea.vmem %s142, %s927
        %v929 = vld [vmem:[%s928] sm:$0xff]
        %v930 = vld [vmem:[%s928 + $0x8] sm:$0xff]
        %v931 = vld [vmem:[%s928 + $0x10] sm:$0xff]
        %v932 = vld [vmem:[%s928 + $0x18] sm:$0xf]
        %v933 = vld [vmem:[%s928 + $0x1c] sm:$0xff]
        %v934 = vld [vmem:[%s928 + $0x24] sm:$0xff]
        %v935 = vld [vmem:[%s928 + $0x2c] sm:$0xff]
        %v936 = vld [vmem:[%s928 + $0x34] sm:$0xf]
        %v937 = vunpack.c.l.bf16 %v929
        %v938 = vunpack.c.h.bf16 %v929
        %v939 = vunpack.c.l.bf16 %v930
        %v940 = vunpack.c.h.bf16 %v930
        %v941 = vunpack.c.l.bf16 %v931
        %v942 = vunpack.c.h.bf16 %v931
        %v943 = vunpack.c.l.bf16 %v932
        %v944 = vunpack.c.l.bf16 %v933
        %v945 = vunpack.c.h.bf16 %v933
        %v946 = vunpack.c.l.bf16 %v934
        %v947 = vunpack.c.h.bf16 %v934
        %v948 = vunpack.c.l.bf16 %v935
        %v949 = vunpack.c.h.bf16 %v935
        %v950 = vunpack.c.l.bf16 %v936
        %v951 = vmul.f32 %v898, %v937
        %v952 = vmul.f32 %v899, %v938
        %v953 = vmul.f32 %v900, %v939
        %v954 = vmul.f32 %v901, %v940
        %v955 = vmul.f32 %v902, %v941
        %v956 = vmul.f32 %v903, %v942
        %v957 = vmul.f32 %v904, %v943
        %v958 = vmul.f32 %v905, %v944
        %v959 = vmul.f32 %v906, %v945
        %v960 = vmul.f32 %v907, %v946
        %v961 = vmul.f32 %v908, %v947
        %v962 = vmul.f32 %v909, %v948
        %v963 = vmul.f32 %v910, %v949
        %v964 = vmul.f32 %v911, %v950
        %v965 = vmul.f32 %v912, %v937
        %v966 = vmul.f32 %v913, %v938
        %v967 = vmul.f32 %v914, %v939
        %v968 = vmul.f32 %v915, %v940
        %v969 = vmul.f32 %v916, %v941
        %v970 = vmul.f32 %v917, %v942
        %v971 = vmul.f32 %v918, %v943
        %v972 = vmul.f32 %v919, %v944
        %v973 = vmul.f32 %v920, %v945
        %v974 = vmul.f32 %v921, %v946
        %v975 = vmul.f32 %v922, %v947
        %v976 = vmul.f32 %v923, %v948
        %v977 = vmul.f32 %v924, %v949
        %v978 = vmul.f32 %v925, %v950
        %v979 = vadd.f32 %v869, %v951
        %v980 = vadd.f32 %v870, %v952
        %v981 = vadd.f32 %v871, %v953
        %v982 = vadd.f32 %v872, %v954
        %v983 = vadd.f32 %v873, %v955
        %v984 = vadd.f32 %v874, %v956
        %v985 = vadd.f32 %v875, %v957
        %v986 = vadd.f32 %v876, %v958
        %v987 = vadd.f32 %v877, %v959
        %v988 = vadd.f32 %v878, %v960
        %v989 = vadd.f32 %v879, %v961
        %v990 = vadd.f32 %v880, %v962
        %v991 = vadd.f32 %v881, %v963
        %v992 = vadd.f32 %v882, %v964
        %v993 = vadd.f32 %v883, %v965
        %v994 = vadd.f32 %v884, %v966
        %v995 = vadd.f32 %v885, %v967
        %v996 = vadd.f32 %v886, %v968
        %v997 = vadd.f32 %v887, %v969
        %v998 = vadd.f32 %v888, %v970
        %v999 = vadd.f32 %v889, %v971
        %v1000 = vadd.f32 %v890, %v972
        %v1001 = vadd.f32 %v891, %v973
        %v1002 = vadd.f32 %v892, %v974
        %v1003 = vadd.f32 %v893, %v975
        %v1004 = vadd.f32 %v894, %v976
        %v1005 = vadd.f32 %v895, %v977
        %v1006 = vadd.f32 %v896, %v978
        %vm1007 = vcmask 261120
        %v1008 = vsel %vm1007, 1.0, 0.0
        %v1009 = vadd.f32 %v1008, 6.0
        %1010 = vadd.xlane.f32.xlu0 %v1009
        %v1011 = vpop.xlane.xlu0 %1010
        %v1012 = vrcp.pop %v1011
        %v1013 = vmul.f32 %v1012, %v979
        %v1014 = vmul.f32 %v1012, %v980
        %v1015 = vmul.f32 %v1012, %v981
        %v1016 = vmul.f32 %v1012, %v982
        %v1017 = vmul.f32 %v1012, %v983
        %v1018 = vmul.f32 %v1012, %v984
        %v1019 = vmul.f32 %v1012, %v985
        %v1020 = vmul.f32 %v1012, %v986
        %v1021 = vmul.f32 %v1012, %v987
        %v1022 = vmul.f32 %v1012, %v988
        %v1023 = vmul.f32 %v1012, %v989
        %v1024 = vmul.f32 %v1012, %v990
        %v1025 = vmul.f32 %v1012, %v991
        %v1026 = vmul.f32 %v1012, %v992
        %v1027 = vmul.f32 %v1012, %v993
        %v1028 = vmul.f32 %v1012, %v994
        %v1029 = vmul.f32 %v1012, %v995
        %v1030 = vmul.f32 %v1012, %v996
        %v1031 = vmul.f32 %v1012, %v997
        %v1032 = vmul.f32 %v1012, %v998
        %v1033 = vmul.f32 %v1012, %v999
        %v1034 = vmul.f32 %v1012, %v1000
        %v1035 = vmul.f32 %v1012, %v1001
        %v1036 = vmul.f32 %v1012, %v1002
        %v1037 = vmul.f32 %v1012, %v1003
        %v1038 = vmul.f32 %v1012, %v1004
        %v1039 = vmul.f32 %v1012, %v1005
        %v1040 = vmul.f32 %v1012, %v1006
        %v1041 = vadd.f32 %v1013, %v1014
        %v1042 = vadd.f32 %v1041, %v1015
        %v1043 = vadd.f32 %v1042, %v1016
        %v1044 = vadd.f32 %v1043, %v1017
        %v1045 = vadd.f32 %v1044, %v1018
        %v1046 = vsel %vm1007, %v1019, 0.0
        %v1047 = vadd.f32 %v1045, %v1046
        %1048 = vadd.xlane.f32.xlu0 %v1047
        %v1049 = vpop.xlane.xlu0 %1048
        %v1050 = vadd.f32 %v1020, %v1021
        %v1051 = vadd.f32 %v1050, %v1022
        %v1052 = vadd.f32 %v1051, %v1023
        %v1053 = vadd.f32 %v1052, %v1024
        %v1054 = vadd.f32 %v1053, %v1025
        %v1055 = vsel %vm1007, %v1026, 0.0
        %v1056 = vadd.f32 %v1054, %v1055
        %1057 = vadd.xlane.f32.xlu0 %v1056
        %v1058 = vpop.xlane.xlu0 %1057
        %v1059 = vadd.f32 %v1027, %v1028
        %v1060 = vadd.f32 %v1059, %v1029
        %v1061 = vadd.f32 %v1060, %v1030
        %v1062 = vadd.f32 %v1061, %v1031
        %v1063 = vadd.f32 %v1062, %v1032
        %v1064 = vsel %vm1007, %v1033, 0.0
        %v1065 = vadd.f32 %v1063, %v1064
        %1066 = vadd.xlane.f32.xlu0 %v1065
        %v1067 = vpop.xlane.xlu0 %1066
        %v1068 = vadd.f32 %v1034, %v1035
        %v1069 = vadd.f32 %v1068, %v1036
        %v1070 = vadd.f32 %v1069, %v1037
        %v1071 = vadd.f32 %v1070, %v1038
        %v1072 = vadd.f32 %v1071, %v1039
        %v1073 = vsel %vm1007, %v1040, 0.0
        %v1074 = vadd.f32 %v1072, %v1073
        %1075 = vadd.xlane.f32.xlu0 %v1074
        %v1076 = vpop.xlane.xlu0 %1075
        %v1077 = vmul.f32 %v1049, %v1049
        %v1078 = vmul.f32 %v1058, %v1058
        %v1079 = vmul.f32 %v1067, %v1067
        %v1080 = vmul.f32 %v1076, %v1076
        %v1085 = vlaneseq
        %v1086 = vand.u32 %v1085, 127
        %v1087 = vperm.slane %v1077, %v1086
        %v1088 = vadd.s32 %v1086, 4294967288
        %v1089 = vperm.slane %v1078, %v1088
        %vm1090 = vcmask 130112
        %v1091 = vsel %vm1090, %v1089, %v1087
        %v1092 = vperm.slane %v1079, %v1086
        %v1093 = vperm.slane %v1080, %v1088
        %v1094 = vsel %vm1090, %v1093, %v1092
        %vm1095 = vcmask 1041409
        %v1096 = vsel %vm1095, %v1094, %v1091
        %vm1098 = vcmask 123904
        %v1099 = vsel %vm1098, %v1096, 0.0
        %1100 = vadd.xlane.f32.xlu0 %v1099
        %v1101 = vpop.xlane.xlu0 %1100
        %v1102 = vrsqrt.pop %v1101
        %v1103 = vmul.f32 %v1102, %v1101
        %v1104 = vmul.f32 %v1103, %v1102
        %v1105 = vmul.f32 0.5, %v1104
        %v1106 = vsub.f32 1.5, %v1105
        %v1107 = vmul.f32 %v1102, %v1106
        %v1108 = vmul.f32 %v1101, %v1107
        %vm1109 = vcmp.eq.f32.partialorder %v1101, inf
        %v1110 = vsel %vm1109, %v1101, %v1108
        %vm1111 = vcmp.eq.f32.partialorder %v1101, 0.0
        %v1112 = vand.u32 %v1101, 2147483648
        %v1113 = vsel %vm1111, %v1112, %v1110
        %v1114 = vadd.f32 %v1101, 1.0
        %v1115 = vrcp.pop %v1114
        %v1116 = vmul.f32 %v1113, %v1115
        %v1118 = vperm.slane %v1116, 0
        %v1119 = vperm.slane %v1116, 1
        %v1122 = vmul.f32 %v1049, %v1118
        %v1123 = vmul.f32 %v1058, %v1118
        %v1124 = vmul.f32 %v1067, %v1119
        %v1125 = vmul.f32 %v1076, %v1119
        %1127 = vset.pattern.permute.xlu0 0
        %1128 = vperm.xlu0 %1127, %v1122
        %v1129 = vpop.permute.xlu0 %1128
        %1132 = vset.pattern.permute.xlu0 0
        %1133 = vperm.xlu0 %1132, %v1123
        %v1134 = vpop.permute.xlu0 %1133
        %1137 = vset.pattern.permute.xlu0 0
        %1138 = vperm.xlu0 %1137, %v1124
        %v1139 = vpop.permute.xlu0 %1138
        %1142 = vset.pattern.permute.xlu0 0
        %1143 = vperm.xlu0 %1142, %v1125
        %v1144 = vpop.permute.xlu0 %1143
        %v1146 = vmul.f32 %v979, %v1129
        %v1147 = vmul.f32 %v980, %v1129
        %v1148 = vmul.f32 %v981, %v1129
        %v1149 = vmul.f32 %v982, %v1129
        %v1150 = vmul.f32 %v983, %v1129
        %v1151 = vmul.f32 %v984, %v1129
        %v1152 = vmul.f32 %v985, %v1129
        %v1153 = vmul.f32 %v986, %v1134
        %v1154 = vmul.f32 %v987, %v1134
        %v1155 = vmul.f32 %v988, %v1134
        %v1156 = vmul.f32 %v989, %v1134
        %v1157 = vmul.f32 %v990, %v1134
        %v1158 = vmul.f32 %v991, %v1134
        %v1159 = vmul.f32 %v992, %v1134
        %v1160 = vmul.f32 %v993, %v1139
        %v1161 = vmul.f32 %v994, %v1139
        %v1162 = vmul.f32 %v995, %v1139
        %v1163 = vmul.f32 %v996, %v1139
        %v1164 = vmul.f32 %v997, %v1139
        %v1165 = vmul.f32 %v998, %v1139
        %v1166 = vmul.f32 %v999, %v1139
        %v1167 = vmul.f32 %v1000, %v1144
        %v1168 = vmul.f32 %v1001, %v1144
        %v1169 = vmul.f32 %v1002, %v1144
        %v1170 = vmul.f32 %v1003, %v1144
        %v1171 = vmul.f32 %v1004, %v1144
        %v1172 = vmul.f32 %v1005, %v1144
        %v1173 = vmul.f32 %v1006, %v1144
        %v1174 = vadd.f32 %v1146, %v1153
        %v1175 = vrot.slane %v1174, 4
        %v1176 = vadd.f32 %v1174, %v1175
        %v1177 = vrot.slane %v1176, 2
        %v1178 = vadd.f32 %v1176, %v1177
        %v1179 = vrot.slane %v1178, 1
        %v1180 = vadd.f32 %v1178, %v1179
        %v1181 = vadd.f32 %v1147, %v1154
        %v1182 = vrot.slane %v1181, 4
        %v1183 = vadd.f32 %v1181, %v1182
        %v1184 = vrot.slane %v1183, 2
        %v1185 = vadd.f32 %v1183, %v1184
        %v1186 = vrot.slane %v1185, 1
        %v1187 = vadd.f32 %v1185, %v1186
        %v1188 = vadd.f32 %v1148, %v1155
        %v1189 = vrot.slane %v1188, 4
        %v1190 = vadd.f32 %v1188, %v1189
        %v1191 = vrot.slane %v1190, 2
        %v1192 = vadd.f32 %v1190, %v1191
        %v1193 = vrot.slane %v1192, 1
        %v1194 = vadd.f32 %v1192, %v1193
        %v1195 = vadd.f32 %v1149, %v1156
        %v1196 = vrot.slane %v1195, 4
        %v1197 = vadd.f32 %v1195, %v1196
        %v1198 = vrot.slane %v1197, 2
        %v1199 = vadd.f32 %v1197, %v1198
        %v1200 = vrot.slane %v1199, 1
        %v1201 = vadd.f32 %v1199, %v1200
        %v1202 = vadd.f32 %v1150, %v1157
        %v1203 = vrot.slane %v1202, 4
        %v1204 = vadd.f32 %v1202, %v1203
        %v1205 = vrot.slane %v1204, 2
        %v1206 = vadd.f32 %v1204, %v1205
        %v1207 = vrot.slane %v1206, 1
        %v1208 = vadd.f32 %v1206, %v1207
        %v1209 = vadd.f32 %v1151, %v1158
        %v1210 = vrot.slane %v1209, 4
        %v1211 = vadd.f32 %v1209, %v1210
        %v1212 = vrot.slane %v1211, 2
        %v1213 = vadd.f32 %v1211, %v1212
        %v1214 = vrot.slane %v1213, 1
        %v1215 = vadd.f32 %v1213, %v1214
        %v1216 = vsel %vm1007, %v1152, 0.0
        %v1217 = vsel %vm1007, %v1159, 0.0
        %v1218 = vadd.f32 %v1216, %v1217
        %v1219 = vrot.slane %v1218, 4
        %v1220 = vadd.f32 %v1218, %v1219
        %v1221 = vrot.slane %v1220, 2
        %v1222 = vadd.f32 %v1220, %v1221
        %v1223 = vrot.slane %v1222, 1
        %v1224 = vadd.f32 %v1222, %v1223
        %v1225 = vadd.f32 %v1160, %v1167
        %v1226 = vrot.slane %v1225, 4
        %v1227 = vadd.f32 %v1225, %v1226
        %v1228 = vrot.slane %v1227, 2
        %v1229 = vadd.f32 %v1227, %v1228
        %v1230 = vrot.slane %v1229, 1
        %v1231 = vadd.f32 %v1229, %v1230
        %v1232 = vadd.f32 %v1161, %v1168
        %v1233 = vrot.slane %v1232, 4
        %v1234 = vadd.f32 %v1232, %v1233
        %v1235 = vrot.slane %v1234, 2
        %v1236 = vadd.f32 %v1234, %v1235
        %v1237 = vrot.slane %v1236, 1
        %v1238 = vadd.f32 %v1236, %v1237
        %v1239 = vadd.f32 %v1162, %v1169
        %v1240 = vrot.slane %v1239, 4
        %v1241 = vadd.f32 %v1239, %v1240
        %v1242 = vrot.slane %v1241, 2
        %v1243 = vadd.f32 %v1241, %v1242
        %v1244 = vrot.slane %v1243, 1
        %v1245 = vadd.f32 %v1243, %v1244
        %v1246 = vadd.f32 %v1163, %v1170
        %v1247 = vrot.slane %v1246, 4
        %v1248 = vadd.f32 %v1246, %v1247
        %v1249 = vrot.slane %v1248, 2
        %v1250 = vadd.f32 %v1248, %v1249
        %v1251 = vrot.slane %v1250, 1
        %v1252 = vadd.f32 %v1250, %v1251
        %v1253 = vadd.f32 %v1164, %v1171
        %v1254 = vrot.slane %v1253, 4
        %v1255 = vadd.f32 %v1253, %v1254
        %v1256 = vrot.slane %v1255, 2
        %v1257 = vadd.f32 %v1255, %v1256
        %v1258 = vrot.slane %v1257, 1
        %v1259 = vadd.f32 %v1257, %v1258
        %v1260 = vadd.f32 %v1165, %v1172
        %v1261 = vrot.slane %v1260, 4
        %v1262 = vadd.f32 %v1260, %v1261
        %v1263 = vrot.slane %v1262, 2
        %v1264 = vadd.f32 %v1262, %v1263
        %v1265 = vrot.slane %v1264, 1
        %v1266 = vadd.f32 %v1264, %v1265
        %v1267 = vsel %vm1007, %v1166, 0.0
        %v1268 = vsel %vm1007, %v1173, 0.0
        %v1269 = vadd.f32 %v1267, %v1268
        %v1270 = vrot.slane %v1269, 4
        %v1271 = vadd.f32 %v1269, %v1270
        %v1272 = vrot.slane %v1271, 2
        %v1273 = vadd.f32 %v1271, %v1272
        %v1274 = vrot.slane %v1273, 1
        %v1275 = vadd.f32 %v1273, %v1274
        %v1276 = vadd.f32 %v1180, 0.0
        %v1277 = vadd.f32 %v1187, 0.0
        %v1278 = vadd.f32 %v1194, 0.0
        %v1279 = vadd.f32 %v1201, 0.0
        %v1280 = vadd.f32 %v1208, 0.0
        %v1281 = vadd.f32 %v1215, 0.0
        %v1282 = vadd.f32 %v1224, 0.0
        %v1283 = vadd.f32 %v1231, 0.0
        %v1284 = vadd.f32 %v1238, 0.0
        %v1285 = vadd.f32 %v1245, 0.0
        %v1286 = vadd.f32 %v1252, 0.0
        %v1287 = vadd.f32 %v1259, 0.0
        %v1288 = vadd.f32 %v1266, 0.0
        %v1289 = vadd.f32 %v1275, 0.0
        %v1304 = vsel %vm1095, %v1283, %v1276
        %v1305 = vsel %vm1095, %v1284, %v1277
        %v1306 = vsel %vm1095, %v1285, %v1278
        %v1307 = vsel %vm1095, %v1286, %v1279
        %v1308 = vsel %vm1095, %v1287, %v1280
        %v1309 = vsel %vm1095, %v1288, %v1281
        %v1310 = vsel %vm1095, %v1289, %v1282
        %vm1318 = vcmask 1041408
        %v1319 = vsel %vm1318, %v1304, -inf
        %v1320 = vsel %vm1318, %v1305, -inf
        %v1321 = vsel %vm1318, %v1306, -inf
        %v1322 = vsel %vm1318, %v1307, -inf
        %v1323 = vsel %vm1318, %v1308, -inf
        %v1324 = vmax.f32 %v1319, %v1323
        %v1325 = vsel %vm1318, %v1309, -inf
        %v1326 = vmax.f32 %v1320, %v1325
        %vm1327 = vcmask 254976
        %v1328 = vsel %vm1327, %v1310, -inf
        %v1329 = vmax.f32 %v1321, %v1328
        %v1330 = vmax.f32 %v1324, %v1326
        %v1331 = vmax.f32 %v1329, %v1322
        %v1332 = vmax.f32 %v1330, %v1331
        %1333 = vmax.xlane.f32.xlu0 %v1332
        %v1334 = vpop.xlane.xlu0 %1333
        %v1336 = vrot.slane %v1334, 1
        %v1339 = vsub.f32 %v1276, %v1334
        %v1340 = vsub.f32 %v1277, %v1334
        %v1341 = vsub.f32 %v1278, %v1334
        %v1342 = vsub.f32 %v1279, %v1334
        %v1343 = vsub.f32 %v1280, %v1334
        %v1344 = vsub.f32 %v1281, %v1334
        %v1345 = vsub.f32 %v1282, %v1334
        %v1346 = vsub.f32 %v1283, %v1336
        %v1347 = vsub.f32 %v1284, %v1336
        %v1348 = vsub.f32 %v1285, %v1336
        %v1349 = vsub.f32 %v1286, %v1336
        %v1350 = vsub.f32 %v1287, %v1336
        %v1351 = vsub.f32 %v1288, %v1336
        %v1352 = vsub.f32 %v1289, %v1336
        %v1353 = vmul.f32 %v1339, 1.442695
        %v1354 = vpow.pop %v1353
        %v1355 = vmul.f32 %v1340, 1.442695
        %v1356 = vpow.pop %v1355
        %v1357 = vmul.f32 %v1341, 1.442695
        %v1358 = vpow.pop %v1357
        %v1359 = vmul.f32 %v1342, 1.442695
        %v1360 = vpow.pop %v1359
        %v1361 = vmul.f32 %v1343, 1.442695
        %v1362 = vpow.pop %v1361
        %v1363 = vmul.f32 %v1344, 1.442695
        %v1364 = vpow.pop %v1363
        %v1365 = vmul.f32 %v1345, 1.442695
        %v1366 = vpow.pop %v1365
        %v1367 = vmul.f32 %v1346, 1.442695
        %v1368 = vpow.pop %v1367
        %v1369 = vmul.f32 %v1347, 1.442695
        %v1370 = vpow.pop %v1369
        %v1371 = vmul.f32 %v1348, 1.442695
        %v1372 = vpow.pop %v1371
        %v1373 = vmul.f32 %v1349, 1.442695
        %v1374 = vpow.pop %v1373
        %v1375 = vmul.f32 %v1350, 1.442695
        %v1376 = vpow.pop %v1375
        %v1377 = vmul.f32 %v1351, 1.442695
        %v1378 = vpow.pop %v1377
        %v1379 = vmul.f32 %v1352, 1.442695
        %v1380 = vpow.pop %v1379
        %v1395 = vrot.slane %v1368, 7
        %v1396 = vsel %vm1095, %v1395, %v1354
        %v1397 = vrot.slane %v1370, 7
        %v1398 = vsel %vm1095, %v1397, %v1356
        %v1399 = vrot.slane %v1372, 7
        %v1400 = vsel %vm1095, %v1399, %v1358
        %v1401 = vrot.slane %v1374, 7
        %v1402 = vsel %vm1095, %v1401, %v1360
        %v1403 = vrot.slane %v1376, 7
        %v1404 = vsel %vm1095, %v1403, %v1362
        %v1405 = vrot.slane %v1378, 7
        %v1406 = vsel %vm1095, %v1405, %v1364
        %v1407 = vrot.slane %v1380, 7
        %v1408 = vsel %vm1095, %v1407, %v1366
        %v1416 = vsel %vm1318, %v1396, 0.0
        %v1417 = vsel %vm1318, %v1398, 0.0
        %v1418 = vadd.f32 %v1416, %v1417
        %v1419 = vsel %vm1318, %v1400, 0.0
        %v1420 = vadd.f32 %v1418, %v1419
        %v1421 = vsel %vm1318, %v1402, 0.0
        %v1422 = vadd.f32 %v1420, %v1421
        %v1423 = vsel %vm1318, %v1404, 0.0
        %v1424 = vadd.f32 %v1422, %v1423
        %v1425 = vsel %vm1318, %v1406, 0.0
        %v1426 = vadd.f32 %v1424, %v1425
        %v1427 = vsel %vm1327, %v1408, 0.0
        %v1428 = vadd.f32 %v1426, %v1427
        %1429 = vadd.xlane.f32.xlu0 %v1428
        %v1430 = vpop.xlane.xlu0 %1429
        %v1431 = vrcp.pop %v1430
        %v1433 = vrot.slane %v1431, 1
        %v1436 = vmul.f32 %v1354, %v1431
        %v1437 = vmul.f32 %v1356, %v1431
        %v1438 = vmul.f32 %v1358, %v1431
        %v1439 = vmul.f32 %v1360, %v1431
        %v1440 = vmul.f32 %v1362, %v1431
        %v1441 = vmul.f32 %v1364, %v1431
        %v1442 = vmul.f32 %v1366, %v1431
        %v1443 = vmul.f32 %v1368, %v1433
        %v1444 = vmul.f32 %v1370, %v1433
        %v1445 = vmul.f32 %v1372, %v1433
        %v1446 = vmul.f32 %v1374, %v1433
        %v1447 = vmul.f32 %v1376, %v1433
        %v1448 = vmul.f32 %v1378, %v1433
        %v1449 = vmul.f32 %v1380, %v1433
        %v1450 = vperm.slane %v1436, 0
        %v1451 = vperm.slane %v1437, 0
        %v1452 = vperm.slane %v1438, 0
        %v1453 = vperm.slane %v1439, 0
        %v1454 = vperm.slane %v1440, 0
        %v1455 = vperm.slane %v1441, 0
        %v1456 = vperm.slane %v1442, 0
        %v1457 = vperm.slane %v1443, 0
        %v1458 = vperm.slane %v1444, 0
        %v1459 = vperm.slane %v1445, 0
        %v1460 = vperm.slane %v1446, 0
        %v1461 = vperm.slane %v1447, 0
        %v1462 = vperm.slane %v1448, 0
        %v1463 = vperm.slane %v1449, 0
        %v1464 = vmul.f32 %v1450, %v979
        %v1465 = vmul.f32 %v1451, %v980
        %v1466 = vmul.f32 %v1452, %v981
        %v1467 = vmul.f32 %v1453, %v982
        %v1468 = vmul.f32 %v1454, %v983
        %v1469 = vmul.f32 %v1455, %v984
        %v1470 = vmul.f32 %v1456, %v985
        %v1471 = vmul.f32 %v1450, %v986
        %v1472 = vmul.f32 %v1451, %v987
        %v1473 = vmul.f32 %v1452, %v988
        %v1474 = vmul.f32 %v1453, %v989
        %v1475 = vmul.f32 %v1454, %v990
        %v1476 = vmul.f32 %v1455, %v991
        %v1477 = vmul.f32 %v1456, %v992
        %v1478 = vmul.f32 %v1457, %v993
        %v1479 = vmul.f32 %v1458, %v994
        %v1480 = vmul.f32 %v1459, %v995
        %v1481 = vmul.f32 %v1460, %v996
        %v1482 = vmul.f32 %v1461, %v997
        %v1483 = vmul.f32 %v1462, %v998
        %v1484 = vmul.f32 %v1463, %v999
        %v1485 = vmul.f32 %v1457, %v1000
        %v1486 = vmul.f32 %v1458, %v1001
        %v1487 = vmul.f32 %v1459, %v1002
        %v1488 = vmul.f32 %v1460, %v1003
        %v1489 = vmul.f32 %v1461, %v1004
        %v1490 = vmul.f32 %v1462, %v1005
        %v1491 = vmul.f32 %v1463, %v1006
        %v1492 = vadd.f32 %v1464, %v1465
        %v1493 = vadd.f32 %v1492, %v1466
        %v1494 = vadd.f32 %v1493, %v1467
        %v1495 = vadd.f32 %v1494, %v1468
        %v1496 = vadd.f32 %v1495, %v1469
        %v1497 = vsel %vm1007, %v1470, 0.0
        %v1498 = vadd.f32 %v1496, %v1497
        %1499 = vadd.xlane.f32.xlu0 %v1498
        %v1500 = vpop.xlane.xlu0 %1499
        %v1501 = vadd.f32 %v1471, %v1472
        %v1502 = vadd.f32 %v1501, %v1473
        %v1503 = vadd.f32 %v1502, %v1474
        %v1504 = vadd.f32 %v1503, %v1475
        %v1505 = vadd.f32 %v1504, %v1476
        %v1506 = vsel %vm1007, %v1477, 0.0
        %v1507 = vadd.f32 %v1505, %v1506
        %1508 = vadd.xlane.f32.xlu0 %v1507
        %v1509 = vpop.xlane.xlu0 %1508
        %v1510 = vadd.f32 %v1478, %v1479
        %v1511 = vadd.f32 %v1510, %v1480
        %v1512 = vadd.f32 %v1511, %v1481
        %v1513 = vadd.f32 %v1512, %v1482
        %v1514 = vadd.f32 %v1513, %v1483
        %v1515 = vsel %vm1007, %v1484, 0.0
        %v1516 = vadd.f32 %v1514, %v1515
        %1517 = vadd.xlane.f32.xlu0 %v1516
        %v1518 = vpop.xlane.xlu0 %1517
        %v1519 = vadd.f32 %v1485, %v1486
        %v1520 = vadd.f32 %v1519, %v1487
        %v1521 = vadd.f32 %v1520, %v1488
        %v1522 = vadd.f32 %v1521, %v1489
        %v1523 = vadd.f32 %v1522, %v1490
        %v1524 = vsel %vm1007, %v1491, 0.0
        %v1525 = vadd.f32 %v1523, %v1524
        %1526 = vadd.xlane.f32.xlu0 %v1525
        %v1527 = vpop.xlane.xlu0 %1526
        %v1528 = vmul.f32 %v1500, %v1500
        %v1529 = vmul.f32 %v1509, %v1509
        %v1530 = vmul.f32 %v1518, %v1518
        %v1531 = vmul.f32 %v1527, %v1527
        %v1536 = vperm.slane %v1528, %v1086
        %v1537 = vperm.slane %v1529, %v1088
        %v1538 = vsel %vm1090, %v1537, %v1536
        %v1539 = vperm.slane %v1530, %v1086
        %v1540 = vperm.slane %v1531, %v1088
        %v1541 = vsel %vm1090, %v1540, %v1539
        %v1542 = vsel %vm1095, %v1541, %v1538
        %v1544 = vsel %vm1098, %v1542, 0.0
        %1545 = vadd.xlane.f32.xlu0 %v1544
        %v1546 = vpop.xlane.xlu0 %1545
        %v1547 = vrsqrt.pop %v1546
        %v1548 = vmul.f32 %v1547, %v1546
        %v1549 = vmul.f32 %v1548, %v1547
        %v1550 = vmul.f32 0.5, %v1549
        %v1551 = vsub.f32 1.5, %v1550
        %v1552 = vmul.f32 %v1547, %v1551
        %v1553 = vmul.f32 %v1546, %v1552
        %vm1554 = vcmp.eq.f32.partialorder %v1546, inf
        %v1555 = vsel %vm1554, %v1546, %v1553
        %vm1556 = vcmp.eq.f32.partialorder %v1546, 0.0
        %v1557 = vand.u32 %v1546, 2147483648
        %v1558 = vsel %vm1556, %v1557, %v1555
        %v1559 = vadd.f32 %v1546, 1.0
        %v1560 = vrcp.pop %v1559
        %v1561 = vmul.f32 %v1558, %v1560
        %v1563 = vperm.slane %v1561, 0
        %v1564 = vperm.slane %v1561, 1
        %v1567 = vmul.f32 %v1500, %v1563
        %v1568 = vmul.f32 %v1509, %v1563
        %v1569 = vmul.f32 %v1518, %v1564
        %v1570 = vmul.f32 %v1527, %v1564
        %1572 = vset.pattern.permute.xlu0 0
        %1573 = vperm.xlu0 %1572, %v1567
        %v1574 = vpop.permute.xlu0 %1573
        %1577 = vset.pattern.permute.xlu0 0
        %1578 = vperm.xlu0 %1577, %v1568
        %v1579 = vpop.permute.xlu0 %1578
        %1582 = vset.pattern.permute.xlu0 0
        %1583 = vperm.xlu0 %1582, %v1569
        %v1584 = vpop.permute.xlu0 %1583
        %1587 = vset.pattern.permute.xlu0 0
        %1588 = vperm.xlu0 %1587, %v1570
        %v1589 = vpop.permute.xlu0 %1588
        %v1591 = vmul.f32 %v979, %v1574
        %v1592 = vmul.f32 %v980, %v1574
        %v1593 = vmul.f32 %v981, %v1574
        %v1594 = vmul.f32 %v982, %v1574
        %v1595 = vmul.f32 %v983, %v1574
        %v1596 = vmul.f32 %v984, %v1574
        %v1597 = vmul.f32 %v985, %v1574
        %v1598 = vmul.f32 %v986, %v1579
        %v1599 = vmul.f32 %v987, %v1579
        %v1600 = vmul.f32 %v988, %v1579
        %v1601 = vmul.f32 %v989, %v1579
        %v1602 = vmul.f32 %v990, %v1579
        %v1603 = vmul.f32 %v991, %v1579
        %v1604 = vmul.f32 %v992, %v1579
        %v1605 = vmul.f32 %v993, %v1584
        %v1606 = vmul.f32 %v994, %v1584
        %v1607 = vmul.f32 %v995, %v1584
        %v1608 = vmul.f32 %v996, %v1584
        %v1609 = vmul.f32 %v997, %v1584
        %v1610 = vmul.f32 %v998, %v1584
        %v1611 = vmul.f32 %v999, %v1584
        %v1612 = vmul.f32 %v1000, %v1589
        %v1613 = vmul.f32 %v1001, %v1589
        %v1614 = vmul.f32 %v1002, %v1589
        %v1615 = vmul.f32 %v1003, %v1589
        %v1616 = vmul.f32 %v1004, %v1589
        %v1617 = vmul.f32 %v1005, %v1589
        %v1618 = vmul.f32 %v1006, %v1589
        %v1619 = vadd.f32 %v1591, %v1598
        %v1620 = vrot.slane %v1619, 4
        %v1621 = vadd.f32 %v1619, %v1620
        %v1622 = vrot.slane %v1621, 2
        %v1623 = vadd.f32 %v1621, %v1622
        %v1624 = vrot.slane %v1623, 1
        %v1625 = vadd.f32 %v1623, %v1624
        %v1626 = vadd.f32 %v1592, %v1599
        %v1627 = vrot.slane %v1626, 4
        %v1628 = vadd.f32 %v1626, %v1627
        %v1629 = vrot.slane %v1628, 2
        %v1630 = vadd.f32 %v1628, %v1629
        %v1631 = vrot.slane %v1630, 1
        %v1632 = vadd.f32 %v1630, %v1631
        %v1633 = vadd.f32 %v1593, %v1600
        %v1634 = vrot.slane %v1633, 4
        %v1635 = vadd.f32 %v1633, %v1634
        %v1636 = vrot.slane %v1635, 2
        %v1637 = vadd.f32 %v1635, %v1636
        %v1638 = vrot.slane %v1637, 1
        %v1639 = vadd.f32 %v1637, %v1638
        %v1640 = vadd.f32 %v1594, %v1601
        %v1641 = vrot.slane %v1640, 4
        %v1642 = vadd.f32 %v1640, %v1641
        %v1643 = vrot.slane %v1642, 2
        %v1644 = vadd.f32 %v1642, %v1643
        %v1645 = vrot.slane %v1644, 1
        %v1646 = vadd.f32 %v1644, %v1645
        %v1647 = vadd.f32 %v1595, %v1602
        %v1648 = vrot.slane %v1647, 4
        %v1649 = vadd.f32 %v1647, %v1648
        %v1650 = vrot.slane %v1649, 2
        %v1651 = vadd.f32 %v1649, %v1650
        %v1652 = vrot.slane %v1651, 1
        %v1653 = vadd.f32 %v1651, %v1652
        %v1654 = vadd.f32 %v1596, %v1603
        %v1655 = vrot.slane %v1654, 4
        %v1656 = vadd.f32 %v1654, %v1655
        %v1657 = vrot.slane %v1656, 2
        %v1658 = vadd.f32 %v1656, %v1657
        %v1659 = vrot.slane %v1658, 1
        %v1660 = vadd.f32 %v1658, %v1659
        %v1661 = vsel %vm1007, %v1597, 0.0
        %v1662 = vsel %vm1007, %v1604, 0.0
        %v1663 = vadd.f32 %v1661, %v1662
        %v1664 = vrot.slane %v1663, 4
        %v1665 = vadd.f32 %v1663, %v1664
        %v1666 = vrot.slane %v1665, 2
        %v1667 = vadd.f32 %v1665, %v1666
        %v1668 = vrot.slane %v1667, 1
        %v1669 = vadd.f32 %v1667, %v1668
        %v1670 = vadd.f32 %v1605, %v1612
        %v1671 = vrot.slane %v1670, 4
        %v1672 = vadd.f32 %v1670, %v1671
        %v1673 = vrot.slane %v1672, 2
        %v1674 = vadd.f32 %v1672, %v1673
        %v1675 = vrot.slane %v1674, 1
        %v1676 = vadd.f32 %v1674, %v1675
        %v1677 = vadd.f32 %v1606, %v1613
        %v1678 = vrot.slane %v1677, 4
        %v1679 = vadd.f32 %v1677, %v1678
        %v1680 = vrot.slane %v1679, 2
        %v1681 = vadd.f32 %v1679, %v1680
        %v1682 = vrot.slane %v1681, 1
        %v1683 = vadd.f32 %v1681, %v1682
        %v1684 = vadd.f32 %v1607, %v1614
        %v1685 = vrot.slane %v1684, 4
        %v1686 = vadd.f32 %v1684, %v1685
        %v1687 = vrot.slane %v1686, 2
        %v1688 = vadd.f32 %v1686, %v1687
        %v1689 = vrot.slane %v1688, 1
        %v1690 = vadd.f32 %v1688, %v1689
        %v1691 = vadd.f32 %v1608, %v1615
        %v1692 = vrot.slane %v1691, 4
        %v1693 = vadd.f32 %v1691, %v1692
        %v1694 = vrot.slane %v1693, 2
        %v1695 = vadd.f32 %v1693, %v1694
        %v1696 = vrot.slane %v1695, 1
        %v1697 = vadd.f32 %v1695, %v1696
        %v1698 = vadd.f32 %v1609, %v1616
        %v1699 = vrot.slane %v1698, 4
        %v1700 = vadd.f32 %v1698, %v1699
        %v1701 = vrot.slane %v1700, 2
        %v1702 = vadd.f32 %v1700, %v1701
        %v1703 = vrot.slane %v1702, 1
        %v1704 = vadd.f32 %v1702, %v1703
        %v1705 = vadd.f32 %v1610, %v1617
        %v1706 = vrot.slane %v1705, 4
        %v1707 = vadd.f32 %v1705, %v1706
        %v1708 = vrot.slane %v1707, 2
        %v1709 = vadd.f32 %v1707, %v1708
        %v1710 = vrot.slane %v1709, 1
        %v1711 = vadd.f32 %v1709, %v1710
        %v1712 = vsel %vm1007, %v1611, 0.0
        %v1713 = vsel %vm1007, %v1618, 0.0
        %v1714 = vadd.f32 %v1712, %v1713
        %v1715 = vrot.slane %v1714, 4
        %v1716 = vadd.f32 %v1714, %v1715
        %v1717 = vrot.slane %v1716, 2
        %v1718 = vadd.f32 %v1716, %v1717
        %v1719 = vrot.slane %v1718, 1
        %v1720 = vadd.f32 %v1718, %v1719
        %v1721 = vadd.f32 %v1276, %v1625
        %v1722 = vadd.f32 %v1277, %v1632
        %v1723 = vadd.f32 %v1278, %v1639
        %v1724 = vadd.f32 %v1279, %v1646
        %v1725 = vadd.f32 %v1280, %v1653
        %v1726 = vadd.f32 %v1281, %v1660
        %v1727 = vadd.f32 %v1282, %v1669
        %v1728 = vadd.f32 %v1283, %v1676
        %v1729 = vadd.f32 %v1284, %v1683
        %v1730 = vadd.f32 %v1285, %v1690
        %v1731 = vadd.f32 %v1286, %v1697
        %v1732 = vadd.f32 %v1287, %v1704
        %v1733 = vadd.f32 %v1288, %v1711
        %v1734 = vadd.f32 %v1289, %v1720
        %v1749 = vsel %vm1095, %v1728, %v1721
        %v1750 = vsel %vm1095, %v1729, %v1722
        %v1751 = vsel %vm1095, %v1730, %v1723
        %v1752 = vsel %vm1095, %v1731, %v1724
        %v1753 = vsel %vm1095, %v1732, %v1725
        %v1754 = vsel %vm1095, %v1733, %v1726
        %v1755 = vsel %vm1095, %v1734, %v1727
        %v1763 = vsel %vm1318, %v1749, -inf
        %v1764 = vsel %vm1318, %v1750, -inf
        %v1765 = vsel %vm1318, %v1751, -inf
        %v1766 = vsel %vm1318, %v1752, -inf
        %v1767 = vsel %vm1318, %v1753, -inf
        %v1768 = vmax.f32 %v1763, %v1767
        %v1769 = vsel %vm1318, %v1754, -inf
        %v1770 = vmax.f32 %v1764, %v1769
        %v1771 = vsel %vm1327, %v1755, -inf
        %v1772 = vmax.f32 %v1765, %v1771
        %v1773 = vmax.f32 %v1768, %v1770
        %v1774 = vmax.f32 %v1772, %v1766
        %v1775 = vmax.f32 %v1773, %v1774
        %1776 = vmax.xlane.f32.xlu0 %v1775
        %v1777 = vpop.xlane.xlu0 %1776
        %v1779 = vrot.slane %v1777, 1
        %v1782 = vsub.f32 %v1721, %v1777
        %v1783 = vsub.f32 %v1722, %v1777
        %v1784 = vsub.f32 %v1723, %v1777
        %v1785 = vsub.f32 %v1724, %v1777
        %v1786 = vsub.f32 %v1725, %v1777
        %v1787 = vsub.f32 %v1726, %v1777
        %v1788 = vsub.f32 %v1727, %v1777
        %v1789 = vsub.f32 %v1728, %v1779
        %v1790 = vsub.f32 %v1729, %v1779
        %v1791 = vsub.f32 %v1730, %v1779
        %v1792 = vsub.f32 %v1731, %v1779
        %v1793 = vsub.f32 %v1732, %v1779
        %v1794 = vsub.f32 %v1733, %v1779
        %v1795 = vsub.f32 %v1734, %v1779
        %v1796 = vmul.f32 %v1782, 1.442695
        %v1797 = vpow.pop %v1796
        %v1798 = vmul.f32 %v1783, 1.442695
        %v1799 = vpow.pop %v1798
        %v1800 = vmul.f32 %v1784, 1.442695
        %v1801 = vpow.pop %v1800
        %v1802 = vmul.f32 %v1785, 1.442695
        %v1803 = vpow.pop %v1802
        %v1804 = vmul.f32 %v1786, 1.442695
        %v1805 = vpow.pop %v1804
        %v1806 = vmul.f32 %v1787, 1.442695
        %v1807 = vpow.pop %v1806
        %v1808 = vmul.f32 %v1788, 1.442695
        %v1809 = vpow.pop %v1808
        %v1810 = vmul.f32 %v1789, 1.442695
        %v1811 = vpow.pop %v1810
        %v1812 = vmul.f32 %v1790, 1.442695
        %v1813 = vpow.pop %v1812
        %v1814 = vmul.f32 %v1791, 1.442695
        %v1815 = vpow.pop %v1814
        %v1816 = vmul.f32 %v1792, 1.442695
        %v1817 = vpow.pop %v1816
        %v1818 = vmul.f32 %v1793, 1.442695
        %v1819 = vpow.pop %v1818
        %v1820 = vmul.f32 %v1794, 1.442695
        %v1821 = vpow.pop %v1820
        %v1822 = vmul.f32 %v1795, 1.442695
        %v1823 = vpow.pop %v1822
        %v1838 = vrot.slane %v1811, 7
        %v1839 = vsel %vm1095, %v1838, %v1797
        %v1840 = vrot.slane %v1813, 7
        %v1841 = vsel %vm1095, %v1840, %v1799
        %v1842 = vrot.slane %v1815, 7
        %v1843 = vsel %vm1095, %v1842, %v1801
        %v1844 = vrot.slane %v1817, 7
        %v1845 = vsel %vm1095, %v1844, %v1803
        %v1846 = vrot.slane %v1819, 7
        %v1847 = vsel %vm1095, %v1846, %v1805
        %v1848 = vrot.slane %v1821, 7
        %v1849 = vsel %vm1095, %v1848, %v1807
        %v1850 = vrot.slane %v1823, 7
        %v1851 = vsel %vm1095, %v1850, %v1809
        %v1859 = vsel %vm1318, %v1839, 0.0
        %v1860 = vsel %vm1318, %v1841, 0.0
        %v1861 = vadd.f32 %v1859, %v1860
        %v1862 = vsel %vm1318, %v1843, 0.0
        %v1863 = vadd.f32 %v1861, %v1862
        %v1864 = vsel %vm1318, %v1845, 0.0
        %v1865 = vadd.f32 %v1863, %v1864
        %v1866 = vsel %vm1318, %v1847, 0.0
        %v1867 = vadd.f32 %v1865, %v1866
        %v1868 = vsel %vm1318, %v1849, 0.0
        %v1869 = vadd.f32 %v1867, %v1868
        %v1870 = vsel %vm1327, %v1851, 0.0
        %v1871 = vadd.f32 %v1869, %v1870
        %1872 = vadd.xlane.f32.xlu0 %v1871
        %v1873 = vpop.xlane.xlu0 %1872
        %v1874 = vrcp.pop %v1873
        %v1876 = vrot.slane %v1874, 1
        %v1879 = vmul.f32 %v1797, %v1874
        %v1880 = vmul.f32 %v1799, %v1874
        %v1881 = vmul.f32 %v1801, %v1874
        %v1882 = vmul.f32 %v1803, %v1874
        %v1883 = vmul.f32 %v1805, %v1874
        %v1884 = vmul.f32 %v1807, %v1874
        %v1885 = vmul.f32 %v1809, %v1874
        %v1886 = vmul.f32 %v1811, %v1876
        %v1887 = vmul.f32 %v1813, %v1876
        %v1888 = vmul.f32 %v1815, %v1876
        %v1889 = vmul.f32 %v1817, %v1876
        %v1890 = vmul.f32 %v1819, %v1876
        %v1891 = vmul.f32 %v1821, %v1876
        %v1892 = vmul.f32 %v1823, %v1876
        %v1893 = vperm.slane %v1879, 0
        %v1894 = vperm.slane %v1880, 0
        %v1895 = vperm.slane %v1881, 0
        %v1896 = vperm.slane %v1882, 0
        %v1897 = vperm.slane %v1883, 0
        %v1898 = vperm.slane %v1884, 0
        %v1899 = vperm.slane %v1885, 0
        %v1900 = vperm.slane %v1886, 0
        %v1901 = vperm.slane %v1887, 0
        %v1902 = vperm.slane %v1888, 0
        %v1903 = vperm.slane %v1889, 0
        %v1904 = vperm.slane %v1890, 0
        %v1905 = vperm.slane %v1891, 0
        %v1906 = vperm.slane %v1892, 0
        %v1907 = vmul.f32 %v1893, %v979
        %v1908 = vmul.f32 %v1894, %v980
        %v1909 = vmul.f32 %v1895, %v981
        %v1910 = vmul.f32 %v1896, %v982
        %v1911 = vmul.f32 %v1897, %v983
        %v1912 = vmul.f32 %v1898, %v984
        %v1913 = vmul.f32 %v1899, %v985
        %v1914 = vmul.f32 %v1893, %v986
        %v1915 = vmul.f32 %v1894, %v987
        %v1916 = vmul.f32 %v1895, %v988
        %v1917 = vmul.f32 %v1896, %v989
        %v1918 = vmul.f32 %v1897, %v990
        %v1919 = vmul.f32 %v1898, %v991
        %v1920 = vmul.f32 %v1899, %v992
        %v1921 = vmul.f32 %v1900, %v993
        %v1922 = vmul.f32 %v1901, %v994
        %v1923 = vmul.f32 %v1902, %v995
        %v1924 = vmul.f32 %v1903, %v996
        %v1925 = vmul.f32 %v1904, %v997
        %v1926 = vmul.f32 %v1905, %v998
        %v1927 = vmul.f32 %v1906, %v999
        %v1928 = vmul.f32 %v1900, %v1000
        %v1929 = vmul.f32 %v1901, %v1001
        %v1930 = vmul.f32 %v1902, %v1002
        %v1931 = vmul.f32 %v1903, %v1003
        %v1932 = vmul.f32 %v1904, %v1004
        %v1933 = vmul.f32 %v1905, %v1005
        %v1934 = vmul.f32 %v1906, %v1006
        %v1935 = vadd.f32 %v1907, %v1908
        %v1936 = vadd.f32 %v1935, %v1909
        %v1937 = vadd.f32 %v1936, %v1910
        %v1938 = vadd.f32 %v1937, %v1911
        %v1939 = vadd.f32 %v1938, %v1912
        %v1940 = vsel %vm1007, %v1913, 0.0
        %v1941 = vadd.f32 %v1939, %v1940
        %1942 = vadd.xlane.f32.xlu0 %v1941
        %v1943 = vpop.xlane.xlu0 %1942
        %v1944 = vadd.f32 %v1914, %v1915
        %v1945 = vadd.f32 %v1944, %v1916
        %v1946 = vadd.f32 %v1945, %v1917
        %v1947 = vadd.f32 %v1946, %v1918
        %v1948 = vadd.f32 %v1947, %v1919
        %v1949 = vsel %vm1007, %v1920, 0.0
        %v1950 = vadd.f32 %v1948, %v1949
        %1951 = vadd.xlane.f32.xlu0 %v1950
        %v1952 = vpop.xlane.xlu0 %1951
        %v1953 = vadd.f32 %v1921, %v1922
        %v1954 = vadd.f32 %v1953, %v1923
        %v1955 = vadd.f32 %v1954, %v1924
        %v1956 = vadd.f32 %v1955, %v1925
        %v1957 = vadd.f32 %v1956, %v1926
        %v1958 = vsel %vm1007, %v1927, 0.0
        %v1959 = vadd.f32 %v1957, %v1958
        %1960 = vadd.xlane.f32.xlu0 %v1959
        %v1961 = vpop.xlane.xlu0 %1960
        %v1962 = vadd.f32 %v1928, %v1929
        %v1963 = vadd.f32 %v1962, %v1930
        %v1964 = vadd.f32 %v1963, %v1931
        %v1965 = vadd.f32 %v1964, %v1932
        %v1966 = vadd.f32 %v1965, %v1933
        %v1967 = vsel %vm1007, %v1934, 0.0
        %v1968 = vadd.f32 %v1966, %v1967
        %1969 = vadd.xlane.f32.xlu0 %v1968
        %v1970 = vpop.xlane.xlu0 %1969
        %v1971 = vmul.f32 %v1943, %v1943
        %v1972 = vmul.f32 %v1952, %v1952
        %v1973 = vmul.f32 %v1961, %v1961
        %v1974 = vmul.f32 %v1970, %v1970
        %v1979 = vperm.slane %v1971, %v1086
        %v1980 = vperm.slane %v1972, %v1088
        %v1981 = vsel %vm1090, %v1980, %v1979
        %v1982 = vperm.slane %v1973, %v1086
        %v1983 = vperm.slane %v1974, %v1088
        %v1984 = vsel %vm1090, %v1983, %v1982
        %v1985 = vsel %vm1095, %v1984, %v1981
        %v1987 = vsel %vm1098, %v1985, 0.0
        %1988 = vadd.xlane.f32.xlu0 %v1987
        %v1989 = vpop.xlane.xlu0 %1988
        %v1990 = vrsqrt.pop %v1989
        %v1991 = vmul.f32 %v1990, %v1989
        %v1992 = vmul.f32 %v1991, %v1990
        %v1993 = vmul.f32 0.5, %v1992
        %v1994 = vsub.f32 1.5, %v1993
        %v1995 = vmul.f32 %v1990, %v1994
        %v1996 = vmul.f32 %v1989, %v1995
        %vm1997 = vcmp.eq.f32.partialorder %v1989, inf
        %v1998 = vsel %vm1997, %v1989, %v1996
        %vm1999 = vcmp.eq.f32.partialorder %v1989, 0.0
        %v2000 = vand.u32 %v1989, 2147483648
        %v2001 = vsel %vm1999, %v2000, %v1998
        %v2002 = vadd.f32 %v1989, 1.0
        %v2003 = vrcp.pop %v2002
        %v2004 = vmul.f32 %v2001, %v2003
        %v2006 = vperm.slane %v2004, 0
        %v2007 = vperm.slane %v2004, 1
        %v2010 = vmul.f32 %v1943, %v2006
        %v2011 = vmul.f32 %v1952, %v2006
        %v2012 = vmul.f32 %v1961, %v2007
        %v2013 = vmul.f32 %v1970, %v2007
        %2018 = vset.pattern.permute.xlu0 0
        %2019 = vperm.xlu0 %2018, %v2010
        %v2020 = vpop.permute.xlu0 %2019
        %2021 = vset.pattern.permute.xlu0 0
        %2022 = vperm.xlu0 %2021, %v2011
        %v2023 = vpop.permute.xlu0 %2022
        %2024 = vset.pattern.permute.xlu0 0
        %2025 = vperm.xlu0 %2024, %v2012
        %v2026 = vpop.permute.xlu0 %2025
        %2027 = vset.pattern.permute.xlu0 0
        %2028 = vperm.xlu0 %2027, %v2013
        %v2029 = vpop.permute.xlu0 %2028
        %v2030 = vperm.slane %v2020, %v1086
        %v2031 = vperm.slane %v2023, %v1088
        %v2032 = vsel %vm1090, %v2031, %v2030
        %v2033 = vperm.slane %v2026, %v1086
        %v2034 = vperm.slane %v2029, %v1088
        %v2035 = vsel %vm1090, %v2034, %v2033
        %v2036 = vsel %vm1095, %v2035, %v2032
        %s2038 = smul.u32 %s151, 2
        %s2039 = scalar_lea.vmem [#allocation2], %s2038
        %2040 = vst.msk [vmem:[%s2039] sm:$0x3] %vm1098, %v2036
      $region33: #{capsule_net_forward.5} parent=27 // loop_footer
        %s155 = sadd.s32 1, %s151
      $region34: #{capsule_net_forward.5} parent=27 // loop_footer_branch
        %150 = sbr.rel target = $region30
      $region35: #{capsule_net_forward.5} parent=27 // loop_exit
        _
      %v2041 = vld [vmem:[#allocation2] sm:$0x1]
      %vm2042 = vcmask 122880
      %2043 = vst.msk [vmem:[%s148] sm:$0x1] %vm2042, %v2041
      %s2044 = scalar_lea.vmem [#allocation2], 2
      %v2045 = vld [vmem:[%s2044] sm:$0x1]
      %2047 = vrot.lane.b32.xlu0 %v2045, 16
      %v2048 = vpop.permute.xlu0 %2047
      %vm2050 = vcmask 254080
      %2051 = vst.msk [vmem:[%s148] sm:$0x1] %vm2050, %v2048
      %s2052 = scalar_lea.vmem [#allocation2], 4
      %v2053 = vld [vmem:[%s2052] sm:$0x1]
      %2055 = vrot.lane.b32.xlu0 %v2053, 32
      %v2056 = vpop.permute.xlu0 %2055
      %vm2058 = vcmask 385280
      %2059 = vst.msk [vmem:[%s148] sm:$0x1] %vm2058, %v2056
      %s2060 = scalar_lea.vmem [#allocation2], 6
      %v2061 = vld [vmem:[%s2060] sm:$0x1]
      %2063 = vrot.lane.b32.xlu0 %v2061, 48
      %v2064 = vpop.permute.xlu0 %2063
      %vm2066 = vcmask 516480
      %2067 = vst.msk [vmem:[%s148] sm:$0x1] %vm2066, %v2064
      %s2068 = scalar_lea.vmem [#allocation2], 8
      %v2069 = vld [vmem:[%s2068] sm:$0x1]
      %2071 = vrot.lane.b32.xlu0 %v2069, 64
      %v2072 = vpop.permute.xlu0 %2071
      %vm2074 = vcmask 647680
      %2075 = vst.msk [vmem:[%s148] sm:$0x1] %vm2074, %v2072
      %s2076 = scalar_lea.vmem [#allocation2], 10
      %v2077 = vld [vmem:[%s2076] sm:$0x1]
      %2079 = vrot.lane.b32.xlu0 %v2077, 80
      %v2080 = vpop.permute.xlu0 %2079
      %vm2082 = vcmask 778880
      %2083 = vst.msk [vmem:[%s148] sm:$0x1] %vm2082, %v2080
      %s2084 = scalar_lea.vmem [#allocation2], 12
      %v2085 = vld [vmem:[%s2084] sm:$0x1]
      %2087 = vrot.lane.b32.xlu0 %v2085, 96
      %v2088 = vpop.permute.xlu0 %2087
      %vm2090 = vcmask 910080
      %2091 = vst.msk [vmem:[%s148] sm:$0x1] %vm2090, %v2088
      %s2092 = scalar_lea.vmem [#allocation2], 14
      %v2093 = vld [vmem:[%s2092] sm:$0x1]
      %2095 = vrot.lane.b32.xlu0 %v2093, 112
      %v2096 = vpop.permute.xlu0 %2095
      %vm2098 = vcmask 1041280
      %2099 = vst.msk [vmem:[%s148] sm:$0x1] %vm2098, %v2096
      %s2100 = scalar_lea.vmem [#allocation2], 16
      %v2101 = vld [vmem:[%s2100] sm:$0x1]
      %2102 = vst.msk [vmem:[%s148 + $0x2] sm:$0x1] %vm2042, %v2101
      %s2103 = scalar_lea.vmem [#allocation2], 18
      %v2104 = vld [vmem:[%s2103] sm:$0x1]
      %2106 = vrot.lane.b32.xlu0 %v2104, 16
      %v2107 = vpop.permute.xlu0 %2106
      %2109 = vst.msk [vmem:[%s148 + $0x2] sm:$0x1] %vm2050, %v2107
      %s2110 = scalar_lea.vmem [#allocation2], 20
      %v2111 = vld [vmem:[%s2110] sm:$0x1]
      %2113 = vrot.lane.b32.xlu0 %v2111, 32
      %v2114 = vpop.permute.xlu0 %2113
      %2116 = vst.msk [vmem:[%s148 + $0x2] sm:$0x1] %vm2058, %v2114
      %s2117 = scalar_lea.vmem [#allocation2], 22
      %v2118 = vld [vmem:[%s2117] sm:$0x1]
      %2120 = vrot.lane.b32.xlu0 %v2118, 48
      %v2121 = vpop.permute.xlu0 %2120
      %2123 = vst.msk [vmem:[%s148 + $0x2] sm:$0x1] %vm2066, %v2121
      %s2124 = scalar_lea.vmem [#allocation2], 24
      %v2125 = vld [vmem:[%s2124] sm:$0x1]
      %2127 = vrot.lane.b32.xlu0 %v2125, 64
      %v2128 = vpop.permute.xlu0 %2127
      %2130 = vst.msk [vmem:[%s148 + $0x2] sm:$0x1] %vm2074, %v2128
      %s2131 = scalar_lea.vmem [#allocation2], 26
      %v2132 = vld [vmem:[%s2131] sm:$0x1]
      %2134 = vrot.lane.b32.xlu0 %v2132, 80
      %v2135 = vpop.permute.xlu0 %2134
      %2137 = vst.msk [vmem:[%s148 + $0x2] sm:$0x1] %vm2082, %v2135
      %s2138 = scalar_lea.vmem [#allocation2], 28
      %v2139 = vld [vmem:[%s2138] sm:$0x1]
      %2141 = vrot.lane.b32.xlu0 %v2139, 96
      %v2142 = vpop.permute.xlu0 %2141
      %2144 = vst.msk [vmem:[%s148 + $0x2] sm:$0x1] %vm2090, %v2142
      %s2145 = scalar_lea.vmem [#allocation2], 30
      %v2146 = vld [vmem:[%s2145] sm:$0x1]
      %2148 = vrot.lane.b32.xlu0 %v2146, 112
      %v2149 = vpop.permute.xlu0 %2148
      %2151 = vst.msk [vmem:[%s148 + $0x2] sm:$0x1] %vm2098, %v2149
      %v2152 = vld [vmem:[#allocation2 + $0x1] sm:$0x1]
      %2153 = vst.msk [vmem:[%s148 + $0x1] sm:$0x1] %vm2042, %v2152
      %v2154 = vld [vmem:[%s2044 + $0x1] sm:$0x1]
      %2156 = vrot.lane.b32.xlu0 %v2154, 16
      %v2157 = vpop.permute.xlu0 %2156
      %2159 = vst.msk [vmem:[%s148 + $0x1] sm:$0x1] %vm2050, %v2157
      %v2160 = vld [vmem:[%s2052 + $0x1] sm:$0x1]
      %2162 = vrot.lane.b32.xlu0 %v2160, 32
      %v2163 = vpop.permute.xlu0 %2162
      %2165 = vst.msk [vmem:[%s148 + $0x1] sm:$0x1] %vm2058, %v2163
      %v2166 = vld [vmem:[%s2060 + $0x1] sm:$0x1]
      %2168 = vrot.lane.b32.xlu0 %v2166, 48
      %v2169 = vpop.permute.xlu0 %2168
      %2171 = vst.msk [vmem:[%s148 + $0x1] sm:$0x1] %vm2066, %v2169
      %v2172 = vld [vmem:[%s2068 + $0x1] sm:$0x1]
      %2174 = vrot.lane.b32.xlu0 %v2172, 64
      %v2175 = vpop.permute.xlu0 %2174
      %2177 = vst.msk [vmem:[%s148 + $0x1] sm:$0x1] %vm2074, %v2175
      %v2178 = vld [vmem:[%s2076 + $0x1] sm:$0x1]
      %2180 = vrot.lane.b32.xlu0 %v2178, 80
      %v2181 = vpop.permute.xlu0 %2180
      %2183 = vst.msk [vmem:[%s148 + $0x1] sm:$0x1] %vm2082, %v2181
      %v2184 = vld [vmem:[%s2084 + $0x1] sm:$0x1]
      %2186 = vrot.lane.b32.xlu0 %v2184, 96
      %v2187 = vpop.permute.xlu0 %2186
      %2189 = vst.msk [vmem:[%s148 + $0x1] sm:$0x1] %vm2090, %v2187
      %v2190 = vld [vmem:[%s2092 + $0x1] sm:$0x1]
      %2192 = vrot.lane.b32.xlu0 %v2190, 112
      %v2193 = vpop.permute.xlu0 %2192
      %2195 = vst.msk [vmem:[%s148 + $0x1] sm:$0x1] %vm2098, %v2193
      %v2196 = vld [vmem:[%s2100 + $0x1] sm:$0x1]
      %2197 = vst.msk [vmem:[%s148 + $0x3] sm:$0x1] %vm2042, %v2196
      %v2198 = vld [vmem:[%s2103 + $0x1] sm:$0x1]
      %2200 = vrot.lane.b32.xlu0 %v2198, 16
      %v2201 = vpop.permute.xlu0 %2200
      %2203 = vst.msk [vmem:[%s148 + $0x3] sm:$0x1] %vm2050, %v2201
      %v2204 = vld [vmem:[%s2110 + $0x1] sm:$0x1]
      %2206 = vrot.lane.b32.xlu0 %v2204, 32
      %v2207 = vpop.permute.xlu0 %2206
      %2209 = vst.msk [vmem:[%s148 + $0x3] sm:$0x1] %vm2058, %v2207
      %v2210 = vld [vmem:[%s2117 + $0x1] sm:$0x1]
      %2212 = vrot.lane.b32.xlu0 %v2210, 48
      %v2213 = vpop.permute.xlu0 %2212
      %2215 = vst.msk [vmem:[%s148 + $0x3] sm:$0x1] %vm2066, %v2213
      %v2216 = vld [vmem:[%s2124 + $0x1] sm:$0x1]
      %2218 = vrot.lane.b32.xlu0 %v2216, 64
      %v2219 = vpop.permute.xlu0 %2218
      %2221 = vst.msk [vmem:[%s148 + $0x3] sm:$0x1] %vm2074, %v2219
      %v2222 = vld [vmem:[%s2131 + $0x1] sm:$0x1]
      %2224 = vrot.lane.b32.xlu0 %v2222, 80
      %v2225 = vpop.permute.xlu0 %2224
      %2227 = vst.msk [vmem:[%s148 + $0x3] sm:$0x1] %vm2082, %v2225
      %v2228 = vld [vmem:[%s2138 + $0x1] sm:$0x1]
      %2230 = vrot.lane.b32.xlu0 %v2228, 96
      %v2231 = vpop.permute.xlu0 %2230
      %2233 = vst.msk [vmem:[%s148 + $0x3] sm:$0x1] %vm2090, %v2231
      %v2234 = vld [vmem:[%s2145 + $0x1] sm:$0x1]
      %2236 = vrot.lane.b32.xlu0 %v2234, 112
      %v2237 = vpop.permute.xlu0 %2236
      %2239 = vst.msk [vmem:[%s148 + $0x3] sm:$0x1] %vm2098, %v2237
      %s2240 = smul.u32 2, %s13
      %p2241 = scmp.lt.s32.totalorder %s2240, 15
      %s2242 = scalar_select %p2241, %s2240, 15
      %s2243 = smul.addr %s2242, 2
      %s2244 = scalar_lea.vmem %s2, %s2243
      // Predicated region
      $region36: #{capsule_net_forward.5} parent=27 // pred_check
        %p2245 = pneg %p78
      $region37: #{capsule_net_forward.5} parent=27 // pred_check_branch
        %2247 = sbr.rel (%p2245) target = $region39
      $region38: #{capsule_net_forward.5} parent=27 // pred_region
        %s2248 = smul.u32 2, %s13
      $region39: #{capsule_net_forward.5} parent=27 // pred_fallthru
        _
    $region28: #{capsule_net_forward.5} parent=5 // pred_fallthru
      _
    %p2249 = scmp.le.s32.totalorder 2, %s8
    // Predicated region
    $region40: #{capsule_net_forward.5} parent=5 // pred_check
      %p2250 = pneg %p2249
    $region41: #{capsule_net_forward.5} parent=5 // pred_check_branch
      %2252 = sbr.rel (%p2250) target = $region43
    $region42: #{capsule_net_forward.5} parent=5 // pred_region
      %s2253 = ssub.s32 %s8, 2
      // Predicated region
      $region44: #{capsule_net_forward.5} parent=42 // pred_check
        %p2254 = pneg %p84
      $region45: #{capsule_net_forward.5} parent=42 // pred_check_branch
        %2256 = sbr.rel (%p2254) target = $region47
      $region46: #{capsule_net_forward.5} parent=42 // pred_region
        %s2257 = smul.u32 2, %s14
        %p2258 = scmp.lt.s32.totalorder %s2257, 15
        %s2259 = scalar_select %p2258, %s2257, 15
        %s2260 = smul.addr %s2259, 2
        %s2261 = scalar_lea.vmem %s2, %s2260
      $region47: #{capsule_net_forward.5} parent=42 // pred_fallthru
        _
    $region43: #{capsule_net_forward.5} parent=5 // pred_fallthru
      _
  $region6: #{capsule_net_forward.5} parent=0 // loop_footer
    %s12 = sadd.s32 1, %s8
  $region7: #{capsule_net_forward.5} parent=0 // loop_footer_branch
    %7 = sbr.rel target = $region3
  $region8: #{capsule_net_forward.5} parent=0 // loop_exit
    _

</llo_original>
